<compile_context>
chip_gen: v7x
topology: tpu7x:2x2x1
jax: 0.10.0
libtpu: 0.0.40
codegen_flags: <defaults>
</compile_context>

<pallas_src>
import jax
import jax.numpy as jnp
from jax.experimental import pallas as pl
from jax.experimental.pallas import tpu as pltpu


# ----------------------------------------------------------------------------
# 3x3 conv (valid, stride 1) + folded BN + ReLU, via tap-accumulated matmuls.
# ----------------------------------------------------------------------------
def _conv_tap_kernel(x_ref, w_ref, s_ref, b_ref, o_ref, acc_ref):
    # x_ref: (1, R, Cin) — one shifted im2col tap, rows lane-dense on Cin? no:
    #        rows on sublanes, Cin on lanes.  w_ref: (1, Cin, Cout).
    t = pl.program_id(0)

    @pl.when(t == 0)
    def _init():
        acc_ref[...] = jnp.zeros_like(acc_ref)

    acc_ref[...] += jnp.dot(x_ref[0].astype(jnp.float32),
                            w_ref[0].astype(jnp.float32),
                            preferred_element_type=jnp.float32)

    @pl.when(t == pl.num_programs(0) - 1)
    def _finalize():
        y = jnp.maximum(acc_ref[...] * s_ref[...] + b_ref[...], 0.0)
        o_ref[...] = y.astype(o_ref.dtype)


def conv3x3_bn_relu(x_nhwc, w_oihw, scale, bias):
    """Valid 3x3 conv + folded-BN + ReLU.  NHWC in, NHWC out."""
    N, H, W, Cin = x_nhwc.shape
    Cout, Cin2, KH, KW = w_oihw.shape
    assert Cin == Cin2
    Ho, Wo = H - KH + 1, W - KW + 1
    R = N * Ho * Wo
    T = KH * KW

    # Wrapper-side im2col: T shifted views, each flattened to a lane-dense
    # (R, Cin) slab (plain XLA data prep, outside the kernel).
    taps = [x_nhwc[:, di:di + Ho, dj:dj + Wo, :].reshape(R, Cin)
            for di in range(KH) for dj in range(KW)]
    x_taps = jnp.stack(taps, axis=0)                                  # (T, R, Cin)
    w_taps = jnp.transpose(w_oihw, (2, 3, 1, 0)).reshape(T, Cin, Cout)
    s2 = scale.reshape(1, Cout).astype(jnp.float32)
    b2 = bias.reshape(1, Cout).astype(jnp.float32)

    out = pl.pallas_call(
        _conv_tap_kernel,
        out_shape=jax.ShapeDtypeStruct((R, Cout), x_nhwc.dtype),
        grid=(T,),
        in_specs=[
            pl.BlockSpec((1, R, Cin), lambda t: (t, 0, 0)),
            pl.BlockSpec((1, Cin, Cout), lambda t: (t, 0, 0)),
            pl.BlockSpec((1, Cout), lambda t: (0, 0)),
            pl.BlockSpec((1, Cout), lambda t: (0, 0)),
        ],
        out_specs=pl.BlockSpec((R, Cout), lambda t: (0, 0)),
        scratch_shapes=[pltpu.VMEM((R, Cout), jnp.float32)],
        compiler_params=pltpu.CompilerParams(
            dimension_semantics=("arbitrary",)),   # tap axis is a reduction
    )(x_taps, w_taps, s2, b2)
    return out.reshape(N, Ho, Wo, Cout)


# ----------------------------------------------------------------------------
# Depthwise cross-correlation (the core kernel, NHWC / channel-on-lanes).
# ----------------------------------------------------------------------------
def _xcorr_kernel(z_ref, x_ref, o_ref, acc_ref):
    # z_ref: (1, Hz, Wz, Cb)  template block
    # x_ref: (1, Hx, Wx, Cb)  search block
    # o_ref: (1, Ho, Wo, Cb); acc_ref: (1, Ho, Wo, Cb) f32 scratch
    Hz, Wz = z_ref.shape[1], z_ref.shape[2]
    Ho, Wo = o_ref.shape[1], o_ref.shape[2]

    acc_ref[...] = jnp.zeros_like(acc_ref)

    def row_of_taps(di, carry):
        # di (dynamic) walks template rows; dj is a small static unroll.
        for dj in range(Wz):
            # Patch cast happens per tap (no up-front full-tile astype).
            patch = x_ref[:, pl.ds(di, Ho), dj:dj + Wo, :].astype(jnp.float32)
            # Lane-resident per-channel weights, broadcast over (Ho, Wo)
            # sublane axes -> plain VPU multiply-add.
            w = z_ref[:, pl.ds(di, 1), dj:dj + 1, :].astype(jnp.float32)
            acc_ref[...] += patch * w
        return carry

    jax.lax.fori_loop(0, Hz, row_of_taps, 0)

    # Single lane-dense writeback.
    o_ref[...] = acc_ref[...].astype(o_ref.dtype)


def xcorr_depthwise(x, z):
    """out[n,i,j,c] = sum_{di,dj} x[n,i+di,j+dj,c] * z[n,di,dj,c]  (NHWC)."""
    N, Hx, Wx, C = x.shape
    Nz, Hz, Wz, Cz = z.shape
    assert N == Nz and C == Cz
    Ho, Wo = Hx - Hz + 1, Wx - Wz + 1

    # Channel block: fill the 128 lanes when possible, else use full C
    # (block dims must be multiples of 128 on lanes or equal the full dim).
    Cb = 128 if C % 128 == 0 else C
    grid = (N, C // Cb)

    itemsize = x.dtype.itemsize
    # Double-buffered in/out blocks + f32 scratch + slack; clamp for v7x (64 MiB).
    block_bytes = (Hz * Wz + Hx * Wx + Ho * Wo) * Cb * itemsize
    vmem_limit = int(min(max(4 * block_bytes + Ho * Wo * Cb * 4 + (2 << 20),
                             16 << 20), 64 << 20))

    cost = pl.CostEstimate(
        flops=2 * N * C * Ho * Wo * Hz * Wz,
        transcendentals=0,
        bytes_accessed=(z.size + x.size + N * Ho * Wo * C) * itemsize,
    )

    # NOTE: if profiling still shows exposed DMA on the search input, bump its
    # spec to pipeline_mode=pl.Buffered(3); default double-buffering kept here.
    return pl.pallas_call(
        _xcorr_kernel,
        out_shape=jax.ShapeDtypeStruct((N, Ho, Wo, C), x.dtype),
        grid=grid,
        in_specs=[
            pl.BlockSpec((1, Hz, Wz, Cb), lambda b, c: (b, 0, 0, c)),
            pl.BlockSpec((1, Hx, Wx, Cb), lambda b, c: (b, 0, 0, c)),
        ],
        out_specs=pl.BlockSpec((1, Ho, Wo, Cb), lambda b, c: (b, 0, 0, c)),
        scratch_shapes=[pltpu.VMEM((1, Ho, Wo, Cb), jnp.float32)],
        compiler_params=pltpu.CompilerParams(
            dimension_semantics=("parallel", "parallel"),
            vmem_limit_bytes=vmem_limit,
        ),
        cost_estimate=cost,
    )(z, x)


# ----------------------------------------------------------------------------
# Head: 1x1 conv + BN + ReLU + 1x1 conv (+bias), fused as two matmuls.
# ----------------------------------------------------------------------------
def _head_kernel(x_ref, w1_ref, s1_ref, b1_ref, w2_ref, b2_ref, o_ref):
    x = x_ref[0].astype(jnp.float32)                               # (R, hidden)
    h = jnp.dot(x, w1_ref[...].astype(jnp.float32),
                preferred_element_type=jnp.float32)
    h = jnp.maximum(h * s1_ref[...] + b1_ref[...], 0.0)
    y = jnp.dot(h, w2_ref[...].astype(jnp.float32),
                preferred_element_type=jnp.float32) + b2_ref[...]
    o_ref[0] = y.astype(o_ref.dtype)


def head_1x1(feat_nhwc, w1, s1, b1, w2, b2):
    N, Ho, Wo, C = feat_nhwc.shape
    Cout = w2.shape[1]
    R = Ho * Wo
    x = feat_nhwc.reshape(N, R, C)
    out = pl.pallas_call(
        _head_kernel,
        out_shape=jax.ShapeDtypeStruct((N, R, Cout), feat_nhwc.dtype),
        grid=(N,),
        in_specs=[
            pl.BlockSpec((1, R, C), lambda b: (b, 0, 0)),
            pl.BlockSpec((C, C), lambda b: (0, 0)),
            pl.BlockSpec((1, C), lambda b: (0, 0)),
            pl.BlockSpec((1, C), lambda b: (0, 0)),
            pl.BlockSpec((C, Cout), lambda b: (0, 0)),
            pl.BlockSpec((1, Cout), lambda b: (0, 0)),
        ],
        out_specs=pl.BlockSpec((1, R, Cout), lambda b: (b, 0, 0)),
        compiler_params=pltpu.CompilerParams(
            dimension_semantics=("parallel",)),
    )(x, w1, s1, b1, w2, b2)
    return out.reshape(N, Ho, Wo, Cout)


# ----------------------------------------------------------------------------
# Full module forward (NCHW in / NCHW out, like PyTorch).
# ----------------------------------------------------------------------------
def _bn_fold(gamma, beta, mean, var, eps=1e-5):
    scale = gamma / jnp.sqrt(var + eps)
    return scale, beta - mean * scale


def depthwise_xcorr_forward(params, kernel_nchw, search_nchw):
    # NCHW -> NHWC so channels sit on the 128-lane axis inside every kernel.
    k_nhwc = jnp.transpose(kernel_nchw, (0, 2, 3, 1))
    s_nhwc = jnp.transpose(search_nchw, (0, 2, 3, 1))

    ck_scale, ck_bias = _bn_fold(*params["ck_bn"])
    cs_scale, cs_bias = _bn_fold(*params["cs_bn"])
    h_scale, h_bias = _bn_fold(*params["h_bn"])

    z = conv3x3_bn_relu(k_nhwc, params["ck_w"], ck_scale, ck_bias)   # (N,Hz,Wz,hid)
    x = conv3x3_bn_relu(s_nhwc, params["cs_w"], cs_scale, cs_bias)   # (N,Hx,Wx,hid)

    feat = xcorr_depthwise(x, z)                                     # (N,Ho,Wo,hid)

    hidden = params["h1_w"].shape[0]
    out_channels = params["h2_w"].shape[0]
    w1 = params["h1_w"][:, :, 0, 0].T            # (hidden_in, hidden_out)
    w2 = params["h2_w"][:, :, 0, 0].T            # (hidden, out_channels)
    out = head_1x1(feat, w1,
                   h_scale.reshape(1, hidden), h_bias.reshape(1, hidden),
                   w2, params["h2_b"].reshape(1, out_channels))
    return jnp.transpose(out, (0, 3, 1, 2))      # back to NCHW


# ----------------------------------------------------------------------------
# Plain-JAX reference (mirrors the PyTorch forward with inference-mode BN).
# ----------------------------------------------------------------------------
def _reference(params, kernel_nchw, search_nchw):
    eps = 1e-5
    hp = jax.lax.Precision.HIGHEST

    def conv_bn_relu_ref(x, w, bn):
        g, b, m, v = bn
        y = jax.lax.conv_general_dilated(
            x, w, (1, 1), "VALID",
            dimension_numbers=("NCHW", "OIHW", "NCHW"), precision=hp)
        s = g / jnp.sqrt(v + eps)
        bb = b - m * s
        return jnp.maximum(y * s[None, :, None, None] + bb[None, :, None, None], 0.0)

    z = conv_bn_relu_ref(kernel_nchw, params["ck_w"], params["ck_bn"])
    x = conv_bn_relu_ref(search_nchw, params["cs_w"], params["cs_bn"])

    N, C, Hz, Wz = z.shape
    _, _, Hx, Wx = x.shape
    Ho, Wo = Hx - Hz + 1, Wx - Wz + 1
    feat = jnp.zeros((N, C, Ho, Wo), jnp.float32)
    for di in range(Hz):
        for dj in range(Wz):
            feat = feat + x[:, :, di:di + Ho, dj:dj + Wo] * z[:, :, di:di + 1, dj:dj + 1]

    g, b, m, v = params["h_bn"]
    s = g / jnp.sqrt(v + eps)
    bb = b - m * s
    h = jnp.einsum("nchw,oc->nohw", feat, params["h1_w"][:, :, 0, 0], precision=hp)
    h = jnp.maximum(h * s[None, :, None, None] + bb[None, :, None, None], 0.0)
    out = jnp.einsum("nchw,oc->nohw", h, params["h2_w"][:, :, 0, 0], precision=hp)
    return out + params["h2_b"][None, :, None, None]


def make_params(key, in_channels, hidden, out_channels, ksize):
    ks = jax.random.split(key, 17)

    def bn_params(k0, k1, k2, k3, c):
        gamma = 1.0 + 0.1 * jax.random.normal(k0, (c,), jnp.float32)
        beta = 0.1 * jax.random.normal(k1, (c,), jnp.float32)
        mean = 0.1 * jax.random.normal(k2, (c,), jnp.float32)
        var = 0.9 + 0.2 * jax.random.uniform(k3, (c,), jnp.float32)
        return gamma, beta, mean, var

    return {
        "ck_w": 0.1 * jax.random.normal(ks[0], (hidden, in_channels, ksize, ksize), jnp.float32),
        "ck_bn": bn_params(ks[1], ks[2], ks[3], ks[4], hidden),
        "cs_w": 0.1 * jax.random.normal(ks[5], (hidden, in_channels, ksize, ksize), jnp.float32),
        "cs_bn": bn_params(ks[6], ks[7], ks[8], ks[9], hidden),
        "h1_w": 0.1 * jax.random.normal(ks[10], (hidden, hidden, 1, 1), jnp.float32),
        "h_bn": bn_params(ks[11], ks[12], ks[13], ks[14], hidden),
        "h2_w": 0.1 * jax.random.normal(ks[15], (out_channels, hidden, 1, 1), jnp.float32),
        "h2_b": 0.1 * jax.random.normal(ks[16], (out_channels,), jnp.float32),
    }


if __name__ == "__main__":
    key = jax.random.PRNGKey(0)
    k_par, k_t, k_s = jax.random.split(key, 3)

    in_channels, hidden, out_channels, ksize = 4, 32, 8, 3
    params = make_params(k_par, in_channels, hidden, out_channels, ksize)

    # Small shapes consistent with a Siamese tracker head:
    #   template (kernel): (2, 4, 8, 8)  -> features (2, 32, 6, 6)
    #   search:            (2, 4, 16, 16)-> features (2, 32, 14, 14)
    #   xcorr output:      (2, 32, 9, 9) -> head output (2, 8, 9, 9)
    template = jax.random.normal(k_t, (2, in_channels, 8, 8), jnp.float32)
    search = jax.random.normal(k_s, (2, in_channels, 16, 16), jnp.float32)

    out = jax.jit(depthwise_xcorr_forward)(params, template, search)
    out = jax.block_until_ready(out)

    ref = _reference(params, template, search)
    assert out.shape == (2, out_channels, 9, 9), out.shape
    max_err = float(jnp.max(jnp.abs(out - ref)))
    assert jnp.allclose(out, ref, atol=5e-3, rtol=5e-3), f"mismatch vs reference: {max_err}"

    print("KERNEL_OK")
</pallas_src>

<mosaic_0001>
module attributes {stable_mosaic.version = 11 : i64} {
  func.func @_conv_tap_kernel(%arg0: i32, %arg1: memref<1x392x4xf32, #tpu.memory_space<vmem>>, %arg2: memref<1x4x32xf32, #tpu.memory_space<vmem>>, %arg3: memref<1x32xf32, #tpu.memory_space<vmem>>, %arg4: memref<1x32xf32, #tpu.memory_space<vmem>>, %arg5: memref<392x32xf32, #tpu.memory_space<vmem>>, %arg6: memref<392x32xf32, #tpu.memory_space<vmem>>) attributes {dimension_semantics = [#tpu.dimension_semantics<arbitrary>], iteration_bounds = array<i64: 9>, scalar_prefetch = 0 : i64, scratch_operands = 1 : i64, tpu.core_type = #tpu.core_type<tc>, window_params = [{transform_indices = @transform_0, window_bounds = array<i64: 1, 392, 4>}, {transform_indices = @transform_1, window_bounds = array<i64: 1, 4, 32>}, {pipeline_mode = #tpu.pipeline_mode<synchronous>, transform_indices = @transform_2, window_bounds = array<i64: 1, 32>}, {pipeline_mode = #tpu.pipeline_mode<synchronous>, transform_indices = @transform_3, window_bounds = array<i64: 1, 32>}, {pipeline_mode = #tpu.pipeline_mode<synchronous>, transform_indices = @transform_4, window_bounds = array<i64: 392, 32>}]} {
    %c0_i32 = arith.constant 0 : i32
    %0 = arith.cmpi eq, %arg0, %c0_i32 : i32
    %1 = arith.extui %0 : i1 to i32
    %c0_i32_0 = arith.constant 0 : i32
    %2 = arith.cmpi ne, %1, %c0_i32_0 : i32
    scf.if %2 {
      %cst_11 = arith.constant 0.000000e+00 : f32
      %14 = vector.broadcast %cst_11 : f32 to vector<392x32xf32>
      %c0_12 = arith.constant 0 : index
      %c0_13 = arith.constant 0 : index
      %15 = vector.load %arg6[%c0_12, %c0_13] : memref<392x32xf32, #tpu.memory_space<vmem>>, vector<392x32xf32>
      tpu.vector_store %arg6[%c0_12, %c0_13], %14 {strides = array<i32>} : memref<392x32xf32, #tpu.memory_space<vmem>>, vector<392x32xf32>,
    } else {
    }
    %c0 = arith.constant 0 : index
    %c0_1 = arith.constant 0 : index
    %3 = vector.load %arg6[%c0, %c0_1] : memref<392x32xf32, #tpu.memory_space<vmem>>, vector<392x32xf32>
    %c0_2 = arith.constant 0 : index
    %c0_3 = arith.constant 0 : index
    %c0_4 = arith.constant 0 : index
    %4 = vector.load %arg1[%c0_2, %c0_3, %c0_4] : memref<1x392x4xf32, #tpu.memory_space<vmem>>, vector<1x392x4xf32>
    %5 = vector.shape_cast %4 : vector<1x392x4xf32> to vector<392x4xf32>
    %c0_5 = arith.constant 0 : index
    %c0_6 = arith.constant 0 : index
    %c0_7 = arith.constant 0 : index
    %6 = vector.load %arg2[%c0_5, %c0_6, %c0_7] : memref<1x4x32xf32, #tpu.memory_space<vmem>>, vector<1x4x32xf32>
    %7 = vector.shape_cast %6 : vector<1x4x32xf32> to vector<4x32xf32>
    %cst = arith.constant dense<0.000000e+00> : vector<392x32xf32>
    %8 = tpu.matmul %5, %7, %cst {dimension_numbers = #tpu.dot_dimension_numbers<[1], [0], [0], [1], [0, 0, 1, 1], [], []>} : vector<392x4xf32>, vector<4x32xf32>, vector<392x32xf32> -> vector<392x32xf32>
    %9 = arith.addf %3, %8 : vector<392x32xf32>
    %c0_8 = arith.constant 0 : index
    %c0_9 = arith.constant 0 : index
    %10 = vector.load %arg6[%c0_8, %c0_9] : memref<392x32xf32, #tpu.memory_space<vmem>>, vector<392x32xf32>
    tpu.vector_store %arg6[%c0_8, %c0_9], %9 {strides = array<i32>} : memref<392x32xf32, #tpu.memory_space<vmem>>, vector<392x32xf32>,
    %c8_i32 = arith.constant 8 : i32
    %11 = arith.cmpi eq, %arg0, %c8_i32 : i32
    %12 = arith.extui %11 : i1 to i32
    %c0_i32_10 = arith.constant 0 : i32
    %13 = arith.cmpi ne, %12, %c0_i32_10 : i32
    scf.if %13 {
      %c0_11 = arith.constant 0 : index
      %c0_12 = arith.constant 0 : index
      %14 = vector.load %arg6[%c0_11, %c0_12] : memref<392x32xf32, #tpu.memory_space<vmem>>, vector<392x32xf32>
      %c0_13 = arith.constant 0 : index
      %c0_14 = arith.constant 0 : index
      %15 = vector.load %arg3[%c0_13, %c0_14] : memref<1x32xf32, #tpu.memory_space<vmem>>, vector<1x32xf32>
      %16 = vector.broadcast %15 : vector<1x32xf32> to vector<392x32xf32>
      %17 = arith.mulf %14, %16 : vector<392x32xf32>
      %c0_15 = arith.constant 0 : index
      %c0_16 = arith.constant 0 : index
      %18 = vector.load %arg4[%c0_15, %c0_16] : memref<1x32xf32, #tpu.memory_space<vmem>>, vector<1x32xf32>
      %19 = vector.broadcast %18 : vector<1x32xf32> to vector<392x32xf32>
      %20 = arith.addf %17, %19 : vector<392x32xf32>
      %cst_17 = arith.constant 0.000000e+00 : f32
      %21 = vector.broadcast %cst_17 : f32 to vector<392x32xf32>
      %22 = arith.maximumf %20, %21 : vector<392x32xf32>
      %c0_18 = arith.constant 0 : index
      %c0_19 = arith.constant 0 : index
      %23 = vector.load %arg5[%c0_18, %c0_19] : memref<392x32xf32, #tpu.memory_space<vmem>>, vector<392x32xf32>
      tpu.vector_store %arg5[%c0_18, %c0_19], %22 {strides = array<i32>} : memref<392x32xf32, #tpu.memory_space<vmem>>, vector<392x32xf32>,
    } else {
    }
    return
  }
  func.func @transform_0(%arg0: i32) -> (i32, i32, i32) {
    %c0_i32 = arith.constant 0 : i32
    %c0_i32_0 = arith.constant 0 : i32
    %c0_i32_1 = arith.constant 0 : i32
    return %arg0, %c0_i32, %c0_i32_0 : i32, i32, i32
  }
  func.func @transform_1(%arg0: i32) -> (i32, i32, i32) {
    %c0_i32 = arith.constant 0 : i32
    %c0_i32_0 = arith.constant 0 : i32
    %c0_i32_1 = arith.constant 0 : i32
    return %arg0, %c0_i32, %c0_i32_0 : i32, i32, i32
  }
  func.func @transform_2(%arg0: i32) -> (i32, i32) {
    %c0_i32 = arith.constant 0 : i32
    %c0_i32_0 = arith.constant 0 : i32
    %c0_i32_1 = arith.constant 0 : i32
    return %c0_i32, %c0_i32_0 : i32, i32
  }
  func.func @transform_3(%arg0: i32) -> (i32, i32) {
    %c0_i32 = arith.constant 0 : i32
    %c0_i32_0 = arith.constant 0 : i32
    %c0_i32_1 = arith.constant 0 : i32
    return %c0_i32, %c0_i32_0 : i32, i32
  }
  func.func @transform_4(%arg0: i32) -> (i32, i32) {
    %c0_i32 = arith.constant 0 : i32
    %c0_i32_0 = arith.constant 0 : i32
    %c0_i32_1 = arith.constant 0 : i32
    return %c0_i32, %c0_i32_0 : i32, i32
  }
}

module attributes {stable_mosaic.version = 11 : i64} {
  func.func @_conv_tap_kernel(%arg0: i32, %arg1: memref<1x72x4xf32, #tpu.memory_space<vmem>>, %arg2: memref<1x4x32xf32, #tpu.memory_space<vmem>>, %arg3: memref<1x32xf32, #tpu.memory_space<vmem>>, %arg4: memref<1x32xf32, #tpu.memory_space<vmem>>, %arg5: memref<72x32xf32, #tpu.memory_space<vmem>>, %arg6: memref<72x32xf32, #tpu.memory_space<vmem>>) attributes {dimension_semantics = [#tpu.dimension_semantics<arbitrary>], iteration_bounds = array<i64: 9>, scalar_prefetch = 0 : i64, scratch_operands = 1 : i64, tpu.core_type = #tpu.core_type<tc>, window_params = [{transform_indices = @transform_0, window_bounds = array<i64: 1, 72, 4>}, {transform_indices = @transform_1, window_bounds = array<i64: 1, 4, 32>}, {pipeline_mode = #tpu.pipeline_mode<synchronous>, transform_indices = @transform_2, window_bounds = array<i64: 1, 32>}, {pipeline_mode = #tpu.pipeline_mode<synchronous>, transform_indices = @transform_3, window_bounds = array<i64: 1, 32>}, {pipeline_mode = #tpu.pipeline_mode<synchronous>, transform_indices = @transform_4, window_bounds = array<i64: 72, 32>}]} {
    %c0_i32 = arith.constant 0 : i32
    %0 = arith.cmpi eq, %arg0, %c0_i32 : i32
    %1 = arith.extui %0 : i1 to i32
    %c0_i32_0 = arith.constant 0 : i32
    %2 = arith.cmpi ne, %1, %c0_i32_0 : i32
    scf.if %2 {
      %cst_11 = arith.constant 0.000000e+00 : f32
      %14 = vector.broadcast %cst_11 : f32 to vector<72x32xf32>
      %c0_12 = arith.constant 0 : index
      %c0_13 = arith.constant 0 : index
      %15 = vector.load %arg6[%c0_12, %c0_13] : memref<72x32xf32, #tpu.memory_space<vmem>>, vector<72x32xf32>
      tpu.vector_store %arg6[%c0_12, %c0_13], %14 {strides = array<i32>} : memref<72x32xf32, #tpu.memory_space<vmem>>, vector<72x32xf32>,
    } else {
    }
    %c0 = arith.constant 0 : index
    %c0_1 = arith.constant 0 : index
    %3 = vector.load %arg6[%c0, %c0_1] : memref<72x32xf32, #tpu.memory_space<vmem>>, vector<72x32xf32>
    %c0_2 = arith.constant 0 : index
    %c0_3 = arith.constant 0 : index
    %c0_4 = arith.constant 0 : index
    %4 = vector.load %arg1[%c0_2, %c0_3, %c0_4] : memref<1x72x4xf32, #tpu.memory_space<vmem>>, vector<1x72x4xf32>
    %5 = vector.shape_cast %4 : vector<1x72x4xf32> to vector<72x4xf32>
    %c0_5 = arith.constant 0 : index
    %c0_6 = arith.constant 0 : index
    %c0_7 = arith.constant 0 : index
    %6 = vector.load %arg2[%c0_5, %c0_6, %c0_7] : memref<1x4x32xf32, #tpu.memory_space<vmem>>, vector<1x4x32xf32>
    %7 = vector.shape_cast %6 : vector<1x4x32xf32> to vector<4x32xf32>
    %cst = arith.constant dense<0.000000e+00> : vector<72x32xf32>
    %8 = tpu.matmul %5, %7, %cst {dimension_numbers = #tpu.dot_dimension_numbers<[1], [0], [0], [1], [0, 0, 1, 1], [], []>} : vector<72x4xf32>, vector<4x32xf32>, vector<72x32xf32> -> vector<72x32xf32>
    %9 = arith.addf %3, %8 : vector<72x32xf32>
    %c0_8 = arith.constant 0 : index
    %c0_9 = arith.constant 0 : index
    %10 = vector.load %arg6[%c0_8, %c0_9] : memref<72x32xf32, #tpu.memory_space<vmem>>, vector<72x32xf32>
    tpu.vector_store %arg6[%c0_8, %c0_9], %9 {strides = array<i32>} : memref<72x32xf32, #tpu.memory_space<vmem>>, vector<72x32xf32>,
    %c8_i32 = arith.constant 8 : i32
    %11 = arith.cmpi eq, %arg0, %c8_i32 : i32
    %12 = arith.extui %11 : i1 to i32
    %c0_i32_10 = arith.constant 0 : i32
    %13 = arith.cmpi ne, %12, %c0_i32_10 : i32
    scf.if %13 {
      %c0_11 = arith.constant 0 : index
      %c0_12 = arith.constant 0 : index
      %14 = vector.load %arg6[%c0_11, %c0_12] : memref<72x32xf32, #tpu.memory_space<vmem>>, vector<72x32xf32>
      %c0_13 = arith.constant 0 : index
      %c0_14 = arith.constant 0 : index
      %15 = vector.load %arg3[%c0_13, %c0_14] : memref<1x32xf32, #tpu.memory_space<vmem>>, vector<1x32xf32>
      %16 = vector.broadcast %15 : vector<1x32xf32> to vector<72x32xf32>
      %17 = arith.mulf %14, %16 : vector<72x32xf32>
      %c0_15 = arith.constant 0 : index
      %c0_16 = arith.constant 0 : index
      %18 = vector.load %arg4[%c0_15, %c0_16] : memref<1x32xf32, #tpu.memory_space<vmem>>, vector<1x32xf32>
      %19 = vector.broadcast %18 : vector<1x32xf32> to vector<72x32xf32>
      %20 = arith.addf %17, %19 : vector<72x32xf32>
      %cst_17 = arith.constant 0.000000e+00 : f32
      %21 = vector.broadcast %cst_17 : f32 to vector<72x32xf32>
      %22 = arith.maximumf %20, %21 : vector<72x32xf32>
      %c0_18 = arith.constant 0 : index
      %c0_19 = arith.constant 0 : index
      %23 = vector.load %arg5[%c0_18, %c0_19] : memref<72x32xf32, #tpu.memory_space<vmem>>, vector<72x32xf32>
      tpu.vector_store %arg5[%c0_18, %c0_19], %22 {strides = array<i32>} : memref<72x32xf32, #tpu.memory_space<vmem>>, vector<72x32xf32>,
    } else {
    }
    return
  }
  func.func @transform_0(%arg0: i32) -> (i32, i32, i32) {
    %c0_i32 = arith.constant 0 : i32
    %c0_i32_0 = arith.constant 0 : i32
    %c0_i32_1 = arith.constant 0 : i32
    return %arg0, %c0_i32, %c0_i32_0 : i32, i32, i32
  }
  func.func @transform_1(%arg0: i32) -> (i32, i32, i32) {
    %c0_i32 = arith.constant 0 : i32
    %c0_i32_0 = arith.constant 0 : i32
    %c0_i32_1 = arith.constant 0 : i32
    return %arg0, %c0_i32, %c0_i32_0 : i32, i32, i32
  }
  func.func @transform_2(%arg0: i32) -> (i32, i32) {
    %c0_i32 = arith.constant 0 : i32
    %c0_i32_0 = arith.constant 0 : i32
    %c0_i32_1 = arith.constant 0 : i32
    return %c0_i32, %c0_i32_0 : i32, i32
  }
  func.func @transform_3(%arg0: i32) -> (i32, i32) {
    %c0_i32 = arith.constant 0 : i32
    %c0_i32_0 = arith.constant 0 : i32
    %c0_i32_1 = arith.constant 0 : i32
    return %c0_i32, %c0_i32_0 : i32, i32
  }
  func.func @transform_4(%arg0: i32) -> (i32, i32) {
    %c0_i32 = arith.constant 0 : i32
    %c0_i32_0 = arith.constant 0 : i32
    %c0_i32_1 = arith.constant 0 : i32
    return %c0_i32, %c0_i32_0 : i32, i32
  }
}

module attributes {stable_mosaic.version = 11 : i64} {
  func.func @_xcorr_kernel(%arg0: i32, %arg1: i32, %arg2: memref<1x6x6x32xf32, #tpu.memory_space<vmem>>, %arg3: memref<1x14x14x32xf32, #tpu.memory_space<vmem>>, %arg4: memref<1x9x9x32xf32, #tpu.memory_space<vmem>>, %arg5: memref<1x9x9x32xf32, #tpu.memory_space<vmem>>) attributes {dimension_semantics = [#tpu.dimension_semantics<parallel>, #tpu.dimension_semantics<parallel>], iteration_bounds = array<i64: 2, 1>, scalar_prefetch = 0 : i64, scratch_operands = 1 : i64, tpu.core_type = #tpu.core_type<tc>, window_params = [{transform_indices = @transform_0, window_bounds = array<i64: 1, 6, 6, 32>}, {transform_indices = @transform_1, window_bounds = array<i64: 1, 14, 14, 32>}, {transform_indices = @transform_2, window_bounds = array<i64: 1, 9, 9, 32>}]} {
    %cst = arith.constant 0.000000e+00 : f32
    %0 = vector.broadcast %cst : f32 to vector<1x9x9x32xf32>
    %c0 = arith.constant 0 : index
    %c0_0 = arith.constant 0 : index
    %c0_1 = arith.constant 0 : index
    %c0_2 = arith.constant 0 : index
    %1 = vector.load %arg5[%c0, %c0_0, %c0_1, %c0_2] : memref<1x9x9x32xf32, #tpu.memory_space<vmem>>, vector<1x9x9x32xf32>
    tpu.vector_store %arg5[%c0, %c0_0, %c0_1, %c0_2], %0 {strides = array<i32>} : memref<1x9x9x32xf32, #tpu.memory_space<vmem>>, vector<1x9x9x32xf32>,
    %c0_i32 = arith.constant 0 : i32
    %c6_i32 = arith.constant 6 : i32
    %2 = arith.addi %c0_i32, %c6_i32 : i32
    %c1_i32 = arith.constant 1 : i32
    scf.for %arg6 = %c0_i32 to %2 step %c1_i32  : i32 {
      %c0_12 = arith.constant 0 : index
      %5 = arith.index_cast %arg6 : i32 to index
      %c0_13 = arith.constant 0 : index
      %c0_14 = arith.constant 0 : index
      %6 = vector.load %arg3[%c0_12, %5, %c0_13, %c0_14] : memref<1x14x14x32xf32, #tpu.memory_space<vmem>>, vector<1x9x9x32xf32>
      %c0_15 = arith.constant 0 : index
      %7 = arith.index_cast %arg6 : i32 to index
      %c0_16 = arith.constant 0 : index
      %c0_17 = arith.constant 0 : index
      %8 = vector.load %arg2[%c0_15, %7, %c0_16, %c0_17] : memref<1x6x6x32xf32, #tpu.memory_space<vmem>>, vector<1x1x1x32xf32>
      %c0_18 = arith.constant 0 : index
      %c0_19 = arith.constant 0 : index
      %c0_20 = arith.constant 0 : index
      %c0_21 = arith.constant 0 : index
      %9 = vector.load %arg5[%c0_18, %c0_19, %c0_20, %c0_21] : memref<1x9x9x32xf32, #tpu.memory_space<vmem>>, vector<1x9x9x32xf32>
      %10 = vector.broadcast %8 : vector<1x1x1x32xf32> to vector<1x9x9x32xf32>
      %11 = arith.mulf %6, %10 : vector<1x9x9x32xf32>
      %12 = arith.addf %9, %11 : vector<1x9x9x32xf32>
      %c0_22 = arith.constant 0 : index
      %c0_23 = arith.constant 0 : index
      %c0_24 = arith.constant 0 : index
      %c0_25 = arith.constant 0 : index
      %13 = vector.load %arg5[%c0_22, %c0_23, %c0_24, %c0_25] : memref<1x9x9x32xf32, #tpu.memory_space<vmem>>, vector<1x9x9x32xf32>
      tpu.vector_store %arg5[%c0_22, %c0_23, %c0_24, %c0_25], %12 {strides = array<i32>} : memref<1x9x9x32xf32, #tpu.memory_space<vmem>>, vector<1x9x9x32xf32>,
      %c0_26 = arith.constant 0 : index
      %14 = arith.index_cast %arg6 : i32 to index
      %c1 = arith.constant 1 : index
      %c0_27 = arith.constant 0 : index
      %15 = vector.load %arg3[%c0_26, %14, %c1, %c0_27] : memref<1x14x14x32xf32, #tpu.memory_space<vmem>>, vector<1x9x9x32xf32>
      %c0_28 = arith.constant 0 : index
      %16 = arith.index_cast %arg6 : i32 to index
      %c1_29 = arith.constant 1 : index
      %c0_30 = arith.constant 0 : index
      %17 = vector.load %arg2[%c0_28, %16, %c1_29, %c0_30] : memref<1x6x6x32xf32, #tpu.memory_space<vmem>>, vector<1x1x1x32xf32>
      %c0_31 = arith.constant 0 : index
      %c0_32 = arith.constant 0 : index
      %c0_33 = arith.constant 0 : index
      %c0_34 = arith.constant 0 : index
      %18 = vector.load %arg5[%c0_31, %c0_32, %c0_33, %c0_34] : memref<1x9x9x32xf32, #tpu.memory_space<vmem>>, vector<1x9x9x32xf32>
      %19 = vector.broadcast %17 : vector<1x1x1x32xf32> to vector<1x9x9x32xf32>
      %20 = arith.mulf %15, %19 : vector<1x9x9x32xf32>
      %21 = arith.addf %18, %20 : vector<1x9x9x32xf32>
      %c0_35 = arith.constant 0 : index
      %c0_36 = arith.constant 0 : index
      %c0_37 = arith.constant 0 : index
      %c0_38 = arith.constant 0 : index
      %22 = vector.load %arg5[%c0_35, %c0_36, %c0_37, %c0_38] : memref<1x9x9x32xf32, #tpu.memory_space<vmem>>, vector<1x9x9x32xf32>
      tpu.vector_store %arg5[%c0_35, %c0_36, %c0_37, %c0_38], %21 {strides = array<i32>} : memref<1x9x9x32xf32, #tpu.memory_space<vmem>>, vector<1x9x9x32xf32>,
      %c0_39 = arith.constant 0 : index
      %23 = arith.index_cast %arg6 : i32 to index
      %c2 = arith.constant 2 : index
      %c0_40 = arith.constant 0 : index
      %24 = vector.load %arg3[%c0_39, %23, %c2, %c0_40] : memref<1x14x14x32xf32, #tpu.memory_space<vmem>>, vector<1x9x9x32xf32>
      %c0_41 = arith.constant 0 : index
      %25 = arith.index_cast %arg6 : i32 to index
      %c2_42 = arith.constant 2 : index
      %c0_43 = arith.constant 0 : index
      %26 = vector.load %arg2[%c0_41, %25, %c2_42, %c0_43] : memref<1x6x6x32xf32, #tpu.memory_space<vmem>>, vector<1x1x1x32xf32>
      %c0_44 = arith.constant 0 : index
      %c0_45 = arith.constant 0 : index
      %c0_46 = arith.constant 0 : index
      %c0_47 = arith.constant 0 : index
      %27 = vector.load %arg5[%c0_44, %c0_45, %c0_46, %c0_47] : memref<1x9x9x32xf32, #tpu.memory_space<vmem>>, vector<1x9x9x32xf32>
      %28 = vector.broadcast %26 : vector<1x1x1x32xf32> to vector<1x9x9x32xf32>
      %29 = arith.mulf %24, %28 : vector<1x9x9x32xf32>
      %30 = arith.addf %27, %29 : vector<1x9x9x32xf32>
      %c0_48 = arith.constant 0 : index
      %c0_49 = arith.constant 0 : index
      %c0_50 = arith.constant 0 : index
      %c0_51 = arith.constant 0 : index
      %31 = vector.load %arg5[%c0_48, %c0_49, %c0_50, %c0_51] : memref<1x9x9x32xf32, #tpu.memory_space<vmem>>, vector<1x9x9x32xf32>
      tpu.vector_store %arg5[%c0_48, %c0_49, %c0_50, %c0_51], %30 {strides = array<i32>} : memref<1x9x9x32xf32, #tpu.memory_space<vmem>>, vector<1x9x9x32xf32>,
      %c0_52 = arith.constant 0 : index
      %32 = arith.index_cast %arg6 : i32 to index
      %c3 = arith.constant 3 : index
      %c0_53 = arith.constant 0 : index
      %33 = vector.load %arg3[%c0_52, %32, %c3, %c0_53] : memref<1x14x14x32xf32, #tpu.memory_space<vmem>>, vector<1x9x9x32xf32>
      %c0_54 = arith.constant 0 : index
      %34 = arith.index_cast %arg6 : i32 to index
      %c3_55 = arith.constant 3 : index
      %c0_56 = arith.constant 0 : index
      %35 = vector.load %arg2[%c0_54, %34, %c3_55, %c0_56] : memref<1x6x6x32xf32, #tpu.memory_space<vmem>>, vector<1x1x1x32xf32>
      %c0_57 = arith.constant 0 : index
      %c0_58 = arith.constant 0 : index
      %c0_59 = arith.constant 0 : index
      %c0_60 = arith.constant 0 : index
      %36 = vector.load %arg5[%c0_57, %c0_58, %c0_59, %c0_60] : memref<1x9x9x32xf32, #tpu.memory_space<vmem>>, vector<1x9x9x32xf32>
      %37 = vector.broadcast %35 : vector<1x1x1x32xf32> to vector<1x9x9x32xf32>
      %38 = arith.mulf %33, %37 : vector<1x9x9x32xf32>
      %39 = arith.addf %36, %38 : vector<1x9x9x32xf32>
      %c0_61 = arith.constant 0 : index
      %c0_62 = arith.constant 0 : index
      %c0_63 = arith.constant 0 : index
      %c0_64 = arith.constant 0 : index
      %40 = vector.load %arg5[%c0_61, %c0_62, %c0_63, %c0_64] : memref<1x9x9x32xf32, #tpu.memory_space<vmem>>, vector<1x9x9x32xf32>
      tpu.vector_store %arg5[%c0_61, %c0_62, %c0_63, %c0_64], %39 {strides = array<i32>} : memref<1x9x9x32xf32, #tpu.memory_space<vmem>>, vector<1x9x9x32xf32>,
      %c0_65 = arith.constant 0 : index
      %41 = arith.index_cast %arg6 : i32 to index
      %c4 = arith.constant 4 : index
      %c0_66 = arith.constant 0 : index
      %42 = vector.load %arg3[%c0_65, %41, %c4, %c0_66] : memref<1x14x14x32xf32, #tpu.memory_space<vmem>>, vector<1x9x9x32xf32>
      %c0_67 = arith.constant 0 : index
      %43 = arith.index_cast %arg6 : i32 to index
      %c4_68 = arith.constant 4 : index
      %c0_69 = arith.constant 0 : index
      %44 = vector.load %arg2[%c0_67, %43, %c4_68, %c0_69] : memref<1x6x6x32xf32, #tpu.memory_space<vmem>>, vector<1x1x1x32xf32>
      %c0_70 = arith.constant 0 : index
      %c0_71 = arith.constant 0 : index
      %c0_72 = arith.constant 0 : index
      %c0_73 = arith.constant 0 : index
      %45 = vector.load %arg5[%c0_70, %c0_71, %c0_72, %c0_73] : memref<1x9x9x32xf32, #tpu.memory_space<vmem>>, vector<1x9x9x32xf32>
      %46 = vector.broadcast %44 : vector<1x1x1x32xf32> to vector<1x9x9x32xf32>
      %47 = arith.mulf %42, %46 : vector<1x9x9x32xf32>
      %48 = arith.addf %45, %47 : vector<1x9x9x32xf32>
      %c0_74 = arith.constant 0 : index
      %c0_75 = arith.constant 0 : index
      %c0_76 = arith.constant 0 : index
      %c0_77 = arith.constant 0 : index
      %49 = vector.load %arg5[%c0_74, %c0_75, %c0_76, %c0_77] : memref<1x9x9x32xf32, #tpu.memory_space<vmem>>, vector<1x9x9x32xf32>
      tpu.vector_store %arg5[%c0_74, %c0_75, %c0_76, %c0_77], %48 {strides = array<i32>} : memref<1x9x9x32xf32, #tpu.memory_space<vmem>>, vector<1x9x9x32xf32>,
      %c0_78 = arith.constant 0 : index
      %50 = arith.index_cast %arg6 : i32 to index
      %c5 = arith.constant 5 : index
      %c0_79 = arith.constant 0 : index
      %51 = vector.load %arg3[%c0_78, %50, %c5, %c0_79] : memref<1x14x14x32xf32, #tpu.memory_space<vmem>>, vector<1x9x9x32xf32>
      %c0_80 = arith.constant 0 : index
      %52 = arith.index_cast %arg6 : i32 to index
      %c5_81 = arith.constant 5 : index
      %c0_82 = arith.constant 0 : index
      %53 = vector.load %arg2[%c0_80, %52, %c5_81, %c0_82] : memref<1x6x6x32xf32, #tpu.memory_space<vmem>>, vector<1x1x1x32xf32>
      %c0_83 = arith.constant 0 : index
      %c0_84 = arith.constant 0 : index
      %c0_85 = arith.constant 0 : index
      %c0_86 = arith.constant 0 : index
      %54 = vector.load %arg5[%c0_83, %c0_84, %c0_85, %c0_86] : memref<1x9x9x32xf32, #tpu.memory_space<vmem>>, vector<1x9x9x32xf32>
      %55 = vector.broadcast %53 : vector<1x1x1x32xf32> to vector<1x9x9x32xf32>
      %56 = arith.mulf %51, %55 : vector<1x9x9x32xf32>
      %57 = arith.addf %54, %56 : vector<1x9x9x32xf32>
      %c0_87 = arith.constant 0 : index
      %c0_88 = arith.constant 0 : index
      %c0_89 = arith.constant 0 : index
      %c0_90 = arith.constant 0 : index
      %58 = vector.load %arg5[%c0_87, %c0_88, %c0_89, %c0_90] : memref<1x9x9x32xf32, #tpu.memory_space<vmem>>, vector<1x9x9x32xf32>
      tpu.vector_store %arg5[%c0_87, %c0_88, %c0_89, %c0_90], %57 {strides = array<i32>} : memref<1x9x9x32xf32, #tpu.memory_space<vmem>>, vector<1x9x9x32xf32>,
    }
    %c6_i32_3 = arith.constant 6 : i32
    %c0_4 = arith.constant 0 : index
    %c0_5 = arith.constant 0 : index
    %c0_6 = arith.constant 0 : index
    %c0_7 = arith.constant 0 : index
    %3 = vector.load %arg5[%c0_4, %c0_5, %c0_6, %c0_7] : memref<1x9x9x32xf32, #tpu.memory_space<vmem>>, vector<1x9x9x32xf32>
    %c0_8 = arith.constant 0 : index
    %c0_9 = arith.constant 0 : index
    %c0_10 = arith.constant 0 : index
    %c0_11 = arith.constant 0 : index
    %4 = vector.load %arg4[%c0_8, %c0_9, %c0_10, %c0_11] : memref<1x9x9x32xf32, #tpu.memory_space<vmem>>, vector<1x9x9x32xf32>
    tpu.vector_store %arg4[%c0_8, %c0_9, %c0_10, %c0_11], %3 {strides = array<i32>} : memref<1x9x9x32xf32, #tpu.memory_space<vmem>>, vector<1x9x9x32xf32>,
    return
  }
  func.func @transform_0(%arg0: i32, %arg1: i32) -> (i32, i32, i32, i32) {
    %c0_i32 = arith.constant 0 : i32
    %c0_i32_0 = arith.constant 0 : i32
    %c0_i32_1 = arith.constant 0 : i32
    return %arg0, %c0_i32, %c0_i32_0, %arg1 : i32, i32, i32, i32
  }
  func.func @transform_1(%arg0: i32, %arg1: i32) -> (i32, i32, i32, i32) {
    %c0_i32 = arith.constant 0 : i32
    %c0_i32_0 = arith.constant 0 : i32
    %c0_i32_1 = arith.constant 0 : i32
    return %arg0, %c0_i32, %c0_i32_0, %arg1 : i32, i32, i32, i32
  }
  func.func @transform_2(%arg0: i32, %arg1: i32) -> (i32, i32, i32, i32) {
    %c0_i32 = arith.constant 0 : i32
    %c0_i32_0 = arith.constant 0 : i32
    %c0_i32_1 = arith.constant 0 : i32
    return %arg0, %c0_i32, %c0_i32_0, %arg1 : i32, i32, i32, i32
  }
}

module attributes {stable_mosaic.version = 11 : i64} {
  func.func @_head_kernel(%arg0: i32, %arg1: memref<1x81x32xf32, #tpu.memory_space<vmem>>, %arg2: memref<32x32xf32, #tpu.memory_space<vmem>>, %arg3: memref<1x32xf32, #tpu.memory_space<vmem>>, %arg4: memref<1x32xf32, #tpu.memory_space<vmem>>, %arg5: memref<32x8xf32, #tpu.memory_space<vmem>>, %arg6: memref<1x8xf32, #tpu.memory_space<vmem>>, %arg7: memref<1x81x8xf32, #tpu.memory_space<vmem>>) attributes {dimension_semantics = [#tpu.dimension_semantics<parallel>], iteration_bounds = array<i64: 2>, scalar_prefetch = 0 : i64, scratch_operands = 0 : i64, tpu.core_type = #tpu.core_type<tc>, window_params = [{transform_indices = @transform_0, window_bounds = array<i64: 1, 81, 32>}, {pipeline_mode = #tpu.pipeline_mode<synchronous>, transform_indices = @transform_1, window_bounds = array<i64: 32, 32>}, {pipeline_mode = #tpu.pipeline_mode<synchronous>, transform_indices = @transform_2, window_bounds = array<i64: 1, 32>}, {pipeline_mode = #tpu.pipeline_mode<synchronous>, transform_indices = @transform_3, window_bounds = array<i64: 1, 32>}, {pipeline_mode = #tpu.pipeline_mode<synchronous>, transform_indices = @transform_4, window_bounds = array<i64: 32, 8>}, {pipeline_mode = #tpu.pipeline_mode<synchronous>, transform_indices = @transform_5, window_bounds = array<i64: 1, 8>}, {transform_indices = @transform_6, window_bounds = array<i64: 1, 81, 8>}]} {
    %c0 = arith.constant 0 : index
    %c0_0 = arith.constant 0 : index
    %c0_1 = arith.constant 0 : index
    %0 = vector.load %arg1[%c0, %c0_0, %c0_1] : memref<1x81x32xf32, #tpu.memory_space<vmem>>, vector<1x81x32xf32>
    %1 = vector.shape_cast %0 : vector<1x81x32xf32> to vector<81x32xf32>
    %c0_2 = arith.constant 0 : index
    %c0_3 = arith.constant 0 : index
    %2 = vector.load %arg2[%c0_2, %c0_3] : memref<32x32xf32, #tpu.memory_space<vmem>>, vector<32x32xf32>
    %cst = arith.constant dense<0.000000e+00> : vector<81x32xf32>
    %3 = tpu.matmul %1, %2, %cst {dimension_numbers = #tpu.dot_dimension_numbers<[1], [0], [0], [1], [0, 0, 1, 1], [], []>} : vector<81x32xf32>, vector<32x32xf32>, vector<81x32xf32> -> vector<81x32xf32>
    %c0_4 = arith.constant 0 : index
    %c0_5 = arith.constant 0 : index
    %4 = vector.load %arg3[%c0_4, %c0_5] : memref<1x32xf32, #tpu.memory_space<vmem>>, vector<1x32xf32>
    %5 = vector.broadcast %4 : vector<1x32xf32> to vector<81x32xf32>
    %6 = arith.mulf %3, %5 : vector<81x32xf32>
    %c0_6 = arith.constant 0 : index
    %c0_7 = arith.constant 0 : index
    %7 = vector.load %arg4[%c0_6, %c0_7] : memref<1x32xf32, #tpu.memory_space<vmem>>, vector<1x32xf32>
    %8 = vector.broadcast %7 : vector<1x32xf32> to vector<81x32xf32>
    %9 = arith.addf %6, %8 : vector<81x32xf32>
    %cst_8 = arith.constant 0.000000e+00 : f32
    %10 = vector.broadcast %cst_8 : f32 to vector<81x32xf32>
    %11 = arith.maximumf %9, %10 : vector<81x32xf32>
    %c0_9 = arith.constant 0 : index
    %c0_10 = arith.constant 0 : index
    %12 = vector.load %arg5[%c0_9, %c0_10] : memref<32x8xf32, #tpu.memory_space<vmem>>, vector<32x8xf32>
    %cst_11 = arith.constant dense<0.000000e+00> : vector<81x8xf32>
    %13 = tpu.matmul %11, %12, %cst_11 {dimension_numbers = #tpu.dot_dimension_numbers<[1], [0], [0], [1], [0, 0, 1, 1], [], []>} : vector<81x32xf32>, vector<32x8xf32>, vector<81x8xf32> -> vector<81x8xf32>
    %c0_12 = arith.constant 0 : index
    %c0_13 = arith.constant 0 : index
    %14 = vector.load %arg6[%c0_12, %c0_13] : memref<1x8xf32, #tpu.memory_space<vmem>>, vector<1x8xf32>
    %15 = vector.broadcast %14 : vector<1x8xf32> to vector<81x8xf32>
    %16 = arith.addf %13, %15 : vector<81x8xf32>
    %c0_14 = arith.constant 0 : index
    %c0_15 = arith.constant 0 : index
    %c0_16 = arith.constant 0 : index
    %17 = vector.load %arg7[%c0_14, %c0_15, %c0_16] : memref<1x81x8xf32, #tpu.memory_space<vmem>>, vector<1x81x8xf32>
    %18 = vector.shape_cast %17 : vector<1x81x8xf32> to vector<81x8xf32>
    %19 = vector.shape_cast %16 : vector<81x8xf32> to vector<1x81x8xf32>
    tpu.vector_store %arg7[%c0_14, %c0_15, %c0_16], %19 {strides = array<i32>} : memref<1x81x8xf32, #tpu.memory_space<vmem>>, vector<1x81x8xf32>,
    return
  }
  func.func @transform_0(%arg0: i32) -> (i32, i32, i32) {
    %c0_i32 = arith.constant 0 : i32
    %c0_i32_0 = arith.constant 0 : i32
    %c0_i32_1 = arith.constant 0 : i32
    return %arg0, %c0_i32, %c0_i32_0 : i32, i32, i32
  }
  func.func @transform_1(%arg0: i32) -> (i32, i32) {
    %c0_i32 = arith.constant 0 : i32
    %c0_i32_0 = arith.constant 0 : i32
    %c0_i32_1 = arith.constant 0 : i32
    return %c0_i32, %c0_i32_0 : i32, i32
  }
  func.func @transform_2(%arg0: i32) -> (i32, i32) {
    %c0_i32 = arith.constant 0 : i32
    %c0_i32_0 = arith.constant 0 : i32
    %c0_i32_1 = arith.constant 0 : i32
    return %c0_i32, %c0_i32_0 : i32, i32
  }
  func.func @transform_3(%arg0: i32) -> (i32, i32) {
    %c0_i32 = arith.constant 0 : i32
    %c0_i32_0 = arith.constant 0 : i32
    %c0_i32_1 = arith.constant 0 : i32
    return %c0_i32, %c0_i32_0 : i32, i32
  }
  func.func @transform_4(%arg0: i32) -> (i32, i32) {
    %c0_i32 = arith.constant 0 : i32
    %c0_i32_0 = arith.constant 0 : i32
    %c0_i32_1 = arith.constant 0 : i32
    return %c0_i32, %c0_i32_0 : i32, i32
  }
  func.func @transform_5(%arg0: i32) -> (i32, i32) {
    %c0_i32 = arith.constant 0 : i32
    %c0_i32_0 = arith.constant 0 : i32
    %c0_i32_1 = arith.constant 0 : i32
    return %c0_i32, %c0_i32_0 : i32, i32
  }
  func.func @transform_6(%arg0: i32) -> (i32, i32, i32) {
    %c0_i32 = arith.constant 0 : i32
    %c0_i32_0 = arith.constant 0 : i32
    %c0_i32_1 = arith.constant 0 : i32
    return %arg0, %c0_i32, %c0_i32_0 : i32, i32, i32
  }
}

</mosaic_0001>

<llo_original>
// kernel: depthwise_xcorr_forward.4
$region0: #{depthwise_xcorr_forward.4}
  #allocation0 [shape = 'u32[]', space=smem, size = 0x4, offset = 0x4, fixed_abs, tag = 'smem constant byte address 0x4 - core index']
  #allocation1 [shape = 'u32[144,128]{1,0:T(1,128)}', space=vmem, size = 0x12000, scoped, tag = 'internal scratch']
  #allocation2 [shape = 'f32[72,32]{1,0:T(8,128)}', space=vmem, size = 0x9000, scoped, tag = 'scratch operand']
  %s0 = inlined_call_operand.vmem [shape: f32[9,72,4], index: 0, kind: input, shape index: {}]
  %s1 = inlined_call_operand.vmem [shape: f32[9,4,32], index: 1, kind: input, shape index: {}]
  %s2 = inlined_call_operand.vmem [shape: f32[1,32], index: 2, kind: input, shape index: {}]
  %s3 = inlined_call_operand.vmem [shape: f32[1,32], index: 3, kind: input, shape index: {}]
  %s4 = inlined_call_operand.vmem [shape: f32[72,32], index: 4, kind: output, shape index: {}]
  %s5 = sld [smem:[#allocation0]]
  $region57: #{depthwise_xcorr_forward.4} parent=0
    _
  %s7 = ssub.s32 1, %s5
  %s8 = scalar_select 0, %s7, %s5
  loop: start=0, step=1, limit=11
  $region2: #{depthwise_xcorr_forward.4} parent=0 // loop_pre_header
    _
  $region3: #{depthwise_xcorr_forward.4} parent=0 // loop_header
    %s10 = sphi 0, %s14
    %p11 = scmp.ge.s32.totalorder %s10, 11
    %s20 = sphi 0, %s22
    %s23 = sphi 0, %s20
    %s24 = sphi 0, %s23
    %s40 = sphi 0, %s24
    %s46 = sphi 0, %s48
    %s49 = sphi 0, %s46
    %s50 = sphi 0, %s49
    %s66 = sphi 0, %s50
    %s70 = sphi 0, %s70
    %s72 = sphi 0, %s70
    %s73 = sphi 0, %s72
    %s87 = sphi 0, %s73
    %s91 = sphi 0, %s91
    %s93 = sphi 0, %s91
    %s94 = sphi 0, %s93
    %s108 = sphi 0, %s94
    %s112 = sphi 0, %s112
    %s114 = sphi 0, %s112
    %s115 = sphi 0, %s114
    %s129 = sphi 0, %s115
  $region4: #{depthwise_xcorr_forward.4} parent=0 // loop_header_branch
    %13 = sbr.rel (%p11) target = $region8
  $region5: #{depthwise_xcorr_forward.4} parent=0 // loop_body
    %s15 = ssub.s32 %s10, 1
    %s16 = ssub.s32 %s10, 2
    %s17 = sadd.s32 %s10, 1
    %s18 = ssub.s32 %s10, %s17
    %p19 = scmp.eq.s32.totalorder %s18, 0
    %s21 = sadd.s32 %s20, 1
    %s22 = scalar_select %p19, %s20, %s21
    %p25 = pneg %p19
    %p26 = scmp.eq.s32.totalorder %s10, 8
    %p27 = por %p25, %p26
    %p28 = scmp.ne.s32.totalorder %s20, %s23
    %p29 = scmp.eq.s32.totalorder %s10, 0
    %p30 = por %p28, %p29
    %p31 = scmp.ne.s32.totalorder %s20, %s23
    %p32 = scmp.eq.s32.totalorder %s15, 8
    %p33 = por %p31, %p32
    %p34 = scmp.ne.s32.totalorder %s23, %s24
    %p35 = scmp.eq.s32.totalorder %s15, 0
    %p36 = por %p34, %p35
    %p37 = scmp.ne.s32.totalorder %s23, %s24
    %p38 = scmp.eq.s32.totalorder %s16, 8
    %p39 = por %p37, %p38
    %p41 = scmp.ne.s32.totalorder %s24, %s40
    %p42 = scmp.eq.s32.totalorder %s16, 0
    %p43 = por %p41, %p42
    %s44 = ssub.s32 %s10, %s17
    %p45 = scmp.eq.s32.totalorder %s44, 0
    %s47 = sadd.s32 %s46, 1
    %s48 = scalar_select %p45, %s46, %s47
    %p51 = pneg %p45
    %p52 = scmp.eq.s32.totalorder %s10, 8
    %p53 = por %p51, %p52
    %p54 = scmp.ne.s32.totalorder %s46, %s49
    %p55 = scmp.eq.s32.totalorder %s10, 0
    %p56 = por %p54, %p55
    %p57 = scmp.ne.s32.totalorder %s46, %s49
    %p58 = scmp.eq.s32.totalorder %s15, 8
    %p59 = por %p57, %p58
    %p60 = scmp.ne.s32.totalorder %s49, %s50
    %p61 = scmp.eq.s32.totalorder %s15, 0
    %p62 = por %p60, %p61
    %p63 = scmp.ne.s32.totalorder %s49, %s50
    %p64 = scmp.eq.s32.totalorder %s16, 8
    %p65 = por %p63, %p64
    %p67 = scmp.ne.s32.totalorder %s50, %s66
    %p68 = scmp.eq.s32.totalorder %s16, 0
    %p69 = por %p67, %p68
    %s71 = sadd.s32 %s70, 1
    %p74 = scmp.eq.s32.totalorder %s10, 8
    %p75 = scmp.ne.s32.totalorder %s70, %s72
    %p76 = scmp.eq.s32.totalorder %s10, 0
    %p77 = por %p75, %p76
    %p78 = scmp.ne.s32.totalorder %s70, %s72
    %p79 = scmp.eq.s32.totalorder %s15, 8
    %p80 = por %p78, %p79
    %p81 = scmp.ne.s32.totalorder %s72, %s73
    %p82 = scmp.eq.s32.totalorder %s15, 0
    %p83 = por %p81, %p82
    %p84 = scmp.ne.s32.totalorder %s72, %s73
    %p85 = scmp.eq.s32.totalorder %s16, 8
    %p86 = por %p84, %p85
    %p88 = scmp.ne.s32.totalorder %s73, %s87
    %p89 = scmp.eq.s32.totalorder %s16, 0
    %p90 = por %p88, %p89
    %s92 = sadd.s32 %s91, 1
    %p95 = scmp.eq.s32.totalorder %s10, 8
    %p96 = scmp.ne.s32.totalorder %s91, %s93
    %p97 = scmp.eq.s32.totalorder %s10, 0
    %p98 = por %p96, %p97
    %p99 = scmp.ne.s32.totalorder %s91, %s93
    %p100 = scmp.eq.s32.totalorder %s15, 8
    %p101 = por %p99, %p100
    %p102 = scmp.ne.s32.totalorder %s93, %s94
    %p103 = scmp.eq.s32.totalorder %s15, 0
    %p104 = por %p102, %p103
    %p105 = scmp.ne.s32.totalorder %s93, %s94
    %p106 = scmp.eq.s32.totalorder %s16, 8
    %p107 = por %p105, %p106
    %p109 = scmp.ne.s32.totalorder %s94, %s108
    %p110 = scmp.eq.s32.totalorder %s16, 0
    %p111 = por %p109, %p110
    %s113 = sadd.s32 %s112, 1
    %p116 = scmp.eq.s32.totalorder %s10, 8
    %p117 = scmp.ne.s32.totalorder %s112, %s114
    %p118 = scmp.eq.s32.totalorder %s10, 0
    %p119 = por %p117, %p118
    %p120 = scmp.ne.s32.totalorder %s112, %s114
    %p121 = scmp.eq.s32.totalorder %s15, 8
    %p122 = por %p120, %p121
    %p123 = scmp.ne.s32.totalorder %s114, %s115
    %p124 = scmp.eq.s32.totalorder %s15, 0
    %p125 = por %p123, %p124
    %p126 = scmp.ne.s32.totalorder %s114, %s115
    %p127 = scmp.eq.s32.totalorder %s16, 8
    %p128 = por %p126, %p127
    %p130 = scmp.ne.s32.totalorder %s115, %s129
    %p131 = scmp.eq.s32.totalorder %s16, 0
    %p132 = por %p130, %p131
    %p133 = scmp.le.s32.totalorder 1, %s10
    %p134 = scmp.lt.s32.totalorder %s10, 10
    %p135 = pnand %p133, %p134
    %p136 = pneg %p135
    // Predicated region
    $region9: #{depthwise_xcorr_forward.4} parent=5 // pred_check
      _
    $region10: #{depthwise_xcorr_forward.4} parent=5 // pred_check_branch
      %138 = sbr.rel (%p135) target = $region12
    $region11: #{depthwise_xcorr_forward.4} parent=5 // pred_region
      %s139 = ssub.s32 %s10, 1
      // Predicated region
      $region13: #{depthwise_xcorr_forward.4} parent=11 // pred_check
        %p140 = pneg %p83
      $region14: #{depthwise_xcorr_forward.4} parent=11 // pred_check_branch
        %142 = sbr.rel (%p140) target = $region16
      $region15: #{depthwise_xcorr_forward.4} parent=11 // pred_region
        _
      $region16: #{depthwise_xcorr_forward.4} parent=11 // pred_fallthru
        _
      // Predicated region
      $region17: #{depthwise_xcorr_forward.4} parent=11 // pred_check
        %p143 = pneg %p104
      $region18: #{depthwise_xcorr_forward.4} parent=11 // pred_check_branch
        %145 = sbr.rel (%p143) target = $region20
      $region19: #{depthwise_xcorr_forward.4} parent=11 // pred_region
        _
      $region20: #{depthwise_xcorr_forward.4} parent=11 // pred_fallthru
        _
    $region12: #{depthwise_xcorr_forward.4} parent=5 // pred_fallthru
      _
    %p146 = scmp.lt.s32.totalorder %s10, 9
    // Predicated region
    $region21: #{depthwise_xcorr_forward.4} parent=5 // pred_check
      %p147 = pneg %p146
    $region22: #{depthwise_xcorr_forward.4} parent=5 // pred_check_branch
      %149 = sbr.rel (%p147) target = $region24
    $region23: #{depthwise_xcorr_forward.4} parent=5 // pred_region
      // Predicated region
      $region25: #{depthwise_xcorr_forward.4} parent=23 // pred_check
        %p150 = pneg %p30
      $region26: #{depthwise_xcorr_forward.4} parent=23 // pred_check_branch
        %152 = sbr.rel (%p150) target = $region28
      $region27: #{depthwise_xcorr_forward.4} parent=23 // pred_region
        %p153 = scmp.lt.s32.totalorder %s10, 8
        %s154 = scalar_select %p153, %s10, 8
        %s155 = smul.addr %s154, 9
        %s156 = smul.addr %s155, 8
        %s157 = scalar_lea.vmem %s0, %s156
      $region28: #{depthwise_xcorr_forward.4} parent=23 // pred_fallthru
        _
      // Predicated region
      $region29: #{depthwise_xcorr_forward.4} parent=23 // pred_check
        %p158 = pneg %p56
      $region30: #{depthwise_xcorr_forward.4} parent=23 // pred_check_branch
        %160 = sbr.rel (%p158) target = $region32
      $region31: #{depthwise_xcorr_forward.4} parent=23 // pred_region
        %p161 = scmp.lt.s32.totalorder %s10, 8
        %s162 = scalar_select %p161, %s10, 8
        %s163 = smul.addr %s162, 4
        %s164 = scalar_lea.vmem %s1, %s163
      $region32: #{depthwise_xcorr_forward.4} parent=23 // pred_fallthru
        _
    $region24: #{depthwise_xcorr_forward.4} parent=5 // pred_fallthru
      _
    %p165 = scmp.le.s32.totalorder 1, %s10
    %p166 = scmp.lt.s32.totalorder %s10, 10
    %p167 = pnand %p165, %p166
    %p168 = pneg %p167
    // Predicated region
    $region33: #{depthwise_xcorr_forward.4} parent=5 // pred_check
      _
    $region34: #{depthwise_xcorr_forward.4} parent=5 // pred_check_branch
      %170 = sbr.rel (%p167) target = $region36
    $region35: #{depthwise_xcorr_forward.4} parent=5 // pred_region
      %s171 = ssub.s32 %s10, 1
      %p172 = scmp.lt.s32.totalorder %s15, 8
      %s173 = scalar_select %p172, %s15, 8
      %s174 = smul.addr %s173, 9
      %s175 = smul.addr %s174, 8
      %s176 = scalar_lea.vmem %s0, %s175
      %p177 = pneg %p36
      %p178 = pneg %p33
      %p179 = scmp.lt.s32.totalorder %s15, 8
      %s180 = scalar_select %p179, %s15, 8
      %s181 = smul.addr %s180, 4
      %s182 = scalar_lea.vmem %s1, %s181
      %p183 = pneg %p62
      %p184 = pneg %p59
      %p185 = pneg %p83
      %p186 = pneg %p80
      %p187 = pneg %p104
      %p188 = pneg %p101
      %p189 = pneg %p125
      %p190 = pneg %p122
      %p191 = scmp.lt.s32.totalorder %s15, 8
      %s192 = scalar_select %p191, %s15, 8
      %s193 = smul.addr %s192, 9
      %s194 = smul.addr %s193, 8
      %s195 = scalar_lea.vmem %s0, %s194
      %p196 = scmp.lt.s32.totalorder %s15, 8
      %s197 = scalar_select %p196, %s15, 8
      %s198 = smul.addr %s197, 4
      %s199 = scalar_lea.vmem %s1, %s198
      %p200 = scmp.eq.s32.totalorder %s15, 0
      // Predicated region
      $region37: #{depthwise_xcorr_forward.4} parent=35 // pred_check
        %p201 = pneg %p200
      $region38: #{depthwise_xcorr_forward.4} parent=35 // pred_check_branch
        %203 = sbr.rel (%p201) target = $region40
      $region39: #{depthwise_xcorr_forward.4} parent=35 // pred_region
        %vm204 = vcmask 261120
        %205 = vst.msk [vmem:[#allocation2] sm:$0xff] %vm204, 0.0
        %206 = vst.msk [vmem:[#allocation2 + $0x8] sm:$0xff] %vm204, 0.0
        %207 = vst.msk [vmem:[#allocation2 + $0x10] sm:$0xff] %vm204, 0.0
        %208 = vst.msk [vmem:[#allocation2 + $0x18] sm:$0xff] %vm204, 0.0
        %209 = vst.msk [vmem:[#allocation2 + $0x20] sm:$0xff] %vm204, 0.0
        %210 = vst.msk [vmem:[#allocation2 + $0x28] sm:$0xff] %vm204, 0.0
        %211 = vst.msk [vmem:[#allocation2 + $0x30] sm:$0xff] %vm204, 0.0
        %212 = vst.msk [vmem:[#allocation2 + $0x38] sm:$0xff] %vm204, 0.0
        %213 = vst.msk [vmem:[#allocation2 + $0x40] sm:$0xff] %vm204, 0.0
      $region40: #{depthwise_xcorr_forward.4} parent=35 // pred_fallthru
        _
      %v214 = vld [vmem:[#allocation2] sm:$0xff]
      %v215 = vld [vmem:[#allocation2 + $0x8] sm:$0xff]
      %v216 = vld [vmem:[#allocation2 + $0x10] sm:$0xff]
      %v217 = vld [vmem:[#allocation2 + $0x18] sm:$0xff]
      %v218 = vld [vmem:[#allocation2 + $0x20] sm:$0xff]
      %v219 = vld [vmem:[#allocation2 + $0x28] sm:$0xff]
      %v220 = vld [vmem:[#allocation2 + $0x30] sm:$0xff]
      %v221 = vld [vmem:[#allocation2 + $0x38] sm:$0xff]
      %v222 = vld [vmem:[#allocation2 + $0x40] sm:$0xff]
      %v223 = vld [vmem:[%s195] sm:$0xff]
      %v224 = vld [vmem:[%s195 + $0x8] sm:$0xff]
      %v225 = vld [vmem:[%s195 + $0x10] sm:$0xff]
      %v226 = vld [vmem:[%s195 + $0x18] sm:$0xff]
      %v227 = vld [vmem:[%s195 + $0x20] sm:$0xff]
      %v228 = vld [vmem:[%s195 + $0x28] sm:$0xff]
      %v229 = vld [vmem:[%s195 + $0x30] sm:$0xff]
      %v230 = vld [vmem:[%s195 + $0x38] sm:$0xff]
      %v231 = vld [vmem:[%s195 + $0x40] sm:$0xff]
      %v232 = vld [vmem:[%s199] sm:$0xf]
      %vm233 = vcmask 31744
      %v235 = vsel %vm233, %v223, 0
      %v238 = vsel %vm233, %v224, 0
      %v241 = vsel %vm233, %v225, 0
      %v244 = vsel %vm233, %v226, 0
      %v247 = vsel %vm233, %v227, 0
      %v250 = vsel %vm233, %v228, 0
      %v253 = vsel %vm233, %v229, 0
      %v256 = vsel %vm233, %v230, 0
      %v259 = vsel %vm233, %v231, 0
      %vm261 = vcmask 1043456
      %v263 = vsel %vm261, %v232, 0
      %265 = vmatprep.subr.mxu0 0.0
      %266 = vmatpush1.msra.mxu0 %v263
      %267 = vmatprep.subr.mxu0 0.0
      %268 = vmatpush1.msra.mxu0 0.0
      %269 = vmatprep.subr.mxu0 0.0
      %270 = vmatpush1.msra.mxu0 0.0
      %271 = vmatprep.subr.mxu0 0.0
      %272 = vmatpush1.msra.mxu0 0.0
      %273 = vmatprep.subr.mxu0 0.0
      %274 = vmatpush1.msra.mxu0 0.0
      %275 = vmatprep.subr.mxu0 0.0
      %276 = vmatpush1.msra.mxu0 0.0
      %277 = vmatprep.subr.mxu0 0.0
      %278 = vmatpush1.msra.mxu0 0.0
      %279 = vmatprep.subr.mxu0 0.0
      %280 = vmatpush1.msra.mxu0 0.0
      %281 = vmatprep.subr.mxu0 0.0
      %282 = vmatpush1.msra.mxu0 0.0
      %283 = vmatprep.subr.mxu0 0.0
      %284 = vmatpush1.msra.mxu0 0.0
      %285 = vmatprep.subr.mxu0 0.0
      %286 = vmatpush1.msra.mxu0 0.0
      %287 = vmatprep.subr.mxu0 0.0
      %288 = vmatpush1.msra.mxu0 0.0
      %289 = vmatprep.subr.mxu0 0.0
      %290 = vmatpush1.msra.mxu0 0.0
      %291 = vmatprep.subr.mxu0 0.0
      %292 = vmatpush1.msra.mxu0 0.0
      %293 = vmatprep.subr.mxu0 0.0
      %294 = vmatpush1.msra.mxu0 0.0
      %295 = vmatprep.subr.mxu0 0.0
      %296 = vmatpush1.msra.mxu0 0.0
      %297 = vmatprep.subr.mxu0 0.0
      %298 = vmatpush1.msra.mxu0 0.0
      %299 = vmatprep.subr.mxu0 0.0
      %300 = vmatpush1.msra.mxu0 0.0
      %301 = vmatprep.subr.mxu0 0.0
      %302 = vmatpush1.msra.mxu0 0.0
      %303 = vmatprep.subr.mxu0 0.0
      %304 = vmatpush1.msra.mxu0 0.0
      %305 = vmatprep.subr.mxu0 0.0
      %306 = vmatpush1.msra.mxu0 0.0
      %307 = vmatprep.subr.mxu0 0.0
      %308 = vmatpush1.msra.mxu0 0.0
      %309 = vmatprep.subr.mxu0 0.0
      %310 = vmatpush1.msra.mxu0 0.0
      %311 = vmatprep.subr.mxu0 0.0
      %312 = vmatpush1.msra.mxu0 0.0
      %313 = vmatprep.subr.mxu0 0.0
      %314 = vmatpush1.msra.mxu0 0.0
      %315 = vmatprep.subr.mxu0 0.0
      %316 = vmatpush1.msra.mxu0 0.0
      %317 = vmatprep.subr.mxu0 0.0
      %318 = vmatpush1.msra.mxu0 0.0
      %319 = vmatprep.subr.mxu0 0.0
      %320 = vmatpush1.msra.mxu0 0.0
      %321 = vmatprep.subr.mxu0 0.0
      %322 = vmatpush1.msra.mxu0 0.0
      %323 = vmatprep.subr.mxu0 0.0
      %324 = vmatpush1.msra.mxu0 0.0
      %325 = vmatprep.subr.mxu0 0.0
      %326 = vmatpush1.msra.mxu0 0.0
      %327 = vmatprep.subr.mxu0 0.0
      %328 = vmatpush1.msra.mxu0 0.0
      %329 = vmatprep.mubr.f32.mxu0 0.0
      %330 = vmatmul.mubr.f32.gmra.mrb[0].mxu0 %v235
      %v331 = vpop.f32.mrb[0].mxu0
      %v332 = vadd.f32 0.0, %v331
      %v333 = vpop.f32.mrb[0].mxu0
      %334 = vmatprep.mubr.f32.mxu0 0.0
      %335 = vmatmul.mubr.f32.gmra.mrb[0].mxu0 %v238
      %v336 = vpop.f32.mrb[0].mxu0
      %v337 = vadd.f32 0.0, %v336
      %v338 = vpop.f32.mrb[0].mxu0
      %339 = vmatprep.mubr.f32.mxu0 0.0
      %340 = vmatmul.mubr.f32.gmra.mrb[0].mxu0 %v241
      %v341 = vpop.f32.mrb[0].mxu0
      %v342 = vadd.f32 0.0, %v341
      %v343 = vpop.f32.mrb[0].mxu0
      %344 = vmatprep.mubr.f32.mxu0 0.0
      %345 = vmatmul.mubr.f32.gmra.mrb[0].mxu0 %v244
      %v346 = vpop.f32.mrb[0].mxu0
      %v347 = vadd.f32 0.0, %v346
      %v348 = vpop.f32.mrb[0].mxu0
      %349 = vmatprep.mubr.f32.mxu0 0.0
      %350 = vmatmul.mubr.f32.gmra.mrb[0].mxu0 %v247
      %v351 = vpop.f32.mrb[0].mxu0
      %v352 = vadd.f32 0.0, %v351
      %v353 = vpop.f32.mrb[0].mxu0
      %354 = vmatprep.mubr.f32.mxu0 0.0
      %355 = vmatmul.mubr.f32.gmra.mrb[0].mxu0 %v250
      %v356 = vpop.f32.mrb[0].mxu0
      %v357 = vadd.f32 0.0, %v356
      %v358 = vpop.f32.mrb[0].mxu0
      %359 = vmatprep.mubr.f32.mxu0 0.0
      %360 = vmatmul.mubr.f32.gmra.mrb[0].mxu0 %v253
      %v361 = vpop.f32.mrb[0].mxu0
      %v362 = vadd.f32 0.0, %v361
      %v363 = vpop.f32.mrb[0].mxu0
      %364 = vmatprep.mubr.f32.mxu0 0.0
      %365 = vmatmul.mubr.f32.gmra.mrb[0].mxu0 %v256
      %v366 = vpop.f32.mrb[0].mxu0
      %v367 = vadd.f32 0.0, %v366
      %v368 = vpop.f32.mrb[0].mxu0
      %369 = vmatprep.mubr.f32.mxu0 0.0
      %370 = vmatmul.mubr.f32.gmra.mrb[0].mxu0 %v259
      %v371 = vpop.f32.mrb[0].mxu0
      %v372 = vadd.f32 0.0, %v371
      %v373 = vpop.f32.mrb[0].mxu0
      %374 = vdwg.mxu0
      %v375 = vadd.f32 %v214, %v332
      %v376 = vadd.f32 %v215, %v337
      %v377 = vadd.f32 %v216, %v342
      %v378 = vadd.f32 %v217, %v347
      %v379 = vadd.f32 %v218, %v352
      %v380 = vadd.f32 %v219, %v357
      %v381 = vadd.f32 %v220, %v362
      %v382 = vadd.f32 %v221, %v367
      %v383 = vadd.f32 %v222, %v372
      %vm384 = vcmask 261120
      %385 = vst.msk [vmem:[#allocation2] sm:$0xff] %vm384, %v375
      %386 = vst.msk [vmem:[#allocation2 + $0x8] sm:$0xff] %vm384, %v376
      %387 = vst.msk [vmem:[#allocation2 + $0x10] sm:$0xff] %vm384, %v377
      %388 = vst.msk [vmem:[#allocation2 + $0x18] sm:$0xff] %vm384, %v378
      %389 = vst.msk [vmem:[#allocation2 + $0x20] sm:$0xff] %vm384, %v379
      %390 = vst.msk [vmem:[#allocation2 + $0x28] sm:$0xff] %vm384, %v380
      %391 = vst.msk [vmem:[#allocation2 + $0x30] sm:$0xff] %vm384, %v381
      %392 = vst.msk [vmem:[#allocation2 + $0x38] sm:$0xff] %vm384, %v382
      %393 = vst.msk [vmem:[#allocation2 + $0x40] sm:$0xff] %vm384, %v383
      %p394 = scmp.eq.s32.totalorder %s15, 8
      // Predicated region
      $region41: #{depthwise_xcorr_forward.4} parent=35 // pred_check
        %p395 = pneg %p394
      $region42: #{depthwise_xcorr_forward.4} parent=35 // pred_check_branch
        %397 = sbr.rel (%p395) target = $region44
      $region43: #{depthwise_xcorr_forward.4} parent=35 // pred_region
        %v398 = vld [vmem:[#allocation2] sm:$0xff]
        %v399 = vld [vmem:[#allocation2 + $0x8] sm:$0xff]
        %v400 = vld [vmem:[#allocation2 + $0x10] sm:$0xff]
        %v401 = vld [vmem:[#allocation2 + $0x18] sm:$0xff]
        %v402 = vld [vmem:[#allocation2 + $0x20] sm:$0xff]
        %v403 = vld [vmem:[#allocation2 + $0x28] sm:$0xff]
        %v404 = vld [vmem:[#allocation2 + $0x30] sm:$0xff]
        %v405 = vld [vmem:[#allocation2 + $0x38] sm:$0xff]
        %v406 = vld [vmem:[#allocation2 + $0x40] sm:$0xff]
        %v407 = vld [vmem:[%s2] sm:$0x1]
        %v409 = vlaneseq
        %v410 = vshrl.u32 %v409, 7
        %v411 = vsub.s32 0, %v410
        %v412 = vrot.slane %v407, %v411
        %v414 = vmul.f32 %v398, %v412
        %v415 = vmul.f32 %v399, %v412
        %v416 = vmul.f32 %v400, %v412
        %v417 = vmul.f32 %v401, %v412
        %v418 = vmul.f32 %v402, %v412
        %v419 = vmul.f32 %v403, %v412
        %v420 = vmul.f32 %v404, %v412
        %v421 = vmul.f32 %v405, %v412
        %v422 = vmul.f32 %v406, %v412
        %v423 = vld [vmem:[%s3] sm:$0x1]
        %v425 = vlaneseq
        %v426 = vshrl.u32 %v425, 7
        %v427 = vsub.s32 0, %v426
        %v428 = vrot.slane %v423, %v427
        %v430 = vadd.f32 %v414, %v428
        %v431 = vadd.f32 %v415, %v428
        %v432 = vadd.f32 %v416, %v428
        %v433 = vadd.f32 %v417, %v428
        %v434 = vadd.f32 %v418, %v428
        %v435 = vadd.f32 %v419, %v428
        %v436 = vadd.f32 %v420, %v428
        %v437 = vadd.f32 %v421, %v428
        %v438 = vadd.f32 %v422, %v428
        %v439 = vmax.f32 %v430, 0.0
        %v440 = vmax.f32 %v431, 0.0
        %v441 = vmax.f32 %v432, 0.0
        %v442 = vmax.f32 %v433, 0.0
        %v443 = vmax.f32 %v434, 0.0
        %v444 = vmax.f32 %v435, 0.0
        %v445 = vmax.f32 %v436, 0.0
        %v446 = vmax.f32 %v437, 0.0
        %v447 = vmax.f32 %v438, 0.0
        %448 = vst.msk [vmem:[%s4] sm:$0xff] %vm384, %v439
        %449 = vst.msk [vmem:[%s4 + $0x8] sm:$0xff] %vm384, %v440
        %450 = vst.msk [vmem:[%s4 + $0x10] sm:$0xff] %vm384, %v441
        %451 = vst.msk [vmem:[%s4 + $0x18] sm:$0xff] %vm384, %v442
        %452 = vst.msk [vmem:[%s4 + $0x20] sm:$0xff] %vm384, %v443
        %453 = vst.msk [vmem:[%s4 + $0x28] sm:$0xff] %vm384, %v444
        %454 = vst.msk [vmem:[%s4 + $0x30] sm:$0xff] %vm384, %v445
        %455 = vst.msk [vmem:[%s4 + $0x38] sm:$0xff] %vm384, %v446
        %456 = vst.msk [vmem:[%s4 + $0x40] sm:$0xff] %vm384, %v447
      $region44: #{depthwise_xcorr_forward.4} parent=35 // pred_fallthru
        _
      // Predicated region
      $region45: #{depthwise_xcorr_forward.4} parent=35 // pred_check
        %p457 = pneg %p122
      $region46: #{depthwise_xcorr_forward.4} parent=35 // pred_check_branch
        %459 = sbr.rel (%p457) target = $region48
      $region47: #{depthwise_xcorr_forward.4} parent=35 // pred_region
        _
      $region48: #{depthwise_xcorr_forward.4} parent=35 // pred_fallthru
        _
      // Predicated region
      $region49: #{depthwise_xcorr_forward.4} parent=35 // pred_check
        %p460 = pneg %p122
      $region50: #{depthwise_xcorr_forward.4} parent=35 // pred_check_branch
        %462 = sbr.rel (%p460) target = $region52
      $region51: #{depthwise_xcorr_forward.4} parent=35 // pred_region
        _
      $region52: #{depthwise_xcorr_forward.4} parent=35 // pred_fallthru
        _
    $region36: #{depthwise_xcorr_forward.4} parent=5 // pred_fallthru
      _
    %p463 = scmp.le.s32.totalorder 2, %s10
    // Predicated region
    $region53: #{depthwise_xcorr_forward.4} parent=5 // pred_check
      %p464 = pneg %p463
    $region54: #{depthwise_xcorr_forward.4} parent=5 // pred_check_branch
      %466 = sbr.rel (%p464) target = $region56
    $region55: #{depthwise_xcorr_forward.4} parent=5 // pred_region
      %s467 = ssub.s32 %s10, 2
    $region56: #{depthwise_xcorr_forward.4} parent=5 // pred_fallthru
      _
  $region6: #{depthwise_xcorr_forward.4} parent=0 // loop_footer
    %s14 = sadd.s32 1, %s10
  $region7: #{depthwise_xcorr_forward.4} parent=0 // loop_footer_branch
    %9 = sbr.rel target = $region3
  $region8: #{depthwise_xcorr_forward.4} parent=0 // loop_exit
    _

// kernel: depthwise_xcorr_forward.5
$region0: #{depthwise_xcorr_forward.5}
  #allocation0 [shape = 'u32[]', space=smem, size = 0x4, offset = 0x4, fixed_abs, tag = 'smem constant byte address 0x4 - core index']
  #allocation1 [shape = 'u32[144,128]{1,0:T(1,128)}', space=vmem, size = 0x12000, scoped, tag = 'internal scratch']
  #allocation2 [shape = 'f32[392,32]{1,0:T(8,128)}', space=vmem, size = 0x31000, scoped, tag = 'scratch operand']
  %s0 = inlined_call_operand.vmem [shape: f32[9,392,4], index: 0, kind: input, shape index: {}]
  %s1 = inlined_call_operand.vmem [shape: f32[9,4,32], index: 1, kind: input, shape index: {}]
  %s2 = inlined_call_operand.vmem [shape: f32[1,32], index: 2, kind: input, shape index: {}]
  %s3 = inlined_call_operand.vmem [shape: f32[1,32], index: 3, kind: input, shape index: {}]
  %s4 = inlined_call_operand.vmem [shape: f32[392,32], index: 4, kind: output, shape index: {}]
  %s5 = sld [smem:[#allocation0]]
  $region57: #{depthwise_xcorr_forward.5} parent=0
    _
  %s7 = ssub.s32 1, %s5
  %s8 = scalar_select 0, %s7, %s5
  loop: start=0, step=1, limit=11
  $region2: #{depthwise_xcorr_forward.5} parent=0 // loop_pre_header
    _
  $region3: #{depthwise_xcorr_forward.5} parent=0 // loop_header
    %s10 = sphi 0, %s14
    %p11 = scmp.ge.s32.totalorder %s10, 11
    %s20 = sphi 0, %s22
    %s23 = sphi 0, %s20
    %s24 = sphi 0, %s23
    %s40 = sphi 0, %s24
    %s46 = sphi 0, %s48
    %s49 = sphi 0, %s46
    %s50 = sphi 0, %s49
    %s66 = sphi 0, %s50
    %s70 = sphi 0, %s70
    %s72 = sphi 0, %s70
    %s73 = sphi 0, %s72
    %s87 = sphi 0, %s73
    %s91 = sphi 0, %s91
    %s93 = sphi 0, %s91
    %s94 = sphi 0, %s93
    %s108 = sphi 0, %s94
    %s112 = sphi 0, %s112
    %s114 = sphi 0, %s112
    %s115 = sphi 0, %s114
    %s129 = sphi 0, %s115
  $region4: #{depthwise_xcorr_forward.5} parent=0 // loop_header_branch
    %13 = sbr.rel (%p11) target = $region8
  $region5: #{depthwise_xcorr_forward.5} parent=0 // loop_body
    %s15 = ssub.s32 %s10, 1
    %s16 = ssub.s32 %s10, 2
    %s17 = sadd.s32 %s10, 1
    %s18 = ssub.s32 %s10, %s17
    %p19 = scmp.eq.s32.totalorder %s18, 0
    %s21 = sadd.s32 %s20, 1
    %s22 = scalar_select %p19, %s20, %s21
    %p25 = pneg %p19
    %p26 = scmp.eq.s32.totalorder %s10, 8
    %p27 = por %p25, %p26
    %p28 = scmp.ne.s32.totalorder %s20, %s23
    %p29 = scmp.eq.s32.totalorder %s10, 0
    %p30 = por %p28, %p29
    %p31 = scmp.ne.s32.totalorder %s20, %s23
    %p32 = scmp.eq.s32.totalorder %s15, 8
    %p33 = por %p31, %p32
    %p34 = scmp.ne.s32.totalorder %s23, %s24
    %p35 = scmp.eq.s32.totalorder %s15, 0
    %p36 = por %p34, %p35
    %p37 = scmp.ne.s32.totalorder %s23, %s24
    %p38 = scmp.eq.s32.totalorder %s16, 8
    %p39 = por %p37, %p38
    %p41 = scmp.ne.s32.totalorder %s24, %s40
    %p42 = scmp.eq.s32.totalorder %s16, 0
    %p43 = por %p41, %p42
    %s44 = ssub.s32 %s10, %s17
    %p45 = scmp.eq.s32.totalorder %s44, 0
    %s47 = sadd.s32 %s46, 1
    %s48 = scalar_select %p45, %s46, %s47
    %p51 = pneg %p45
    %p52 = scmp.eq.s32.totalorder %s10, 8
    %p53 = por %p51, %p52
    %p54 = scmp.ne.s32.totalorder %s46, %s49
    %p55 = scmp.eq.s32.totalorder %s10, 0
    %p56 = por %p54, %p55
    %p57 = scmp.ne.s32.totalorder %s46, %s49
    %p58 = scmp.eq.s32.totalorder %s15, 8
    %p59 = por %p57, %p58
    %p60 = scmp.ne.s32.totalorder %s49, %s50
    %p61 = scmp.eq.s32.totalorder %s15, 0
    %p62 = por %p60, %p61
    %p63 = scmp.ne.s32.totalorder %s49, %s50
    %p64 = scmp.eq.s32.totalorder %s16, 8
    %p65 = por %p63, %p64
    %p67 = scmp.ne.s32.totalorder %s50, %s66
    %p68 = scmp.eq.s32.totalorder %s16, 0
    %p69 = por %p67, %p68
    %s71 = sadd.s32 %s70, 1
    %p74 = scmp.eq.s32.totalorder %s10, 8
    %p75 = scmp.ne.s32.totalorder %s70, %s72
    %p76 = scmp.eq.s32.totalorder %s10, 0
    %p77 = por %p75, %p76
    %p78 = scmp.ne.s32.totalorder %s70, %s72
    %p79 = scmp.eq.s32.totalorder %s15, 8
    %p80 = por %p78, %p79
    %p81 = scmp.ne.s32.totalorder %s72, %s73
    %p82 = scmp.eq.s32.totalorder %s15, 0
    %p83 = por %p81, %p82
    %p84 = scmp.ne.s32.totalorder %s72, %s73
    %p85 = scmp.eq.s32.totalorder %s16, 8
    %p86 = por %p84, %p85
    %p88 = scmp.ne.s32.totalorder %s73, %s87
    %p89 = scmp.eq.s32.totalorder %s16, 0
    %p90 = por %p88, %p89
    %s92 = sadd.s32 %s91, 1
    %p95 = scmp.eq.s32.totalorder %s10, 8
    %p96 = scmp.ne.s32.totalorder %s91, %s93
    %p97 = scmp.eq.s32.totalorder %s10, 0
    %p98 = por %p96, %p97
    %p99 = scmp.ne.s32.totalorder %s91, %s93
    %p100 = scmp.eq.s32.totalorder %s15, 8
    %p101 = por %p99, %p100
    %p102 = scmp.ne.s32.totalorder %s93, %s94
    %p103 = scmp.eq.s32.totalorder %s15, 0
    %p104 = por %p102, %p103
    %p105 = scmp.ne.s32.totalorder %s93, %s94
    %p106 = scmp.eq.s32.totalorder %s16, 8
    %p107 = por %p105, %p106
    %p109 = scmp.ne.s32.totalorder %s94, %s108
    %p110 = scmp.eq.s32.totalorder %s16, 0
    %p111 = por %p109, %p110
    %s113 = sadd.s32 %s112, 1
    %p116 = scmp.eq.s32.totalorder %s10, 8
    %p117 = scmp.ne.s32.totalorder %s112, %s114
    %p118 = scmp.eq.s32.totalorder %s10, 0
    %p119 = por %p117, %p118
    %p120 = scmp.ne.s32.totalorder %s112, %s114
    %p121 = scmp.eq.s32.totalorder %s15, 8
    %p122 = por %p120, %p121
    %p123 = scmp.ne.s32.totalorder %s114, %s115
    %p124 = scmp.eq.s32.totalorder %s15, 0
    %p125 = por %p123, %p124
    %p126 = scmp.ne.s32.totalorder %s114, %s115
    %p127 = scmp.eq.s32.totalorder %s16, 8
    %p128 = por %p126, %p127
    %p130 = scmp.ne.s32.totalorder %s115, %s129
    %p131 = scmp.eq.s32.totalorder %s16, 0
    %p132 = por %p130, %p131
    %p133 = scmp.le.s32.totalorder 1, %s10
    %p134 = scmp.lt.s32.totalorder %s10, 10
    %p135 = pnand %p133, %p134
    %p136 = pneg %p135
    // Predicated region
    $region9: #{depthwise_xcorr_forward.5} parent=5 // pred_check
      _
    $region10: #{depthwise_xcorr_forward.5} parent=5 // pred_check_branch
      %138 = sbr.rel (%p135) target = $region12
    $region11: #{depthwise_xcorr_forward.5} parent=5 // pred_region
      %s139 = ssub.s32 %s10, 1
      // Predicated region
      $region13: #{depthwise_xcorr_forward.5} parent=11 // pred_check
        %p140 = pneg %p83
      $region14: #{depthwise_xcorr_forward.5} parent=11 // pred_check_branch
        %142 = sbr.rel (%p140) target = $region16
      $region15: #{depthwise_xcorr_forward.5} parent=11 // pred_region
        _
      $region16: #{depthwise_xcorr_forward.5} parent=11 // pred_fallthru
        _
      // Predicated region
      $region17: #{depthwise_xcorr_forward.5} parent=11 // pred_check
        %p143 = pneg %p104
      $region18: #{depthwise_xcorr_forward.5} parent=11 // pred_check_branch
        %145 = sbr.rel (%p143) target = $region20
      $region19: #{depthwise_xcorr_forward.5} parent=11 // pred_region
        _
      $region20: #{depthwise_xcorr_forward.5} parent=11 // pred_fallthru
        _
    $region12: #{depthwise_xcorr_forward.5} parent=5 // pred_fallthru
      _
    %p146 = scmp.lt.s32.totalorder %s10, 9
    // Predicated region
    $region21: #{depthwise_xcorr_forward.5} parent=5 // pred_check
      %p147 = pneg %p146
    $region22: #{depthwise_xcorr_forward.5} parent=5 // pred_check_branch
      %149 = sbr.rel (%p147) target = $region24
    $region23: #{depthwise_xcorr_forward.5} parent=5 // pred_region
      // Predicated region
      $region25: #{depthwise_xcorr_forward.5} parent=23 // pred_check
        %p150 = pneg %p30
      $region26: #{depthwise_xcorr_forward.5} parent=23 // pred_check_branch
        %152 = sbr.rel (%p150) target = $region28
      $region27: #{depthwise_xcorr_forward.5} parent=23 // pred_region
        %p153 = scmp.lt.s32.totalorder %s10, 8
        %s154 = scalar_select %p153, %s10, 8
        %s155 = smul.addr %s154, 49
        %s156 = smul.addr %s155, 8
        %s157 = scalar_lea.vmem %s0, %s156
      $region28: #{depthwise_xcorr_forward.5} parent=23 // pred_fallthru
        _
      // Predicated region
      $region29: #{depthwise_xcorr_forward.5} parent=23 // pred_check
        %p158 = pneg %p56
      $region30: #{depthwise_xcorr_forward.5} parent=23 // pred_check_branch
        %160 = sbr.rel (%p158) target = $region32
      $region31: #{depthwise_xcorr_forward.5} parent=23 // pred_region
        %p161 = scmp.lt.s32.totalorder %s10, 8
        %s162 = scalar_select %p161, %s10, 8
        %s163 = smul.addr %s162, 4
        %s164 = scalar_lea.vmem %s1, %s163
      $region32: #{depthwise_xcorr_forward.5} parent=23 // pred_fallthru
        _
    $region24: #{depthwise_xcorr_forward.5} parent=5 // pred_fallthru
      _
    %p165 = scmp.le.s32.totalorder 1, %s10
    %p166 = scmp.lt.s32.totalorder %s10, 10
    %p167 = pnand %p165, %p166
    %p168 = pneg %p167
    // Predicated region
    $region33: #{depthwise_xcorr_forward.5} parent=5 // pred_check
      _
    $region34: #{depthwise_xcorr_forward.5} parent=5 // pred_check_branch
      %170 = sbr.rel (%p167) target = $region36
    $region35: #{depthwise_xcorr_forward.5} parent=5 // pred_region
      %s171 = ssub.s32 %s10, 1
      %p172 = scmp.lt.s32.totalorder %s15, 8
      %s173 = scalar_select %p172, %s15, 8
      %s174 = smul.addr %s173, 49
      %s175 = smul.addr %s174, 8
      %s176 = scalar_lea.vmem %s0, %s175
      %p177 = pneg %p36
      %p178 = pneg %p33
      %p179 = scmp.lt.s32.totalorder %s15, 8
      %s180 = scalar_select %p179, %s15, 8
      %s181 = smul.addr %s180, 4
      %s182 = scalar_lea.vmem %s1, %s181
      %p183 = pneg %p62
      %p184 = pneg %p59
      %p185 = pneg %p83
      %p186 = pneg %p80
      %p187 = pneg %p104
      %p188 = pneg %p101
      %p189 = pneg %p125
      %p190 = pneg %p122
      %p191 = scmp.lt.s32.totalorder %s15, 8
      %s192 = scalar_select %p191, %s15, 8
      %s193 = smul.addr %s192, 49
      %s194 = smul.addr %s193, 8
      %s195 = scalar_lea.vmem %s0, %s194
      %p196 = scmp.lt.s32.totalorder %s15, 8
      %s197 = scalar_select %p196, %s15, 8
      %s198 = smul.addr %s197, 4
      %s199 = scalar_lea.vmem %s1, %s198
      %p200 = scmp.eq.s32.totalorder %s15, 0
      // Predicated region
      $region37: #{depthwise_xcorr_forward.5} parent=35 // pred_check
        %p201 = pneg %p200
      $region38: #{depthwise_xcorr_forward.5} parent=35 // pred_check_branch
        %203 = sbr.rel (%p201) target = $region40
      $region39: #{depthwise_xcorr_forward.5} parent=35 // pred_region
        %vm204 = vcmask 261120
        %205 = vst.msk [vmem:[#allocation2] sm:$0xff] %vm204, 0.0
        %206 = vst.msk [vmem:[#allocation2 + $0x8] sm:$0xff] %vm204, 0.0
        %207 = vst.msk [vmem:[#allocation2 + $0x10] sm:$0xff] %vm204, 0.0
        %208 = vst.msk [vmem:[#allocation2 + $0x18] sm:$0xff] %vm204, 0.0
        %209 = vst.msk [vmem:[#allocation2 + $0x20] sm:$0xff] %vm204, 0.0
        %210 = vst.msk [vmem:[#allocation2 + $0x28] sm:$0xff] %vm204, 0.0
        %211 = vst.msk [vmem:[#allocation2 + $0x30] sm:$0xff] %vm204, 0.0
        %212 = vst.msk [vmem:[#allocation2 + $0x38] sm:$0xff] %vm204, 0.0
        %213 = vst.msk [vmem:[#allocation2 + $0x40] sm:$0xff] %vm204, 0.0
        %214 = vst.msk [vmem:[#allocation2 + $0x48] sm:$0xff] %vm204, 0.0
        %215 = vst.msk [vmem:[#allocation2 + $0x50] sm:$0xff] %vm204, 0.0
        %216 = vst.msk [vmem:[#allocation2 + $0x58] sm:$0xff] %vm204, 0.0
        %217 = vst.msk [vmem:[#allocation2 + $0x60] sm:$0xff] %vm204, 0.0
        %218 = vst.msk [vmem:[#allocation2 + $0x68] sm:$0xff] %vm204, 0.0
        %219 = vst.msk [vmem:[#allocation2 + $0x70] sm:$0xff] %vm204, 0.0
        %220 = vst.msk [vmem:[#allocation2 + $0x78] sm:$0xff] %vm204, 0.0
        %221 = vst.msk [vmem:[#allocation2 + $0x80] sm:$0xff] %vm204, 0.0
        %222 = vst.msk [vmem:[#allocation2 + $0x88] sm:$0xff] %vm204, 0.0
        %223 = vst.msk [vmem:[#allocation2 + $0x90] sm:$0xff] %vm204, 0.0
        %224 = vst.msk [vmem:[#allocation2 + $0x98] sm:$0xff] %vm204, 0.0
        %225 = vst.msk [vmem:[#allocation2 + $0xa0] sm:$0xff] %vm204, 0.0
        %226 = vst.msk [vmem:[#allocation2 + $0xa8] sm:$0xff] %vm204, 0.0
        %227 = vst.msk [vmem:[#allocation2 + $0xb0] sm:$0xff] %vm204, 0.0
        %228 = vst.msk [vmem:[#allocation2 + $0xb8] sm:$0xff] %vm204, 0.0
        %229 = vst.msk [vmem:[#allocation2 + $0xc0] sm:$0xff] %vm204, 0.0
        %230 = vst.msk [vmem:[#allocation2 + $0xc8] sm:$0xff] %vm204, 0.0
        %231 = vst.msk [vmem:[#allocation2 + $0xd0] sm:$0xff] %vm204, 0.0
        %232 = vst.msk [vmem:[#allocation2 + $0xd8] sm:$0xff] %vm204, 0.0
        %233 = vst.msk [vmem:[#allocation2 + $0xe0] sm:$0xff] %vm204, 0.0
        %234 = vst.msk [vmem:[#allocation2 + $0xe8] sm:$0xff] %vm204, 0.0
        %235 = vst.msk [vmem:[#allocation2 + $0xf0] sm:$0xff] %vm204, 0.0
        %236 = vst.msk [vmem:[#allocation2 + $0xf8] sm:$0xff] %vm204, 0.0
        %237 = vst.msk [vmem:[#allocation2 + $0x100] sm:$0xff] %vm204, 0.0
        %238 = vst.msk [vmem:[#allocation2 + $0x108] sm:$0xff] %vm204, 0.0
        %239 = vst.msk [vmem:[#allocation2 + $0x110] sm:$0xff] %vm204, 0.0
        %240 = vst.msk [vmem:[#allocation2 + $0x118] sm:$0xff] %vm204, 0.0
        %241 = vst.msk [vmem:[#allocation2 + $0x120] sm:$0xff] %vm204, 0.0
        %242 = vst.msk [vmem:[#allocation2 + $0x128] sm:$0xff] %vm204, 0.0
        %243 = vst.msk [vmem:[#allocation2 + $0x130] sm:$0xff] %vm204, 0.0
        %244 = vst.msk [vmem:[#allocation2 + $0x138] sm:$0xff] %vm204, 0.0
        %245 = vst.msk [vmem:[#allocation2 + $0x140] sm:$0xff] %vm204, 0.0
        %246 = vst.msk [vmem:[#allocation2 + $0x148] sm:$0xff] %vm204, 0.0
        %247 = vst.msk [vmem:[#allocation2 + $0x150] sm:$0xff] %vm204, 0.0
        %248 = vst.msk [vmem:[#allocation2 + $0x158] sm:$0xff] %vm204, 0.0
        %249 = vst.msk [vmem:[#allocation2 + $0x160] sm:$0xff] %vm204, 0.0
        %250 = vst.msk [vmem:[#allocation2 + $0x168] sm:$0xff] %vm204, 0.0
        %251 = vst.msk [vmem:[#allocation2 + $0x170] sm:$0xff] %vm204, 0.0
        %252 = vst.msk [vmem:[#allocation2 + $0x178] sm:$0xff] %vm204, 0.0
        %253 = vst.msk [vmem:[#allocation2 + $0x180] sm:$0xff] %vm204, 0.0
      $region40: #{depthwise_xcorr_forward.5} parent=35 // pred_fallthru
        _
      %v254 = vld [vmem:[#allocation2] sm:$0xff]
      %v255 = vld [vmem:[#allocation2 + $0x8] sm:$0xff]
      %v256 = vld [vmem:[#allocation2 + $0x10] sm:$0xff]
      %v257 = vld [vmem:[#allocation2 + $0x18] sm:$0xff]
      %v258 = vld [vmem:[#allocation2 + $0x20] sm:$0xff]
      %v259 = vld [vmem:[#allocation2 + $0x28] sm:$0xff]
      %v260 = vld [vmem:[#allocation2 + $0x30] sm:$0xff]
      %v261 = vld [vmem:[#allocation2 + $0x38] sm:$0xff]
      %v262 = vld [vmem:[#allocation2 + $0x40] sm:$0xff]
      %v263 = vld [vmem:[#allocation2 + $0x48] sm:$0xff]
      %v264 = vld [vmem:[#allocation2 + $0x50] sm:$0xff]
      %v265 = vld [vmem:[#allocation2 + $0x58] sm:$0xff]
      %v266 = vld [vmem:[#allocation2 + $0x60] sm:$0xff]
      %v267 = vld [vmem:[#allocation2 + $0x68] sm:$0xff]
      %v268 = vld [vmem:[#allocation2 + $0x70] sm:$0xff]
      %v269 = vld [vmem:[#allocation2 + $0x78] sm:$0xff]
      %v270 = vld [vmem:[#allocation2 + $0x80] sm:$0xff]
      %v271 = vld [vmem:[#allocation2 + $0x88] sm:$0xff]
      %v272 = vld [vmem:[#allocation2 + $0x90] sm:$0xff]
      %v273 = vld [vmem:[#allocation2 + $0x98] sm:$0xff]
      %v274 = vld [vmem:[#allocation2 + $0xa0] sm:$0xff]
      %v275 = vld [vmem:[#allocation2 + $0xa8] sm:$0xff]
      %v276 = vld [vmem:[#allocation2 + $0xb0] sm:$0xff]
      %v277 = vld [vmem:[#allocation2 + $0xb8] sm:$0xff]
      %v278 = vld [vmem:[#allocation2 + $0xc0] sm:$0xff]
      %v279 = vld [vmem:[#allocation2 + $0xc8] sm:$0xff]
      %v280 = vld [vmem:[#allocation2 + $0xd0] sm:$0xff]
      %v281 = vld [vmem:[#allocation2 + $0xd8] sm:$0xff]
      %v282 = vld [vmem:[#allocation2 + $0xe0] sm:$0xff]
      %v283 = vld [vmem:[#allocation2 + $0xe8] sm:$0xff]
      %v284 = vld [vmem:[#allocation2 + $0xf0] sm:$0xff]
      %v285 = vld [vmem:[#allocation2 + $0xf8] sm:$0xff]
      %v286 = vld [vmem:[#allocation2 + $0x100] sm:$0xff]
      %v287 = vld [vmem:[#allocation2 + $0x108] sm:$0xff]
      %v288 = vld [vmem:[#allocation2 + $0x110] sm:$0xff]
      %v289 = vld [vmem:[#allocation2 + $0x118] sm:$0xff]
      %v290 = vld [vmem:[#allocation2 + $0x120] sm:$0xff]
      %v291 = vld [vmem:[#allocation2 + $0x128] sm:$0xff]
      %v292 = vld [vmem:[#allocation2 + $0x130] sm:$0xff]
      %v293 = vld [vmem:[#allocation2 + $0x138] sm:$0xff]
      %v294 = vld [vmem:[#allocation2 + $0x140] sm:$0xff]
      %v295 = vld [vmem:[#allocation2 + $0x148] sm:$0xff]
      %v296 = vld [vmem:[#allocation2 + $0x150] sm:$0xff]
      %v297 = vld [vmem:[#allocation2 + $0x158] sm:$0xff]
      %v298 = vld [vmem:[#allocation2 + $0x160] sm:$0xff]
      %v299 = vld [vmem:[#allocation2 + $0x168] sm:$0xff]
      %v300 = vld [vmem:[#allocation2 + $0x170] sm:$0xff]
      %v301 = vld [vmem:[#allocation2 + $0x178] sm:$0xff]
      %v302 = vld [vmem:[#allocation2 + $0x180] sm:$0xff]
      %v303 = vld [vmem:[%s195] sm:$0xff]
      %v304 = vld [vmem:[%s195 + $0x8] sm:$0xff]
      %v305 = vld [vmem:[%s195 + $0x10] sm:$0xff]
      %v306 = vld [vmem:[%s195 + $0x18] sm:$0xff]
      %v307 = vld [vmem:[%s195 + $0x20] sm:$0xff]
      %v308 = vld [vmem:[%s195 + $0x28] sm:$0xff]
      %v309 = vld [vmem:[%s195 + $0x30] sm:$0xff]
      %v310 = vld [vmem:[%s195 + $0x38] sm:$0xff]
      %v311 = vld [vmem:[%s195 + $0x40] sm:$0xff]
      %v312 = vld [vmem:[%s195 + $0x48] sm:$0xff]
      %v313 = vld [vmem:[%s195 + $0x50] sm:$0xff]
      %v314 = vld [vmem:[%s195 + $0x58] sm:$0xff]
      %v315 = vld [vmem:[%s195 + $0x60] sm:$0xff]
      %v316 = vld [vmem:[%s195 + $0x68] sm:$0xff]
      %v317 = vld [vmem:[%s195 + $0x70] sm:$0xff]
      %v318 = vld [vmem:[%s195 + $0x78] sm:$0xff]
      %v319 = vld [vmem:[%s195 + $0x80] sm:$0xff]
      %v320 = vld [vmem:[%s195 + $0x88] sm:$0xff]
      %v321 = vld [vmem:[%s195 + $0x90] sm:$0xff]
      %v322 = vld [vmem:[%s195 + $0x98] sm:$0xff]
      %v323 = vld [vmem:[%s195 + $0xa0] sm:$0xff]
      %v324 = vld [vmem:[%s195 + $0xa8] sm:$0xff]
      %v325 = vld [vmem:[%s195 + $0xb0] sm:$0xff]
      %v326 = vld [vmem:[%s195 + $0xb8] sm:$0xff]
      %v327 = vld [vmem:[%s195 + $0xc0] sm:$0xff]
      %v328 = vld [vmem:[%s195 + $0xc8] sm:$0xff]
      %v329 = vld [vmem:[%s195 + $0xd0] sm:$0xff]
      %v330 = vld [vmem:[%s195 + $0xd8] sm:$0xff]
      %v331 = vld [vmem:[%s195 + $0xe0] sm:$0xff]
      %v332 = vld [vmem:[%s195 + $0xe8] sm:$0xff]
      %v333 = vld [vmem:[%s195 + $0xf0] sm:$0xff]
      %v334 = vld [vmem:[%s195 + $0xf8] sm:$0xff]
      %v335 = vld [vmem:[%s195 + $0x100] sm:$0xff]
      %v336 = vld [vmem:[%s195 + $0x108] sm:$0xff]
      %v337 = vld [vmem:[%s195 + $0x110] sm:$0xff]
      %v338 = vld [vmem:[%s195 + $0x118] sm:$0xff]
      %v339 = vld [vmem:[%s195 + $0x120] sm:$0xff]
      %v340 = vld [vmem:[%s195 + $0x128] sm:$0xff]
      %v341 = vld [vmem:[%s195 + $0x130] sm:$0xff]
      %v342 = vld [vmem:[%s195 + $0x138] sm:$0xff]
      %v343 = vld [vmem:[%s195 + $0x140] sm:$0xff]
      %v344 = vld [vmem:[%s195 + $0x148] sm:$0xff]
      %v345 = vld [vmem:[%s195 + $0x150] sm:$0xff]
      %v346 = vld [vmem:[%s195 + $0x158] sm:$0xff]
      %v347 = vld [vmem:[%s195 + $0x160] sm:$0xff]
      %v348 = vld [vmem:[%s195 + $0x168] sm:$0xff]
      %v349 = vld [vmem:[%s195 + $0x170] sm:$0xff]
      %v350 = vld [vmem:[%s195 + $0x178] sm:$0xff]
      %v351 = vld [vmem:[%s195 + $0x180] sm:$0xff]
      %v352 = vld [vmem:[%s199] sm:$0xf]
      %vm353 = vcmask 31744
      %v355 = vsel %vm353, %v303, 0
      %v358 = vsel %vm353, %v304, 0
      %v361 = vsel %vm353, %v305, 0
      %v364 = vsel %vm353, %v306, 0
      %v367 = vsel %vm353, %v307, 0
      %v370 = vsel %vm353, %v308, 0
      %v373 = vsel %vm353, %v309, 0
      %v376 = vsel %vm353, %v310, 0
      %v379 = vsel %vm353, %v311, 0
      %v382 = vsel %vm353, %v312, 0
      %v385 = vsel %vm353, %v313, 0
      %v388 = vsel %vm353, %v314, 0
      %v391 = vsel %vm353, %v315, 0
      %v394 = vsel %vm353, %v316, 0
      %v397 = vsel %vm353, %v317, 0
      %v400 = vsel %vm353, %v318, 0
      %v403 = vsel %vm353, %v319, 0
      %v406 = vsel %vm353, %v320, 0
      %v409 = vsel %vm353, %v321, 0
      %v412 = vsel %vm353, %v322, 0
      %v415 = vsel %vm353, %v323, 0
      %v418 = vsel %vm353, %v324, 0
      %v421 = vsel %vm353, %v325, 0
      %v424 = vsel %vm353, %v326, 0
      %v427 = vsel %vm353, %v327, 0
      %v430 = vsel %vm353, %v328, 0
      %v433 = vsel %vm353, %v329, 0
      %v436 = vsel %vm353, %v330, 0
      %v439 = vsel %vm353, %v331, 0
      %v442 = vsel %vm353, %v332, 0
      %v445 = vsel %vm353, %v333, 0
      %v448 = vsel %vm353, %v334, 0
      %v451 = vsel %vm353, %v335, 0
      %v454 = vsel %vm353, %v336, 0
      %v457 = vsel %vm353, %v337, 0
      %v460 = vsel %vm353, %v338, 0
      %v463 = vsel %vm353, %v339, 0
      %v466 = vsel %vm353, %v340, 0
      %v469 = vsel %vm353, %v341, 0
      %v472 = vsel %vm353, %v342, 0
      %v475 = vsel %vm353, %v343, 0
      %v478 = vsel %vm353, %v344, 0
      %v481 = vsel %vm353, %v345, 0
      %v484 = vsel %vm353, %v346, 0
      %v487 = vsel %vm353, %v347, 0
      %v490 = vsel %vm353, %v348, 0
      %v493 = vsel %vm353, %v349, 0
      %v496 = vsel %vm353, %v350, 0
      %v499 = vsel %vm353, %v351, 0
      %vm501 = vcmask 1043456
      %v503 = vsel %vm501, %v352, 0
      %505 = vmatprep.subr.mxu0 0.0
      %506 = vmatpush1.msra.mxu0 %v503
      %507 = vmatprep.subr.mxu0 0.0
      %508 = vmatpush1.msra.mxu0 0.0
      %509 = vmatprep.subr.mxu0 0.0
      %510 = vmatpush1.msra.mxu0 0.0
      %511 = vmatprep.subr.mxu0 0.0
      %512 = vmatpush1.msra.mxu0 0.0
      %513 = vmatprep.subr.mxu0 0.0
      %514 = vmatpush1.msra.mxu0 0.0
      %515 = vmatprep.subr.mxu0 0.0
      %516 = vmatpush1.msra.mxu0 0.0
      %517 = vmatprep.subr.mxu0 0.0
      %518 = vmatpush1.msra.mxu0 0.0
      %519 = vmatprep.subr.mxu0 0.0
      %520 = vmatpush1.msra.mxu0 0.0
      %521 = vmatprep.subr.mxu0 0.0
      %522 = vmatpush1.msra.mxu0 0.0
      %523 = vmatprep.subr.mxu0 0.0
      %524 = vmatpush1.msra.mxu0 0.0
      %525 = vmatprep.subr.mxu0 0.0
      %526 = vmatpush1.msra.mxu0 0.0
      %527 = vmatprep.subr.mxu0 0.0
      %528 = vmatpush1.msra.mxu0 0.0
      %529 = vmatprep.subr.mxu0 0.0
      %530 = vmatpush1.msra.mxu0 0.0
      %531 = vmatprep.subr.mxu0 0.0
      %532 = vmatpush1.msra.mxu0 0.0
      %533 = vmatprep.subr.mxu0 0.0
      %534 = vmatpush1.msra.mxu0 0.0
      %535 = vmatprep.subr.mxu0 0.0
      %536 = vmatpush1.msra.mxu0 0.0
      %537 = vmatprep.subr.mxu0 0.0
      %538 = vmatpush1.msra.mxu0 0.0
      %539 = vmatprep.subr.mxu0 0.0
      %540 = vmatpush1.msra.mxu0 0.0
      %541 = vmatprep.subr.mxu0 0.0
      %542 = vmatpush1.msra.mxu0 0.0
      %543 = vmatprep.subr.mxu0 0.0
      %544 = vmatpush1.msra.mxu0 0.0
      %545 = vmatprep.subr.mxu0 0.0
      %546 = vmatpush1.msra.mxu0 0.0
      %547 = vmatprep.subr.mxu0 0.0
      %548 = vmatpush1.msra.mxu0 0.0
      %549 = vmatprep.subr.mxu0 0.0
      %550 = vmatpush1.msra.mxu0 0.0
      %551 = vmatprep.subr.mxu0 0.0
      %552 = vmatpush1.msra.mxu0 0.0
      %553 = vmatprep.subr.mxu0 0.0
      %554 = vmatpush1.msra.mxu0 0.0
      %555 = vmatprep.subr.mxu0 0.0
      %556 = vmatpush1.msra.mxu0 0.0
      %557 = vmatprep.subr.mxu0 0.0
      %558 = vmatpush1.msra.mxu0 0.0
      %559 = vmatprep.subr.mxu0 0.0
      %560 = vmatpush1.msra.mxu0 0.0
      %561 = vmatprep.subr.mxu0 0.0
      %562 = vmatpush1.msra.mxu0 0.0
      %563 = vmatprep.subr.mxu0 0.0
      %564 = vmatpush1.msra.mxu0 0.0
      %565 = vmatprep.subr.mxu0 0.0
      %566 = vmatpush1.msra.mxu0 0.0
      %567 = vmatprep.subr.mxu0 0.0
      %568 = vmatpush1.msra.mxu0 0.0
      %569 = vmatprep.mubr.f32.mxu0 0.0
      %570 = vmatmul.mubr.f32.gmra.mrb[0].mxu0 %v355
      %v571 = vpop.f32.mrb[0].mxu0
      %v572 = vadd.f32 0.0, %v571
      %v573 = vpop.f32.mrb[0].mxu0
      %574 = vmatprep.mubr.f32.mxu0 0.0
      %575 = vmatmul.mubr.f32.gmra.mrb[0].mxu0 %v358
      %v576 = vpop.f32.mrb[0].mxu0
      %v577 = vadd.f32 0.0, %v576
      %v578 = vpop.f32.mrb[0].mxu0
      %579 = vmatprep.mubr.f32.mxu0 0.0
      %580 = vmatmul.mubr.f32.gmra.mrb[0].mxu0 %v361
      %v581 = vpop.f32.mrb[0].mxu0
      %v582 = vadd.f32 0.0, %v581
      %v583 = vpop.f32.mrb[0].mxu0
      %584 = vmatprep.mubr.f32.mxu0 0.0
      %585 = vmatmul.mubr.f32.gmra.mrb[0].mxu0 %v364
      %v586 = vpop.f32.mrb[0].mxu0
      %v587 = vadd.f32 0.0, %v586
      %v588 = vpop.f32.mrb[0].mxu0
      %589 = vmatprep.mubr.f32.mxu0 0.0
      %590 = vmatmul.mubr.f32.gmra.mrb[0].mxu0 %v367
      %v591 = vpop.f32.mrb[0].mxu0
      %v592 = vadd.f32 0.0, %v591
      %v593 = vpop.f32.mrb[0].mxu0
      %594 = vmatprep.mubr.f32.mxu0 0.0
      %595 = vmatmul.mubr.f32.gmra.mrb[0].mxu0 %v370
      %v596 = vpop.f32.mrb[0].mxu0
      %v597 = vadd.f32 0.0, %v596
      %v598 = vpop.f32.mrb[0].mxu0
      %599 = vmatprep.mubr.f32.mxu0 0.0
      %600 = vmatmul.mubr.f32.gmra.mrb[0].mxu0 %v373
      %v601 = vpop.f32.mrb[0].mxu0
      %v602 = vadd.f32 0.0, %v601
      %v603 = vpop.f32.mrb[0].mxu0
      %604 = vmatprep.mubr.f32.mxu0 0.0
      %605 = vmatmul.mubr.f32.gmra.mrb[0].mxu0 %v376
      %v606 = vpop.f32.mrb[0].mxu0
      %v607 = vadd.f32 0.0, %v606
      %v608 = vpop.f32.mrb[0].mxu0
      %609 = vmatprep.mubr.f32.mxu0 0.0
      %610 = vmatmul.mubr.f32.gmra.mrb[0].mxu0 %v379
      %v611 = vpop.f32.mrb[0].mxu0
      %v612 = vadd.f32 0.0, %v611
      %v613 = vpop.f32.mrb[0].mxu0
      %614 = vmatprep.mubr.f32.mxu0 0.0
      %615 = vmatmul.mubr.f32.gmra.mrb[0].mxu0 %v382
      %v616 = vpop.f32.mrb[0].mxu0
      %v617 = vadd.f32 0.0, %v616
      %v618 = vpop.f32.mrb[0].mxu0
      %619 = vmatprep.mubr.f32.mxu0 0.0
      %620 = vmatmul.mubr.f32.gmra.mrb[0].mxu0 %v385
      %v621 = vpop.f32.mrb[0].mxu0
      %v622 = vadd.f32 0.0, %v621
      %v623 = vpop.f32.mrb[0].mxu0
      %624 = vmatprep.mubr.f32.mxu0 0.0
      %625 = vmatmul.mubr.f32.gmra.mrb[0].mxu0 %v388
      %v626 = vpop.f32.mrb[0].mxu0
      %v627 = vadd.f32 0.0, %v626
      %v628 = vpop.f32.mrb[0].mxu0
      %629 = vmatprep.mubr.f32.mxu0 0.0
      %630 = vmatmul.mubr.f32.gmra.mrb[0].mxu0 %v391
      %v631 = vpop.f32.mrb[0].mxu0
      %v632 = vadd.f32 0.0, %v631
      %v633 = vpop.f32.mrb[0].mxu0
      %634 = vmatprep.mubr.f32.mxu0 0.0
      %635 = vmatmul.mubr.f32.gmra.mrb[0].mxu0 %v394
      %v636 = vpop.f32.mrb[0].mxu0
      %v637 = vadd.f32 0.0, %v636
      %v638 = vpop.f32.mrb[0].mxu0
      %639 = vmatprep.mubr.f32.mxu0 0.0
      %640 = vmatmul.mubr.f32.gmra.mrb[0].mxu0 %v397
      %v641 = vpop.f32.mrb[0].mxu0
      %v642 = vadd.f32 0.0, %v641
      %v643 = vpop.f32.mrb[0].mxu0
      %644 = vmatprep.mubr.f32.mxu0 0.0
      %645 = vmatmul.mubr.f32.gmra.mrb[0].mxu0 %v400
      %v646 = vpop.f32.mrb[0].mxu0
      %v647 = vadd.f32 0.0, %v646
      %v648 = vpop.f32.mrb[0].mxu0
      %649 = vmatprep.mubr.f32.mxu0 0.0
      %650 = vmatmul.mubr.f32.gmra.mrb[0].mxu0 %v403
      %v651 = vpop.f32.mrb[0].mxu0
      %v652 = vadd.f32 0.0, %v651
      %v653 = vpop.f32.mrb[0].mxu0
      %654 = vmatprep.mubr.f32.mxu0 0.0
      %655 = vmatmul.mubr.f32.gmra.mrb[0].mxu0 %v406
      %v656 = vpop.f32.mrb[0].mxu0
      %v657 = vadd.f32 0.0, %v656
      %v658 = vpop.f32.mrb[0].mxu0
      %659 = vmatprep.mubr.f32.mxu0 0.0
      %660 = vmatmul.mubr.f32.gmra.mrb[0].mxu0 %v409
      %v661 = vpop.f32.mrb[0].mxu0
      %v662 = vadd.f32 0.0, %v661
      %v663 = vpop.f32.mrb[0].mxu0
      %664 = vmatprep.mubr.f32.mxu0 0.0
      %665 = vmatmul.mubr.f32.gmra.mrb[0].mxu0 %v412
      %v666 = vpop.f32.mrb[0].mxu0
      %v667 = vadd.f32 0.0, %v666
      %v668 = vpop.f32.mrb[0].mxu0
      %669 = vmatprep.mubr.f32.mxu0 0.0
      %670 = vmatmul.mubr.f32.gmra.mrb[0].mxu0 %v415
      %v671 = vpop.f32.mrb[0].mxu0
      %v672 = vadd.f32 0.0, %v671
      %v673 = vpop.f32.mrb[0].mxu0
      %674 = vmatprep.mubr.f32.mxu0 0.0
      %675 = vmatmul.mubr.f32.gmra.mrb[0].mxu0 %v418
      %v676 = vpop.f32.mrb[0].mxu0
      %v677 = vadd.f32 0.0, %v676
      %v678 = vpop.f32.mrb[0].mxu0
      %679 = vmatprep.mubr.f32.mxu0 0.0
      %680 = vmatmul.mubr.f32.gmra.mrb[0].mxu0 %v421
      %v681 = vpop.f32.mrb[0].mxu0
      %v682 = vadd.f32 0.0, %v681
      %v683 = vpop.f32.mrb[0].mxu0
      %684 = vmatprep.mubr.f32.mxu0 0.0
      %685 = vmatmul.mubr.f32.gmra.mrb[0].mxu0 %v424
      %v686 = vpop.f32.mrb[0].mxu0
      %v687 = vadd.f32 0.0, %v686
      %v688 = vpop.f32.mrb[0].mxu0
      %689 = vmatprep.mubr.f32.mxu0 0.0
      %690 = vmatmul.mubr.f32.gmra.mrb[0].mxu0 %v427
      %v691 = vpop.f32.mrb[0].mxu0
      %v692 = vadd.f32 0.0, %v691
      %v693 = vpop.f32.mrb[0].mxu0
      %694 = vmatprep.mubr.f32.mxu0 0.0
      %695 = vmatmul.mubr.f32.gmra.mrb[0].mxu0 %v430
      %v696 = vpop.f32.mrb[0].mxu0
      %v697 = vadd.f32 0.0, %v696
      %v698 = vpop.f32.mrb[0].mxu0
      %699 = vmatprep.mubr.f32.mxu0 0.0
      %700 = vmatmul.mubr.f32.gmra.mrb[0].mxu0 %v433
      %v701 = vpop.f32.mrb[0].mxu0
      %v702 = vadd.f32 0.0, %v701
      %v703 = vpop.f32.mrb[0].mxu0
      %704 = vmatprep.mubr.f32.mxu0 0.0
      %705 = vmatmul.mubr.f32.gmra.mrb[0].mxu0 %v436
      %v706 = vpop.f32.mrb[0].mxu0
      %v707 = vadd.f32 0.0, %v706
      %v708 = vpop.f32.mrb[0].mxu0
      %709 = vmatprep.mubr.f32.mxu0 0.0
      %710 = vmatmul.mubr.f32.gmra.mrb[0].mxu0 %v439
      %v711 = vpop.f32.mrb[0].mxu0
      %v712 = vadd.f32 0.0, %v711
      %v713 = vpop.f32.mrb[0].mxu0
      %714 = vmatprep.mubr.f32.mxu0 0.0
      %715 = vmatmul.mubr.f32.gmra.mrb[0].mxu0 %v442
      %v716 = vpop.f32.mrb[0].mxu0
      %v717 = vadd.f32 0.0, %v716
      %v718 = vpop.f32.mrb[0].mxu0
      %719 = vmatprep.mubr.f32.mxu0 0.0
      %720 = vmatmul.mubr.f32.gmra.mrb[0].mxu0 %v445
      %v721 = vpop.f32.mrb[0].mxu0
      %v722 = vadd.f32 0.0, %v721
      %v723 = vpop.f32.mrb[0].mxu0
      %724 = vmatprep.mubr.f32.mxu0 0.0
      %725 = vmatmul.mubr.f32.gmra.mrb[0].mxu0 %v448
      %v726 = vpop.f32.mrb[0].mxu0
      %v727 = vadd.f32 0.0, %v726
      %v728 = vpop.f32.mrb[0].mxu0
      %729 = vmatprep.mubr.f32.mxu0 0.0
      %730 = vmatmul.mubr.f32.gmra.mrb[0].mxu0 %v451
      %v731 = vpop.f32.mrb[0].mxu0
      %v732 = vadd.f32 0.0, %v731
      %v733 = vpop.f32.mrb[0].mxu0
      %734 = vmatprep.mubr.f32.mxu0 0.0
      %735 = vmatmul.mubr.f32.gmra.mrb[0].mxu0 %v454
      %v736 = vpop.f32.mrb[0].mxu0
      %v737 = vadd.f32 0.0, %v736
      %v738 = vpop.f32.mrb[0].mxu0
      %739 = vmatprep.mubr.f32.mxu0 0.0
      %740 = vmatmul.mubr.f32.gmra.mrb[0].mxu0 %v457
      %v741 = vpop.f32.mrb[0].mxu0
      %v742 = vadd.f32 0.0, %v741
      %v743 = vpop.f32.mrb[0].mxu0
      %744 = vmatprep.mubr.f32.mxu0 0.0
      %745 = vmatmul.mubr.f32.gmra.mrb[0].mxu0 %v460
      %v746 = vpop.f32.mrb[0].mxu0
      %v747 = vadd.f32 0.0, %v746
      %v748 = vpop.f32.mrb[0].mxu0
      %749 = vmatprep.mubr.f32.mxu0 0.0
      %750 = vmatmul.mubr.f32.gmra.mrb[0].mxu0 %v463
      %v751 = vpop.f32.mrb[0].mxu0
      %v752 = vadd.f32 0.0, %v751
      %v753 = vpop.f32.mrb[0].mxu0
      %754 = vmatprep.mubr.f32.mxu0 0.0
      %755 = vmatmul.mubr.f32.gmra.mrb[0].mxu0 %v466
      %v756 = vpop.f32.mrb[0].mxu0
      %v757 = vadd.f32 0.0, %v756
      %v758 = vpop.f32.mrb[0].mxu0
      %759 = vmatprep.mubr.f32.mxu0 0.0
      %760 = vmatmul.mubr.f32.gmra.mrb[0].mxu0 %v469
      %v761 = vpop.f32.mrb[0].mxu0
      %v762 = vadd.f32 0.0, %v761
      %v763 = vpop.f32.mrb[0].mxu0
      %764 = vmatprep.mubr.f32.mxu0 0.0
      %765 = vmatmul.mubr.f32.gmra.mrb[0].mxu0 %v472
      %v766 = vpop.f32.mrb[0].mxu0
      %v767 = vadd.f32 0.0, %v766
      %v768 = vpop.f32.mrb[0].mxu0
      %769 = vmatprep.mubr.f32.mxu0 0.0
      %770 = vmatmul.mubr.f32.gmra.mrb[0].mxu0 %v475
      %v771 = vpop.f32.mrb[0].mxu0
      %v772 = vadd.f32 0.0, %v771
      %v773 = vpop.f32.mrb[0].mxu0
      %774 = vmatprep.mubr.f32.mxu0 0.0
      %775 = vmatmul.mubr.f32.gmra.mrb[0].mxu0 %v478
      %v776 = vpop.f32.mrb[0].mxu0
      %v777 = vadd.f32 0.0, %v776
      %v778 = vpop.f32.mrb[0].mxu0
      %779 = vmatprep.mubr.f32.mxu0 0.0
      %780 = vmatmul.mubr.f32.gmra.mrb[0].mxu0 %v481
      %v781 = vpop.f32.mrb[0].mxu0
      %v782 = vadd.f32 0.0, %v781
      %v783 = vpop.f32.mrb[0].mxu0
      %784 = vmatprep.mubr.f32.mxu0 0.0
      %785 = vmatmul.mubr.f32.gmra.mrb[0].mxu0 %v484
      %v786 = vpop.f32.mrb[0].mxu0
      %v787 = vadd.f32 0.0, %v786
      %v788 = vpop.f32.mrb[0].mxu0
      %789 = vmatprep.mubr.f32.mxu0 0.0
      %790 = vmatmul.mubr.f32.gmra.mrb[0].mxu0 %v487
      %v791 = vpop.f32.mrb[0].mxu0
      %v792 = vadd.f32 0.0, %v791
      %v793 = vpop.f32.mrb[0].mxu0
      %794 = vmatprep.mubr.f32.mxu0 0.0
      %795 = vmatmul.mubr.f32.gmra.mrb[0].mxu0 %v490
      %v796 = vpop.f32.mrb[0].mxu0
      %v797 = vadd.f32 0.0, %v796
      %v798 = vpop.f32.mrb[0].mxu0
      %799 = vmatprep.mubr.f32.mxu0 0.0
      %800 = vmatmul.mubr.f32.gmra.mrb[0].mxu0 %v493
      %v801 = vpop.f32.mrb[0].mxu0
      %v802 = vadd.f32 0.0, %v801
      %v803 = vpop.f32.mrb[0].mxu0
      %804 = vmatprep.mubr.f32.mxu0 0.0
      %805 = vmatmul.mubr.f32.gmra.mrb[0].mxu0 %v496
      %v806 = vpop.f32.mrb[0].mxu0
      %v807 = vadd.f32 0.0, %v806
      %v808 = vpop.f32.mrb[0].mxu0
      %809 = vmatprep.mubr.f32.mxu0 0.0
      %810 = vmatmul.mubr.f32.gmra.mrb[0].mxu0 %v499
      %v811 = vpop.f32.mrb[0].mxu0
      %v812 = vadd.f32 0.0, %v811
      %v813 = vpop.f32.mrb[0].mxu0
      %814 = vdwg.mxu0
      %v815 = vadd.f32 %v254, %v572
      %v816 = vadd.f32 %v255, %v577
      %v817 = vadd.f32 %v256, %v582
      %v818 = vadd.f32 %v257, %v587
      %v819 = vadd.f32 %v258, %v592
      %v820 = vadd.f32 %v259, %v597
      %v821 = vadd.f32 %v260, %v602
      %v822 = vadd.f32 %v261, %v607
      %v823 = vadd.f32 %v262, %v612
      %v824 = vadd.f32 %v263, %v617
      %v825 = vadd.f32 %v264, %v622
      %v826 = vadd.f32 %v265, %v627
      %v827 = vadd.f32 %v266, %v632
      %v828 = vadd.f32 %v267, %v637
      %v829 = vadd.f32 %v268, %v642
      %v830 = vadd.f32 %v269, %v647
      %v831 = vadd.f32 %v270, %v652
      %v832 = vadd.f32 %v271, %v657
      %v833 = vadd.f32 %v272, %v662
      %v834 = vadd.f32 %v273, %v667
      %v835 = vadd.f32 %v274, %v672
      %v836 = vadd.f32 %v275, %v677
      %v837 = vadd.f32 %v276, %v682
      %v838 = vadd.f32 %v277, %v687
      %v839 = vadd.f32 %v278, %v692
      %v840 = vadd.f32 %v279, %v697
      %v841 = vadd.f32 %v280, %v702
      %v842 = vadd.f32 %v281, %v707
      %v843 = vadd.f32 %v282, %v712
      %v844 = vadd.f32 %v283, %v717
      %v845 = vadd.f32 %v284, %v722
      %v846 = vadd.f32 %v285, %v727
      %v847 = vadd.f32 %v286, %v732
      %v848 = vadd.f32 %v287, %v737
      %v849 = vadd.f32 %v288, %v742
      %v850 = vadd.f32 %v289, %v747
      %v851 = vadd.f32 %v290, %v752
      %v852 = vadd.f32 %v291, %v757
      %v853 = vadd.f32 %v292, %v762
      %v854 = vadd.f32 %v293, %v767
      %v855 = vadd.f32 %v294, %v772
      %v856 = vadd.f32 %v295, %v777
      %v857 = vadd.f32 %v296, %v782
      %v858 = vadd.f32 %v297, %v787
      %v859 = vadd.f32 %v298, %v792
      %v860 = vadd.f32 %v299, %v797
      %v861 = vadd.f32 %v300, %v802
      %v862 = vadd.f32 %v301, %v807
      %v863 = vadd.f32 %v302, %v812
      %vm864 = vcmask 261120
      %865 = vst.msk [vmem:[#allocation2] sm:$0xff] %vm864, %v815
      %866 = vst.msk [vmem:[#allocation2 + $0x8] sm:$0xff] %vm864, %v816
      %867 = vst.msk [vmem:[#allocation2 + $0x10] sm:$0xff] %vm864, %v817
      %868 = vst.msk [vmem:[#allocation2 + $0x18] sm:$0xff] %vm864, %v818
      %869 = vst.msk [vmem:[#allocation2 + $0x20] sm:$0xff] %vm864, %v819
      %870 = vst.msk [vmem:[#allocation2 + $0x28] sm:$0xff] %vm864, %v820
      %871 = vst.msk [vmem:[#allocation2 + $0x30] sm:$0xff] %vm864, %v821
      %872 = vst.msk [vmem:[#allocation2 + $0x38] sm:$0xff] %vm864, %v822
      %873 = vst.msk [vmem:[#allocation2 + $0x40] sm:$0xff] %vm864, %v823
      %874 = vst.msk [vmem:[#allocation2 + $0x48] sm:$0xff] %vm864, %v824
      %875 = vst.msk [vmem:[#allocation2 + $0x50] sm:$0xff] %vm864, %v825
      %876 = vst.msk [vmem:[#allocation2 + $0x58] sm:$0xff] %vm864, %v826
      %877 = vst.msk [vmem:[#allocation2 + $0x60] sm:$0xff] %vm864, %v827
      %878 = vst.msk [vmem:[#allocation2 + $0x68] sm:$0xff] %vm864, %v828
      %879 = vst.msk [vmem:[#allocation2 + $0x70] sm:$0xff] %vm864, %v829
      %880 = vst.msk [vmem:[#allocation2 + $0x78] sm:$0xff] %vm864, %v830
      %881 = vst.msk [vmem:[#allocation2 + $0x80] sm:$0xff] %vm864, %v831
      %882 = vst.msk [vmem:[#allocation2 + $0x88] sm:$0xff] %vm864, %v832
      %883 = vst.msk [vmem:[#allocation2 + $0x90] sm:$0xff] %vm864, %v833
      %884 = vst.msk [vmem:[#allocation2 + $0x98] sm:$0xff] %vm864, %v834
      %885 = vst.msk [vmem:[#allocation2 + $0xa0] sm:$0xff] %vm864, %v835
      %886 = vst.msk [vmem:[#allocation2 + $0xa8] sm:$0xff] %vm864, %v836
      %887 = vst.msk [vmem:[#allocation2 + $0xb0] sm:$0xff] %vm864, %v837
      %888 = vst.msk [vmem:[#allocation2 + $0xb8] sm:$0xff] %vm864, %v838
      %889 = vst.msk [vmem:[#allocation2 + $0xc0] sm:$0xff] %vm864, %v839
      %890 = vst.msk [vmem:[#allocation2 + $0xc8] sm:$0xff] %vm864, %v840
      %891 = vst.msk [vmem:[#allocation2 + $0xd0] sm:$0xff] %vm864, %v841
      %892 = vst.msk [vmem:[#allocation2 + $0xd8] sm:$0xff] %vm864, %v842
      %893 = vst.msk [vmem:[#allocation2 + $0xe0] sm:$0xff] %vm864, %v843
      %894 = vst.msk [vmem:[#allocation2 + $0xe8] sm:$0xff] %vm864, %v844
      %895 = vst.msk [vmem:[#allocation2 + $0xf0] sm:$0xff] %vm864, %v845
      %896 = vst.msk [vmem:[#allocation2 + $0xf8] sm:$0xff] %vm864, %v846
      %897 = vst.msk [vmem:[#allocation2 + $0x100] sm:$0xff] %vm864, %v847
      %898 = vst.msk [vmem:[#allocation2 + $0x108] sm:$0xff] %vm864, %v848
      %899 = vst.msk [vmem:[#allocation2 + $0x110] sm:$0xff] %vm864, %v849
      %900 = vst.msk [vmem:[#allocation2 + $0x118] sm:$0xff] %vm864, %v850
      %901 = vst.msk [vmem:[#allocation2 + $0x120] sm:$0xff] %vm864, %v851
      %902 = vst.msk [vmem:[#allocation2 + $0x128] sm:$0xff] %vm864, %v852
      %903 = vst.msk [vmem:[#allocation2 + $0x130] sm:$0xff] %vm864, %v853
      %904 = vst.msk [vmem:[#allocation2 + $0x138] sm:$0xff] %vm864, %v854
      %905 = vst.msk [vmem:[#allocation2 + $0x140] sm:$0xff] %vm864, %v855
      %906 = vst.msk [vmem:[#allocation2 + $0x148] sm:$0xff] %vm864, %v856
      %907 = vst.msk [vmem:[#allocation2 + $0x150] sm:$0xff] %vm864, %v857
      %908 = vst.msk [vmem:[#allocation2 + $0x158] sm:$0xff] %vm864, %v858
      %909 = vst.msk [vmem:[#allocation2 + $0x160] sm:$0xff] %vm864, %v859
      %910 = vst.msk [vmem:[#allocation2 + $0x168] sm:$0xff] %vm864, %v860
      %911 = vst.msk [vmem:[#allocation2 + $0x170] sm:$0xff] %vm864, %v861
      %912 = vst.msk [vmem:[#allocation2 + $0x178] sm:$0xff] %vm864, %v862
      %913 = vst.msk [vmem:[#allocation2 + $0x180] sm:$0xff] %vm864, %v863
      %p914 = scmp.eq.s32.totalorder %s15, 8
      // Predicated region
      $region41: #{depthwise_xcorr_forward.5} parent=35 // pred_check
        %p915 = pneg %p914
      $region42: #{depthwise_xcorr_forward.5} parent=35 // pred_check_branch
        %917 = sbr.rel (%p915) target = $region44
      $region43: #{depthwise_xcorr_forward.5} parent=35 // pred_region
        %v918 = vld [vmem:[#allocation2] sm:$0xff]
        %v919 = vld [vmem:[#allocation2 + $0x8] sm:$0xff]
        %v920 = vld [vmem:[#allocation2 + $0x10] sm:$0xff]
        %v921 = vld [vmem:[#allocation2 + $0x18] sm:$0xff]
        %v922 = vld [vmem:[#allocation2 + $0x20] sm:$0xff]
        %v923 = vld [vmem:[#allocation2 + $0x28] sm:$0xff]
        %v924 = vld [vmem:[#allocation2 + $0x30] sm:$0xff]
        %v925 = vld [vmem:[#allocation2 + $0x38] sm:$0xff]
        %v926 = vld [vmem:[#allocation2 + $0x40] sm:$0xff]
        %v927 = vld [vmem:[#allocation2 + $0x48] sm:$0xff]
        %v928 = vld [vmem:[#allocation2 + $0x50] sm:$0xff]
        %v929 = vld [vmem:[#allocation2 + $0x58] sm:$0xff]
        %v930 = vld [vmem:[#allocation2 + $0x60] sm:$0xff]
        %v931 = vld [vmem:[#allocation2 + $0x68] sm:$0xff]
        %v932 = vld [vmem:[#allocation2 + $0x70] sm:$0xff]
        %v933 = vld [vmem:[#allocation2 + $0x78] sm:$0xff]
        %v934 = vld [vmem:[#allocation2 + $0x80] sm:$0xff]
        %v935 = vld [vmem:[#allocation2 + $0x88] sm:$0xff]
        %v936 = vld [vmem:[#allocation2 + $0x90] sm:$0xff]
        %v937 = vld [vmem:[#allocation2 + $0x98] sm:$0xff]
        %v938 = vld [vmem:[#allocation2 + $0xa0] sm:$0xff]
        %v939 = vld [vmem:[#allocation2 + $0xa8] sm:$0xff]
        %v940 = vld [vmem:[#allocation2 + $0xb0] sm:$0xff]
        %v941 = vld [vmem:[#allocation2 + $0xb8] sm:$0xff]
        %v942 = vld [vmem:[#allocation2 + $0xc0] sm:$0xff]
        %v943 = vld [vmem:[#allocation2 + $0xc8] sm:$0xff]
        %v944 = vld [vmem:[#allocation2 + $0xd0] sm:$0xff]
        %v945 = vld [vmem:[#allocation2 + $0xd8] sm:$0xff]
        %v946 = vld [vmem:[#allocation2 + $0xe0] sm:$0xff]
        %v947 = vld [vmem:[#allocation2 + $0xe8] sm:$0xff]
        %v948 = vld [vmem:[#allocation2 + $0xf0] sm:$0xff]
        %v949 = vld [vmem:[#allocation2 + $0xf8] sm:$0xff]
        %v950 = vld [vmem:[#allocation2 + $0x100] sm:$0xff]
        %v951 = vld [vmem:[#allocation2 + $0x108] sm:$0xff]
        %v952 = vld [vmem:[#allocation2 + $0x110] sm:$0xff]
        %v953 = vld [vmem:[#allocation2 + $0x118] sm:$0xff]
        %v954 = vld [vmem:[#allocation2 + $0x120] sm:$0xff]
        %v955 = vld [vmem:[#allocation2 + $0x128] sm:$0xff]
        %v956 = vld [vmem:[#allocation2 + $0x130] sm:$0xff]
        %v957 = vld [vmem:[#allocation2 + $0x138] sm:$0xff]
        %v958 = vld [vmem:[#allocation2 + $0x140] sm:$0xff]
        %v959 = vld [vmem:[#allocation2 + $0x148] sm:$0xff]
        %v960 = vld [vmem:[#allocation2 + $0x150] sm:$0xff]
        %v961 = vld [vmem:[#allocation2 + $0x158] sm:$0xff]
        %v962 = vld [vmem:[#allocation2 + $0x160] sm:$0xff]
        %v963 = vld [vmem:[#allocation2 + $0x168] sm:$0xff]
        %v964 = vld [vmem:[#allocation2 + $0x170] sm:$0xff]
        %v965 = vld [vmem:[#allocation2 + $0x178] sm:$0xff]
        %v966 = vld [vmem:[#allocation2 + $0x180] sm:$0xff]
        %v967 = vld [vmem:[%s2] sm:$0x1]
        %v969 = vlaneseq
        %v970 = vshrl.u32 %v969, 7
        %v971 = vsub.s32 0, %v970
        %v972 = vrot.slane %v967, %v971
        %v974 = vmul.f32 %v918, %v972
        %v975 = vmul.f32 %v919, %v972
        %v976 = vmul.f32 %v920, %v972
        %v977 = vmul.f32 %v921, %v972
        %v978 = vmul.f32 %v922, %v972
        %v979 = vmul.f32 %v923, %v972
        %v980 = vmul.f32 %v924, %v972
        %v981 = vmul.f32 %v925, %v972
        %v982 = vmul.f32 %v926, %v972
        %v983 = vmul.f32 %v927, %v972
        %v984 = vmul.f32 %v928, %v972
        %v985 = vmul.f32 %v929, %v972
        %v986 = vmul.f32 %v930, %v972
        %v987 = vmul.f32 %v931, %v972
        %v988 = vmul.f32 %v932, %v972
        %v989 = vmul.f32 %v933, %v972
        %v990 = vmul.f32 %v934, %v972
        %v991 = vmul.f32 %v935, %v972
        %v992 = vmul.f32 %v936, %v972
        %v993 = vmul.f32 %v937, %v972
        %v994 = vmul.f32 %v938, %v972
        %v995 = vmul.f32 %v939, %v972
        %v996 = vmul.f32 %v940, %v972
        %v997 = vmul.f32 %v941, %v972
        %v998 = vmul.f32 %v942, %v972
        %v999 = vmul.f32 %v943, %v972
        %v1000 = vmul.f32 %v944, %v972
        %v1001 = vmul.f32 %v945, %v972
        %v1002 = vmul.f32 %v946, %v972
        %v1003 = vmul.f32 %v947, %v972
        %v1004 = vmul.f32 %v948, %v972
        %v1005 = vmul.f32 %v949, %v972
        %v1006 = vmul.f32 %v950, %v972
        %v1007 = vmul.f32 %v951, %v972
        %v1008 = vmul.f32 %v952, %v972
        %v1009 = vmul.f32 %v953, %v972
        %v1010 = vmul.f32 %v954, %v972
        %v1011 = vmul.f32 %v955, %v972
        %v1012 = vmul.f32 %v956, %v972
        %v1013 = vmul.f32 %v957, %v972
        %v1014 = vmul.f32 %v958, %v972
        %v1015 = vmul.f32 %v959, %v972
        %v1016 = vmul.f32 %v960, %v972
        %v1017 = vmul.f32 %v961, %v972
        %v1018 = vmul.f32 %v962, %v972
        %v1019 = vmul.f32 %v963, %v972
        %v1020 = vmul.f32 %v964, %v972
        %v1021 = vmul.f32 %v965, %v972
        %v1022 = vmul.f32 %v966, %v972
        %v1023 = vld [vmem:[%s3] sm:$0x1]
        %v1025 = vlaneseq
        %v1026 = vshrl.u32 %v1025, 7
        %v1027 = vsub.s32 0, %v1026
        %v1028 = vrot.slane %v1023, %v1027
        %v1030 = vadd.f32 %v974, %v1028
        %v1031 = vadd.f32 %v975, %v1028
        %v1032 = vadd.f32 %v976, %v1028
        %v1033 = vadd.f32 %v977, %v1028
        %v1034 = vadd.f32 %v978, %v1028
        %v1035 = vadd.f32 %v979, %v1028
        %v1036 = vadd.f32 %v980, %v1028
        %v1037 = vadd.f32 %v981, %v1028
        %v1038 = vadd.f32 %v982, %v1028
        %v1039 = vadd.f32 %v983, %v1028
        %v1040 = vadd.f32 %v984, %v1028
        %v1041 = vadd.f32 %v985, %v1028
        %v1042 = vadd.f32 %v986, %v1028
        %v1043 = vadd.f32 %v987, %v1028
        %v1044 = vadd.f32 %v988, %v1028
        %v1045 = vadd.f32 %v989, %v1028
        %v1046 = vadd.f32 %v990, %v1028
        %v1047 = vadd.f32 %v991, %v1028
        %v1048 = vadd.f32 %v992, %v1028
        %v1049 = vadd.f32 %v993, %v1028
        %v1050 = vadd.f32 %v994, %v1028
        %v1051 = vadd.f32 %v995, %v1028
        %v1052 = vadd.f32 %v996, %v1028
        %v1053 = vadd.f32 %v997, %v1028
        %v1054 = vadd.f32 %v998, %v1028
        %v1055 = vadd.f32 %v999, %v1028
        %v1056 = vadd.f32 %v1000, %v1028
        %v1057 = vadd.f32 %v1001, %v1028
        %v1058 = vadd.f32 %v1002, %v1028
        %v1059 = vadd.f32 %v1003, %v1028
        %v1060 = vadd.f32 %v1004, %v1028
        %v1061 = vadd.f32 %v1005, %v1028
        %v1062 = vadd.f32 %v1006, %v1028
        %v1063 = vadd.f32 %v1007, %v1028
        %v1064 = vadd.f32 %v1008, %v1028
        %v1065 = vadd.f32 %v1009, %v1028
        %v1066 = vadd.f32 %v1010, %v1028
        %v1067 = vadd.f32 %v1011, %v1028
        %v1068 = vadd.f32 %v1012, %v1028
        %v1069 = vadd.f32 %v1013, %v1028
        %v1070 = vadd.f32 %v1014, %v1028
        %v1071 = vadd.f32 %v1015, %v1028
        %v1072 = vadd.f32 %v1016, %v1028
        %v1073 = vadd.f32 %v1017, %v1028
        %v1074 = vadd.f32 %v1018, %v1028
        %v1075 = vadd.f32 %v1019, %v1028
        %v1076 = vadd.f32 %v1020, %v1028
        %v1077 = vadd.f32 %v1021, %v1028
        %v1078 = vadd.f32 %v1022, %v1028
        %v1079 = vmax.f32 %v1030, 0.0
        %v1080 = vmax.f32 %v1031, 0.0
        %v1081 = vmax.f32 %v1032, 0.0
        %v1082 = vmax.f32 %v1033, 0.0
        %v1083 = vmax.f32 %v1034, 0.0
        %v1084 = vmax.f32 %v1035, 0.0
        %v1085 = vmax.f32 %v1036, 0.0
        %v1086 = vmax.f32 %v1037, 0.0
        %v1087 = vmax.f32 %v1038, 0.0
        %v1088 = vmax.f32 %v1039, 0.0
        %v1089 = vmax.f32 %v1040, 0.0
        %v1090 = vmax.f32 %v1041, 0.0
        %v1091 = vmax.f32 %v1042, 0.0
        %v1092 = vmax.f32 %v1043, 0.0
        %v1093 = vmax.f32 %v1044, 0.0
        %v1094 = vmax.f32 %v1045, 0.0
        %v1095 = vmax.f32 %v1046, 0.0
        %v1096 = vmax.f32 %v1047, 0.0
        %v1097 = vmax.f32 %v1048, 0.0
        %v1098 = vmax.f32 %v1049, 0.0
        %v1099 = vmax.f32 %v1050, 0.0
        %v1100 = vmax.f32 %v1051, 0.0
        %v1101 = vmax.f32 %v1052, 0.0
        %v1102 = vmax.f32 %v1053, 0.0
        %v1103 = vmax.f32 %v1054, 0.0
        %v1104 = vmax.f32 %v1055, 0.0
        %v1105 = vmax.f32 %v1056, 0.0
        %v1106 = vmax.f32 %v1057, 0.0
        %v1107 = vmax.f32 %v1058, 0.0
        %v1108 = vmax.f32 %v1059, 0.0
        %v1109 = vmax.f32 %v1060, 0.0
        %v1110 = vmax.f32 %v1061, 0.0
        %v1111 = vmax.f32 %v1062, 0.0
        %v1112 = vmax.f32 %v1063, 0.0
        %v1113 = vmax.f32 %v1064, 0.0
        %v1114 = vmax.f32 %v1065, 0.0
        %v1115 = vmax.f32 %v1066, 0.0
        %v1116 = vmax.f32 %v1067, 0.0
        %v1117 = vmax.f32 %v1068, 0.0
        %v1118 = vmax.f32 %v1069, 0.0
        %v1119 = vmax.f32 %v1070, 0.0
        %v1120 = vmax.f32 %v1071, 0.0
        %v1121 = vmax.f32 %v1072, 0.0
        %v1122 = vmax.f32 %v1073, 0.0
        %v1123 = vmax.f32 %v1074, 0.0
        %v1124 = vmax.f32 %v1075, 0.0
        %v1125 = vmax.f32 %v1076, 0.0
        %v1126 = vmax.f32 %v1077, 0.0
        %v1127 = vmax.f32 %v1078, 0.0
        %1128 = vst.msk [vmem:[%s4] sm:$0xff] %vm864, %v1079
        %1129 = vst.msk [vmem:[%s4 + $0x8] sm:$0xff] %vm864, %v1080
        %1130 = vst.msk [vmem:[%s4 + $0x10] sm:$0xff] %vm864, %v1081
        %1131 = vst.msk [vmem:[%s4 + $0x18] sm:$0xff] %vm864, %v1082
        %1132 = vst.msk [vmem:[%s4 + $0x20] sm:$0xff] %vm864, %v1083
        %1133 = vst.msk [vmem:[%s4 + $0x28] sm:$0xff] %vm864, %v1084
        %1134 = vst.msk [vmem:[%s4 + $0x30] sm:$0xff] %vm864, %v1085
        %1135 = vst.msk [vmem:[%s4 + $0x38] sm:$0xff] %vm864, %v1086
        %1136 = vst.msk [vmem:[%s4 + $0x40] sm:$0xff] %vm864, %v1087
        %1137 = vst.msk [vmem:[%s4 + $0x48] sm:$0xff] %vm864, %v1088
        %1138 = vst.msk [vmem:[%s4 + $0x50] sm:$0xff] %vm864, %v1089
        %1139 = vst.msk [vmem:[%s4 + $0x58] sm:$0xff] %vm864, %v1090
        %1140 = vst.msk [vmem:[%s4 + $0x60] sm:$0xff] %vm864, %v1091
        %1141 = vst.msk [vmem:[%s4 + $0x68] sm:$0xff] %vm864, %v1092
        %1142 = vst.msk [vmem:[%s4 + $0x70] sm:$0xff] %vm864, %v1093
        %1143 = vst.msk [vmem:[%s4 + $0x78] sm:$0xff] %vm864, %v1094
        %1144 = vst.msk [vmem:[%s4 + $0x80] sm:$0xff] %vm864, %v1095
        %1145 = vst.msk [vmem:[%s4 + $0x88] sm:$0xff] %vm864, %v1096
        %1146 = vst.msk [vmem:[%s4 + $0x90] sm:$0xff] %vm864, %v1097
        %1147 = vst.msk [vmem:[%s4 + $0x98] sm:$0xff] %vm864, %v1098
        %1148 = vst.msk [vmem:[%s4 + $0xa0] sm:$0xff] %vm864, %v1099
        %1149 = vst.msk [vmem:[%s4 + $0xa8] sm:$0xff] %vm864, %v1100
        %1150 = vst.msk [vmem:[%s4 + $0xb0] sm:$0xff] %vm864, %v1101
        %1151 = vst.msk [vmem:[%s4 + $0xb8] sm:$0xff] %vm864, %v1102
        %1152 = vst.msk [vmem:[%s4 + $0xc0] sm:$0xff] %vm864, %v1103
        %1153 = vst.msk [vmem:[%s4 + $0xc8] sm:$0xff] %vm864, %v1104
        %1154 = vst.msk [vmem:[%s4 + $0xd0] sm:$0xff] %vm864, %v1105
        %1155 = vst.msk [vmem:[%s4 + $0xd8] sm:$0xff] %vm864, %v1106
        %1156 = vst.msk [vmem:[%s4 + $0xe0] sm:$0xff] %vm864, %v1107
        %1157 = vst.msk [vmem:[%s4 + $0xe8] sm:$0xff] %vm864, %v1108
        %1158 = vst.msk [vmem:[%s4 + $0xf0] sm:$0xff] %vm864, %v1109
        %1159 = vst.msk [vmem:[%s4 + $0xf8] sm:$0xff] %vm864, %v1110
        %1160 = vst.msk [vmem:[%s4 + $0x100] sm:$0xff] %vm864, %v1111
        %1161 = vst.msk [vmem:[%s4 + $0x108] sm:$0xff] %vm864, %v1112
        %1162 = vst.msk [vmem:[%s4 + $0x110] sm:$0xff] %vm864, %v1113
        %1163 = vst.msk [vmem:[%s4 + $0x118] sm:$0xff] %vm864, %v1114
        %1164 = vst.msk [vmem:[%s4 + $0x120] sm:$0xff] %vm864, %v1115
        %1165 = vst.msk [vmem:[%s4 + $0x128] sm:$0xff] %vm864, %v1116
        %1166 = vst.msk [vmem:[%s4 + $0x130] sm:$0xff] %vm864, %v1117
        %1167 = vst.msk [vmem:[%s4 + $0x138] sm:$0xff] %vm864, %v1118
        %1168 = vst.msk [vmem:[%s4 + $0x140] sm:$0xff] %vm864, %v1119
        %1169 = vst.msk [vmem:[%s4 + $0x148] sm:$0xff] %vm864, %v1120
        %1170 = vst.msk [vmem:[%s4 + $0x150] sm:$0xff] %vm864, %v1121
        %1171 = vst.msk [vmem:[%s4 + $0x158] sm:$0xff] %vm864, %v1122
        %1172 = vst.msk [vmem:[%s4 + $0x160] sm:$0xff] %vm864, %v1123
        %1173 = vst.msk [vmem:[%s4 + $0x168] sm:$0xff] %vm864, %v1124
        %1174 = vst.msk [vmem:[%s4 + $0x170] sm:$0xff] %vm864, %v1125
        %1175 = vst.msk [vmem:[%s4 + $0x178] sm:$0xff] %vm864, %v1126
        %1176 = vst.msk [vmem:[%s4 + $0x180] sm:$0xff] %vm864, %v1127
      $region44: #{depthwise_xcorr_forward.5} parent=35 // pred_fallthru
        _
      // Predicated region
      $region45: #{depthwise_xcorr_forward.5} parent=35 // pred_check
        %p1177 = pneg %p122
      $region46: #{depthwise_xcorr_forward.5} parent=35 // pred_check_branch
        %1179 = sbr.rel (%p1177) target = $region48
      $region47: #{depthwise_xcorr_forward.5} parent=35 // pred_region
        _
      $region48: #{depthwise_xcorr_forward.5} parent=35 // pred_fallthru
        _
      // Predicated region
      $region49: #{depthwise_xcorr_forward.5} parent=35 // pred_check
        %p1180 = pneg %p122
      $region50: #{depthwise_xcorr_forward.5} parent=35 // pred_check_branch
        %1182 = sbr.rel (%p1180) target = $region52
      $region51: #{depthwise_xcorr_forward.5} parent=35 // pred_region
        _
      $region52: #{depthwise_xcorr_forward.5} parent=35 // pred_fallthru
        _
    $region36: #{depthwise_xcorr_forward.5} parent=5 // pred_fallthru
      _
    %p1183 = scmp.le.s32.totalorder 2, %s10
    // Predicated region
    $region53: #{depthwise_xcorr_forward.5} parent=5 // pred_check
      %p1184 = pneg %p1183
    $region54: #{depthwise_xcorr_forward.5} parent=5 // pred_check_branch
      %1186 = sbr.rel (%p1184) target = $region56
    $region55: #{depthwise_xcorr_forward.5} parent=5 // pred_region
      %s1187 = ssub.s32 %s10, 2
    $region56: #{depthwise_xcorr_forward.5} parent=5 // pred_fallthru
      _
  $region6: #{depthwise_xcorr_forward.5} parent=0 // loop_footer
    %s14 = sadd.s32 1, %s10
  $region7: #{depthwise_xcorr_forward.5} parent=0 // loop_footer_branch
    %9 = sbr.rel target = $region3
  $region8: #{depthwise_xcorr_forward.5} parent=0 // loop_exit
    _

// kernel: depthwise_xcorr_forward.7
$region0: #{depthwise_xcorr_forward.7}
  #allocation0 [shape = 'u32[]', space=smem, size = 0x4, offset = 0x4, fixed_abs, tag = 'smem constant byte address 0x4 - core index']
  #allocation1 [shape = 'u32[144,128]{1,0:T(1,128)}', space=vmem, size = 0x12000, scoped, tag = 'internal scratch']
  %s0 = inlined_call_operand.vmem [shape: f32[2,81,32], index: 0, kind: input, shape index: {}]
  %s1 = inlined_call_operand.vmem [shape: f32[32,32], index: 1, kind: input, shape index: {}]
  %s2 = inlined_call_operand.vmem [shape: f32[1,32], index: 2, kind: input, shape index: {}]
  %s3 = inlined_call_operand.vmem [shape: f32[1,32], index: 3, kind: input, shape index: {}]
  %s4 = inlined_call_operand.vmem [shape: f32[32,8], index: 4, kind: input, shape index: {}]
  %s5 = inlined_call_operand.vmem [shape: f32[1,8], index: 5, kind: input, shape index: {}]
  %s6 = inlined_call_operand.vmem [shape: f32[2,81,8], index: 6, kind: output, shape index: {}]
  %s7 = sld [smem:[#allocation0]]
  $region57: #{depthwise_xcorr_forward.7} parent=0
    _
  %s9 = ssub.s32 1, %s7
  %s10 = scalar_select 0, %s9, %s7
  loop: start=0, step=1, limit=4
  $region2: #{depthwise_xcorr_forward.7} parent=0 // loop_pre_header
    _
  $region3: #{depthwise_xcorr_forward.7} parent=0 // loop_header
    %s12 = sphi 0, %s16
    %p13 = scmp.ge.s32.totalorder %s12, 4
    %s22 = sphi 0, %s24
    %s25 = sphi 0, %s22
    %s26 = sphi 0, %s25
    %s42 = sphi 0, %s26
    %s46 = sphi 0, %s46
    %s48 = sphi 0, %s46
    %s49 = sphi 0, %s48
    %s63 = sphi 0, %s49
    %s67 = sphi 0, %s67
    %s69 = sphi 0, %s67
    %s70 = sphi 0, %s69
    %s84 = sphi 0, %s70
    %s88 = sphi 0, %s88
    %s90 = sphi 0, %s88
    %s91 = sphi 0, %s90
    %s105 = sphi 0, %s91
    %s109 = sphi 0, %s109
    %s111 = sphi 0, %s109
    %s112 = sphi 0, %s111
    %s126 = sphi 0, %s112
    %s130 = sphi 0, %s130
    %s132 = sphi 0, %s130
    %s133 = sphi 0, %s132
    %s147 = sphi 0, %s133
    %s153 = sphi 0, %s155
    %s156 = sphi 0, %s153
    %s157 = sphi 0, %s156
    %s173 = sphi 0, %s157
  $region4: #{depthwise_xcorr_forward.7} parent=0 // loop_header_branch
    %15 = sbr.rel (%p13) target = $region8
  $region5: #{depthwise_xcorr_forward.7} parent=0 // loop_body
    %s17 = ssub.s32 %s12, 1
    %s18 = ssub.s32 %s12, 2
    %s19 = sadd.s32 %s12, 1
    %s20 = ssub.s32 %s12, %s19
    %p21 = scmp.eq.s32.totalorder %s20, 0
    %s23 = sadd.s32 %s22, 1
    %s24 = scalar_select %p21, %s22, %s23
    %p27 = pneg %p21
    %p28 = scmp.eq.s32.totalorder %s12, 1
    %p29 = por %p27, %p28
    %p30 = scmp.ne.s32.totalorder %s22, %s25
    %p31 = scmp.eq.s32.totalorder %s12, 0
    %p32 = por %p30, %p31
    %p33 = scmp.ne.s32.totalorder %s22, %s25
    %p34 = scmp.eq.s32.totalorder %s17, 1
    %p35 = por %p33, %p34
    %p36 = scmp.ne.s32.totalorder %s25, %s26
    %p37 = scmp.eq.s32.totalorder %s17, 0
    %p38 = por %p36, %p37
    %p39 = scmp.ne.s32.totalorder %s25, %s26
    %p40 = scmp.eq.s32.totalorder %s18, 1
    %p41 = por %p39, %p40
    %p43 = scmp.ne.s32.totalorder %s26, %s42
    %p44 = scmp.eq.s32.totalorder %s18, 0
    %p45 = por %p43, %p44
    %s47 = sadd.s32 %s46, 1
    %p50 = scmp.eq.s32.totalorder %s12, 1
    %p51 = scmp.ne.s32.totalorder %s46, %s48
    %p52 = scmp.eq.s32.totalorder %s12, 0
    %p53 = por %p51, %p52
    %p54 = scmp.ne.s32.totalorder %s46, %s48
    %p55 = scmp.eq.s32.totalorder %s17, 1
    %p56 = por %p54, %p55
    %p57 = scmp.ne.s32.totalorder %s48, %s49
    %p58 = scmp.eq.s32.totalorder %s17, 0
    %p59 = por %p57, %p58
    %p60 = scmp.ne.s32.totalorder %s48, %s49
    %p61 = scmp.eq.s32.totalorder %s18, 1
    %p62 = por %p60, %p61
    %p64 = scmp.ne.s32.totalorder %s49, %s63
    %p65 = scmp.eq.s32.totalorder %s18, 0
    %p66 = por %p64, %p65
    %s68 = sadd.s32 %s67, 1
    %p71 = scmp.eq.s32.totalorder %s12, 1
    %p72 = scmp.ne.s32.totalorder %s67, %s69
    %p73 = scmp.eq.s32.totalorder %s12, 0
    %p74 = por %p72, %p73
    %p75 = scmp.ne.s32.totalorder %s67, %s69
    %p76 = scmp.eq.s32.totalorder %s17, 1
    %p77 = por %p75, %p76
    %p78 = scmp.ne.s32.totalorder %s69, %s70
    %p79 = scmp.eq.s32.totalorder %s17, 0
    %p80 = por %p78, %p79
    %p81 = scmp.ne.s32.totalorder %s69, %s70
    %p82 = scmp.eq.s32.totalorder %s18, 1
    %p83 = por %p81, %p82
    %p85 = scmp.ne.s32.totalorder %s70, %s84
    %p86 = scmp.eq.s32.totalorder %s18, 0
    %p87 = por %p85, %p86
    %s89 = sadd.s32 %s88, 1
    %p92 = scmp.eq.s32.totalorder %s12, 1
    %p93 = scmp.ne.s32.totalorder %s88, %s90
    %p94 = scmp.eq.s32.totalorder %s12, 0
    %p95 = por %p93, %p94
    %p96 = scmp.ne.s32.totalorder %s88, %s90
    %p97 = scmp.eq.s32.totalorder %s17, 1
    %p98 = por %p96, %p97
    %p99 = scmp.ne.s32.totalorder %s90, %s91
    %p100 = scmp.eq.s32.totalorder %s17, 0
    %p101 = por %p99, %p100
    %p102 = scmp.ne.s32.totalorder %s90, %s91
    %p103 = scmp.eq.s32.totalorder %s18, 1
    %p104 = por %p102, %p103
    %p106 = scmp.ne.s32.totalorder %s91, %s105
    %p107 = scmp.eq.s32.totalorder %s18, 0
    %p108 = por %p106, %p107
    %s110 = sadd.s32 %s109, 1
    %p113 = scmp.eq.s32.totalorder %s12, 1
    %p114 = scmp.ne.s32.totalorder %s109, %s111
    %p115 = scmp.eq.s32.totalorder %s12, 0
    %p116 = por %p114, %p115
    %p117 = scmp.ne.s32.totalorder %s109, %s111
    %p118 = scmp.eq.s32.totalorder %s17, 1
    %p119 = por %p117, %p118
    %p120 = scmp.ne.s32.totalorder %s111, %s112
    %p121 = scmp.eq.s32.totalorder %s17, 0
    %p122 = por %p120, %p121
    %p123 = scmp.ne.s32.totalorder %s111, %s112
    %p124 = scmp.eq.s32.totalorder %s18, 1
    %p125 = por %p123, %p124
    %p127 = scmp.ne.s32.totalorder %s112, %s126
    %p128 = scmp.eq.s32.totalorder %s18, 0
    %p129 = por %p127, %p128
    %s131 = sadd.s32 %s130, 1
    %p134 = scmp.eq.s32.totalorder %s12, 1
    %p135 = scmp.ne.s32.totalorder %s130, %s132
    %p136 = scmp.eq.s32.totalorder %s12, 0
    %p137 = por %p135, %p136
    %p138 = scmp.ne.s32.totalorder %s130, %s132
    %p139 = scmp.eq.s32.totalorder %s17, 1
    %p140 = por %p138, %p139
    %p141 = scmp.ne.s32.totalorder %s132, %s133
    %p142 = scmp.eq.s32.totalorder %s17, 0
    %p143 = por %p141, %p142
    %p144 = scmp.ne.s32.totalorder %s132, %s133
    %p145 = scmp.eq.s32.totalorder %s18, 1
    %p146 = por %p144, %p145
    %p148 = scmp.ne.s32.totalorder %s133, %s147
    %p149 = scmp.eq.s32.totalorder %s18, 0
    %p150 = por %p148, %p149
    %s151 = ssub.s32 %s12, %s19
    %p152 = scmp.eq.s32.totalorder %s151, 0
    %s154 = sadd.s32 %s153, 1
    %s155 = scalar_select %p152, %s153, %s154
    %p158 = pneg %p152
    %p159 = scmp.eq.s32.totalorder %s12, 1
    %p160 = por %p158, %p159
    %p161 = scmp.ne.s32.totalorder %s153, %s156
    %p162 = scmp.eq.s32.totalorder %s12, 0
    %p163 = por %p161, %p162
    %p164 = scmp.ne.s32.totalorder %s153, %s156
    %p165 = scmp.eq.s32.totalorder %s17, 1
    %p166 = por %p164, %p165
    %p167 = scmp.ne.s32.totalorder %s156, %s157
    %p168 = scmp.eq.s32.totalorder %s17, 0
    %p169 = por %p167, %p168
    %p170 = scmp.ne.s32.totalorder %s156, %s157
    %p171 = scmp.eq.s32.totalorder %s18, 1
    %p172 = por %p170, %p171
    %p174 = scmp.ne.s32.totalorder %s157, %s173
    %p175 = scmp.eq.s32.totalorder %s18, 0
    %p176 = por %p174, %p175
    %p177 = scmp.le.s32.totalorder 1, %s12
    %p178 = scmp.lt.s32.totalorder %s12, 3
    %p179 = pnand %p177, %p178
    %p180 = pneg %p179
    // Predicated region
    $region9: #{depthwise_xcorr_forward.7} parent=5 // pred_check
      _
    $region10: #{depthwise_xcorr_forward.7} parent=5 // pred_check_branch
      %182 = sbr.rel (%p179) target = $region12
    $region11: #{depthwise_xcorr_forward.7} parent=5 // pred_region
      %s183 = ssub.s32 %s12, 1
      // Predicated region
      $region13: #{depthwise_xcorr_forward.7} parent=11 // pred_check
        %p184 = pneg %p59
      $region14: #{depthwise_xcorr_forward.7} parent=11 // pred_check_branch
        %186 = sbr.rel (%p184) target = $region16
      $region15: #{depthwise_xcorr_forward.7} parent=11 // pred_region
        _
      $region16: #{depthwise_xcorr_forward.7} parent=11 // pred_fallthru
        _
      // Predicated region
      $region17: #{depthwise_xcorr_forward.7} parent=11 // pred_check
        %p187 = pneg %p80
      $region18: #{depthwise_xcorr_forward.7} parent=11 // pred_check_branch
        %189 = sbr.rel (%p187) target = $region20
      $region19: #{depthwise_xcorr_forward.7} parent=11 // pred_region
        _
      $region20: #{depthwise_xcorr_forward.7} parent=11 // pred_fallthru
        _
      // Predicated region
      $region21: #{depthwise_xcorr_forward.7} parent=11 // pred_check
        %p190 = pneg %p101
      $region22: #{depthwise_xcorr_forward.7} parent=11 // pred_check_branch
        %192 = sbr.rel (%p190) target = $region24
      $region23: #{depthwise_xcorr_forward.7} parent=11 // pred_region
        _
      $region24: #{depthwise_xcorr_forward.7} parent=11 // pred_fallthru
        _
      // Predicated region
      $region25: #{depthwise_xcorr_forward.7} parent=11 // pred_check
        %p193 = pneg %p122
      $region26: #{depthwise_xcorr_forward.7} parent=11 // pred_check_branch
        %195 = sbr.rel (%p193) target = $region28
      $region27: #{depthwise_xcorr_forward.7} parent=11 // pred_region
        _
      $region28: #{depthwise_xcorr_forward.7} parent=11 // pred_fallthru
        _
      // Predicated region
      $region29: #{depthwise_xcorr_forward.7} parent=11 // pred_check
        %p196 = pneg %p143
      $region30: #{depthwise_xcorr_forward.7} parent=11 // pred_check_branch
        %198 = sbr.rel (%p196) target = $region32
      $region31: #{depthwise_xcorr_forward.7} parent=11 // pred_region
        _
      $region32: #{depthwise_xcorr_forward.7} parent=11 // pred_fallthru
        _
    $region12: #{depthwise_xcorr_forward.7} parent=5 // pred_fallthru
      _
    %p199 = scmp.lt.s32.totalorder %s12, 2
    // Predicated region
    $region33: #{depthwise_xcorr_forward.7} parent=5 // pred_check
      %p200 = pneg %p199
    $region34: #{depthwise_xcorr_forward.7} parent=5 // pred_check_branch
      %202 = sbr.rel (%p200) target = $region36
    $region35: #{depthwise_xcorr_forward.7} parent=5 // pred_region
      // Predicated region
      $region37: #{depthwise_xcorr_forward.7} parent=35 // pred_check
        %p203 = pneg %p32
      $region38: #{depthwise_xcorr_forward.7} parent=35 // pred_check_branch
        %205 = sbr.rel (%p203) target = $region40
      $region39: #{depthwise_xcorr_forward.7} parent=35 // pred_region
        %p206 = scmp.lt.s32.totalorder %s12, 1
        %s207 = scalar_select %p206, %s12, 1
        %s208 = smul.addr %s207, 11
        %s209 = smul.addr %s208, 8
        %s210 = scalar_lea.vmem %s0, %s209
      $region40: #{depthwise_xcorr_forward.7} parent=35 // pred_fallthru
        _
    $region36: #{depthwise_xcorr_forward.7} parent=5 // pred_fallthru
      _
    %p211 = scmp.le.s32.totalorder 1, %s12
    %p212 = scmp.lt.s32.totalorder %s12, 3
    %p213 = pnand %p211, %p212
    %p214 = pneg %p213
    // Predicated region
    $region41: #{depthwise_xcorr_forward.7} parent=5 // pred_check
      _
    $region42: #{depthwise_xcorr_forward.7} parent=5 // pred_check_branch
      %216 = sbr.rel (%p213) target = $region44
    $region43: #{depthwise_xcorr_forward.7} parent=5 // pred_region
      %s217 = ssub.s32 %s12, 1
      %p218 = scmp.lt.s32.totalorder %s17, 1
      %s219 = scalar_select %p218, %s17, 1
      %s220 = smul.addr %s219, 11
      %s221 = smul.addr %s220, 8
      %s222 = scalar_lea.vmem %s0, %s221
      %p223 = pneg %p38
      %p224 = pneg %p35
      %p225 = pneg %p59
      %p226 = pneg %p56
      %p227 = pneg %p80
      %p228 = pneg %p77
      %p229 = pneg %p101
      %p230 = pneg %p98
      %p231 = pneg %p122
      %p232 = pneg %p119
      %p233 = pneg %p143
      %p234 = pneg %p140
      %p235 = pneg %p169
      %p236 = pneg %p166
      %p237 = scmp.lt.s32.totalorder %s17, 1
      %s238 = scalar_select %p237, %s17, 1
      %s239 = smul.addr %s238, 11
      %s240 = smul.addr %s239, 8
      %s241 = scalar_lea.vmem %s6, %s240
      %p242 = scmp.lt.s32.totalorder %s17, 1
      %s243 = scalar_select %p242, %s17, 1
      %s244 = smul.addr %s243, 11
      %s245 = smul.addr %s244, 8
      %s246 = scalar_lea.vmem %s0, %s245
      %p247 = scmp.lt.s32.totalorder %s17, 1
      %s248 = scalar_select %p247, %s17, 1
      %s249 = smul.addr %s248, 11
      %s250 = smul.addr %s249, 8
      %s251 = scalar_lea.vmem %s6, %s250
      %v252 = vld [vmem:[%s246] sm:$0xff]
      %v253 = vld [vmem:[%s246 + $0x8] sm:$0xff]
      %v254 = vld [vmem:[%s246 + $0x10] sm:$0xff]
      %v255 = vld [vmem:[%s246 + $0x18] sm:$0xff]
      %v256 = vld [vmem:[%s246 + $0x20] sm:$0xff]
      %v257 = vld [vmem:[%s246 + $0x28] sm:$0xff]
      %v258 = vld [vmem:[%s246 + $0x30] sm:$0xff]
      %v259 = vld [vmem:[%s246 + $0x38] sm:$0xff]
      %v260 = vld [vmem:[%s246 + $0x40] sm:$0xff]
      %v261 = vld [vmem:[%s246 + $0x48] sm:$0xff]
      %v262 = vld [vmem:[%s246 + $0x50] sm:$0x1]
      %v263 = vld [vmem:[%s1] sm:$0xff]
      %v264 = vld [vmem:[%s1 + $0x8] sm:$0xff]
      %v265 = vld [vmem:[%s1 + $0x10] sm:$0xff]
      %v266 = vld [vmem:[%s1 + $0x18] sm:$0xff]
      %vm267 = vcmask 261120
      %v269 = vsel %vm267, %v252, 0
      %v272 = vsel %vm267, %v253, 0
      %v275 = vsel %vm267, %v254, 0
      %v278 = vsel %vm267, %v255, 0
      %v281 = vsel %vm267, %v256, 0
      %v284 = vsel %vm267, %v257, 0
      %v287 = vsel %vm267, %v258, 0
      %v290 = vsel %vm267, %v259, 0
      %v293 = vsel %vm267, %v260, 0
      %v296 = vsel %vm267, %v261, 0
      %v299 = vsel %vm267, %v262, 0
      %301 = vmatprep.subr.mxu0 0.0
      %302 = vmatpush1.msra.mxu0 %v263
      %303 = vmatprep.subr.mxu0 0.0
      %304 = vmatpush1.msra.mxu0 %v264
      %305 = vmatprep.subr.mxu0 0.0
      %306 = vmatpush1.msra.mxu0 %v265
      %307 = vmatprep.subr.mxu0 0.0
      %308 = vmatpush1.msra.mxu0 %v266
      %309 = vmatprep.subr.mxu0 0.0
      %310 = vmatpush1.msra.mxu0 0.0
      %311 = vmatprep.subr.mxu0 0.0
      %312 = vmatpush1.msra.mxu0 0.0
      %313 = vmatprep.subr.mxu0 0.0
      %314 = vmatpush1.msra.mxu0 0.0
      %315 = vmatprep.subr.mxu0 0.0
      %316 = vmatpush1.msra.mxu0 0.0
      %317 = vmatprep.subr.mxu0 0.0
      %318 = vmatpush1.msra.mxu0 0.0
      %319 = vmatprep.subr.mxu0 0.0
      %320 = vmatpush1.msra.mxu0 0.0
      %321 = vmatprep.subr.mxu0 0.0
      %322 = vmatpush1.msra.mxu0 0.0
      %323 = vmatprep.subr.mxu0 0.0
      %324 = vmatpush1.msra.mxu0 0.0
      %325 = vmatprep.subr.mxu0 0.0
      %326 = vmatpush1.msra.mxu0 0.0
      %327 = vmatprep.subr.mxu0 0.0
      %328 = vmatpush1.msra.mxu0 0.0
      %329 = vmatprep.subr.mxu0 0.0
      %330 = vmatpush1.msra.mxu0 0.0
      %331 = vmatprep.subr.mxu0 0.0
      %332 = vmatpush1.msra.mxu0 0.0
      %333 = vmatprep.subr.mxu0 0.0
      %334 = vmatpush1.msra.mxu0 0.0
      %335 = vmatprep.subr.mxu0 0.0
      %336 = vmatpush1.msra.mxu0 0.0
      %337 = vmatprep.subr.mxu0 0.0
      %338 = vmatpush1.msra.mxu0 0.0
      %339 = vmatprep.subr.mxu0 0.0
      %340 = vmatpush1.msra.mxu0 0.0
      %341 = vmatprep.subr.mxu0 0.0
      %342 = vmatpush1.msra.mxu0 0.0
      %343 = vmatprep.subr.mxu0 0.0
      %344 = vmatpush1.msra.mxu0 0.0
      %345 = vmatprep.subr.mxu0 0.0
      %346 = vmatpush1.msra.mxu0 0.0
      %347 = vmatprep.subr.mxu0 0.0
      %348 = vmatpush1.msra.mxu0 0.0
      %349 = vmatprep.subr.mxu0 0.0
      %350 = vmatpush1.msra.mxu0 0.0
      %351 = vmatprep.subr.mxu0 0.0
      %352 = vmatpush1.msra.mxu0 0.0
      %353 = vmatprep.subr.mxu0 0.0
      %354 = vmatpush1.msra.mxu0 0.0
      %355 = vmatprep.subr.mxu0 0.0
      %356 = vmatpush1.msra.mxu0 0.0
      %357 = vmatprep.subr.mxu0 0.0
      %358 = vmatpush1.msra.mxu0 0.0
      %359 = vmatprep.subr.mxu0 0.0
      %360 = vmatpush1.msra.mxu0 0.0
      %361 = vmatprep.subr.mxu0 0.0
      %362 = vmatpush1.msra.mxu0 0.0
      %363 = vmatprep.subr.mxu0 0.0
      %364 = vmatpush1.msra.mxu0 0.0
      %365 = vmatprep.mubr.f32.mxu0 0.0
      %366 = vmatmul.mubr.f32.gmra.mrb[0].mxu0 %v269
      %v367 = vpop.f32.mrb[0].mxu0
      %v368 = vadd.f32 0.0, %v367
      %v369 = vpop.f32.mrb[0].mxu0
      %370 = vmatprep.mubr.f32.mxu0 0.0
      %371 = vmatmul.mubr.f32.gmra.mrb[0].mxu0 %v272
      %v372 = vpop.f32.mrb[0].mxu0
      %v373 = vadd.f32 0.0, %v372
      %v374 = vpop.f32.mrb[0].mxu0
      %375 = vmatprep.mubr.f32.mxu0 0.0
      %376 = vmatmul.mubr.f32.gmra.mrb[0].mxu0 %v275
      %v377 = vpop.f32.mrb[0].mxu0
      %v378 = vadd.f32 0.0, %v377
      %v379 = vpop.f32.mrb[0].mxu0
      %380 = vmatprep.mubr.f32.mxu0 0.0
      %381 = vmatmul.mubr.f32.gmra.mrb[0].mxu0 %v278
      %v382 = vpop.f32.mrb[0].mxu0
      %v383 = vadd.f32 0.0, %v382
      %v384 = vpop.f32.mrb[0].mxu0
      %385 = vmatprep.mubr.f32.mxu0 0.0
      %386 = vmatmul.mubr.f32.gmra.mrb[0].mxu0 %v281
      %v387 = vpop.f32.mrb[0].mxu0
      %v388 = vadd.f32 0.0, %v387
      %v389 = vpop.f32.mrb[0].mxu0
      %390 = vmatprep.mubr.f32.mxu0 0.0
      %391 = vmatmul.mubr.f32.gmra.mrb[0].mxu0 %v284
      %v392 = vpop.f32.mrb[0].mxu0
      %v393 = vadd.f32 0.0, %v392
      %v394 = vpop.f32.mrb[0].mxu0
      %395 = vmatprep.mubr.f32.mxu0 0.0
      %396 = vmatmul.mubr.f32.gmra.mrb[0].mxu0 %v287
      %v397 = vpop.f32.mrb[0].mxu0
      %v398 = vadd.f32 0.0, %v397
      %v399 = vpop.f32.mrb[0].mxu0
      %400 = vmatprep.mubr.f32.mxu0 0.0
      %401 = vmatmul.mubr.f32.gmra.mrb[0].mxu0 %v290
      %v402 = vpop.f32.mrb[0].mxu0
      %v403 = vadd.f32 0.0, %v402
      %v404 = vpop.f32.mrb[0].mxu0
      %405 = vmatprep.mubr.f32.mxu0 0.0
      %406 = vmatmul.mubr.f32.gmra.mrb[0].mxu0 %v293
      %v407 = vpop.f32.mrb[0].mxu0
      %v408 = vadd.f32 0.0, %v407
      %v409 = vpop.f32.mrb[0].mxu0
      %410 = vmatprep.mubr.f32.mxu0 0.0
      %411 = vmatmul.mubr.f32.gmra.mrb[0].mxu0 %v296
      %v412 = vpop.f32.mrb[0].mxu0
      %v413 = vadd.f32 0.0, %v412
      %v414 = vpop.f32.mrb[0].mxu0
      %415 = vmatprep.mubr.f32.mxu0 0.0
      %416 = vmatmul.mubr.f32.gmra.mrb[0].mxu0 %v299
      %v417 = vpop.f32.mrb[0].mxu0
      %v418 = vadd.f32 0.0, %v417
      %v419 = vpop.f32.mrb[0].mxu0
      %420 = vdwg.mxu0
      %v421 = vld [vmem:[%s2] sm:$0x1]
      %v423 = vlaneseq
      %v424 = vshrl.u32 %v423, 7
      %v425 = vsub.s32 0, %v424
      %v426 = vrot.slane %v421, %v425
      %v428 = vmul.f32 %v368, %v426
      %v429 = vmul.f32 %v373, %v426
      %v430 = vmul.f32 %v378, %v426
      %v431 = vmul.f32 %v383, %v426
      %v432 = vmul.f32 %v388, %v426
      %v433 = vmul.f32 %v393, %v426
      %v434 = vmul.f32 %v398, %v426
      %v435 = vmul.f32 %v403, %v426
      %v436 = vmul.f32 %v408, %v426
      %v437 = vmul.f32 %v413, %v426
      %v438 = vmul.f32 %v418, %v426
      %v439 = vld [vmem:[%s3] sm:$0x1]
      %v441 = vlaneseq
      %v442 = vshrl.u32 %v441, 7
      %v443 = vsub.s32 0, %v442
      %v444 = vrot.slane %v439, %v443
      %v446 = vadd.f32 %v428, %v444
      %v447 = vadd.f32 %v429, %v444
      %v448 = vadd.f32 %v430, %v444
      %v449 = vadd.f32 %v431, %v444
      %v450 = vadd.f32 %v432, %v444
      %v451 = vadd.f32 %v433, %v444
      %v452 = vadd.f32 %v434, %v444
      %v453 = vadd.f32 %v435, %v444
      %v454 = vadd.f32 %v436, %v444
      %v455 = vadd.f32 %v437, %v444
      %v456 = vadd.f32 %v438, %v444
      %v457 = vmax.f32 %v446, 0.0
      %v458 = vmax.f32 %v447, 0.0
      %v459 = vmax.f32 %v448, 0.0
      %v460 = vmax.f32 %v449, 0.0
      %v461 = vmax.f32 %v450, 0.0
      %v462 = vmax.f32 %v451, 0.0
      %v463 = vmax.f32 %v452, 0.0
      %v464 = vmax.f32 %v453, 0.0
      %v465 = vmax.f32 %v454, 0.0
      %v466 = vmax.f32 %v455, 0.0
      %v467 = vmax.f32 %v456, 0.0
      %v468 = vld [vmem:[%s4] sm:$0xff]
      %v469 = vld [vmem:[%s4 + $0x8] sm:$0xff]
      %v470 = vld [vmem:[%s4 + $0x10] sm:$0xff]
      %v471 = vld [vmem:[%s4 + $0x18] sm:$0xff]
      %v472 = vld [vmem:[%s5] sm:$0x1]
      %v474 = vlaneseq
      %v475 = vshrl.u32 %v474, 7
      %v476 = vsub.s32 0, %v475
      %v477 = vrot.slane %v472, %v476
      %v480 = vsel %vm267, %v457, 0
      %v483 = vsel %vm267, %v458, 0
      %v486 = vsel %vm267, %v459, 0
      %v489 = vsel %vm267, %v460, 0
      %v492 = vsel %vm267, %v461, 0
      %v495 = vsel %vm267, %v462, 0
      %v498 = vsel %vm267, %v463, 0
      %v501 = vsel %vm267, %v464, 0
      %v504 = vsel %vm267, %v465, 0
      %v507 = vsel %vm267, %v466, 0
      %v510 = vsel %vm267, %v467, 0
      %512 = vmatprep.subr.mxu0 0.0
      %513 = vmatpush1.msra.mxu0 %v468
      %514 = vmatprep.subr.mxu0 0.0
      %515 = vmatpush1.msra.mxu0 %v469
      %516 = vmatprep.subr.mxu0 0.0
      %517 = vmatpush1.msra.mxu0 %v470
      %518 = vmatprep.subr.mxu0 0.0
      %519 = vmatpush1.msra.mxu0 %v471
      %520 = vmatprep.subr.mxu0 0.0
      %521 = vmatpush1.msra.mxu0 0.0
      %522 = vmatprep.subr.mxu0 0.0
      %523 = vmatpush1.msra.mxu0 0.0
      %524 = vmatprep.subr.mxu0 0.0
      %525 = vmatpush1.msra.mxu0 0.0
      %526 = vmatprep.subr.mxu0 0.0
      %527 = vmatpush1.msra.mxu0 0.0
      %528 = vmatprep.subr.mxu0 0.0
      %529 = vmatpush1.msra.mxu0 0.0
      %530 = vmatprep.subr.mxu0 0.0
      %531 = vmatpush1.msra.mxu0 0.0
      %532 = vmatprep.subr.mxu0 0.0
      %533 = vmatpush1.msra.mxu0 0.0
      %534 = vmatprep.subr.mxu0 0.0
      %535 = vmatpush1.msra.mxu0 0.0
      %536 = vmatprep.subr.mxu0 0.0
      %537 = vmatpush1.msra.mxu0 0.0
      %538 = vmatprep.subr.mxu0 0.0
      %539 = vmatpush1.msra.mxu0 0.0
      %540 = vmatprep.subr.mxu0 0.0
      %541 = vmatpush1.msra.mxu0 0.0
      %542 = vmatprep.subr.mxu0 0.0
      %543 = vmatpush1.msra.mxu0 0.0
      %544 = vmatprep.subr.mxu0 0.0
      %545 = vmatpush1.msra.mxu0 0.0
      %546 = vmatprep.subr.mxu0 0.0
      %547 = vmatpush1.msra.mxu0 0.0
      %548 = vmatprep.subr.mxu0 0.0
      %549 = vmatpush1.msra.mxu0 0.0
      %550 = vmatprep.subr.mxu0 0.0
      %551 = vmatpush1.msra.mxu0 0.0
      %552 = vmatprep.subr.mxu0 0.0
      %553 = vmatpush1.msra.mxu0 0.0
      %554 = vmatprep.subr.mxu0 0.0
      %555 = vmatpush1.msra.mxu0 0.0
      %556 = vmatprep.subr.mxu0 0.0
      %557 = vmatpush1.msra.mxu0 0.0
      %558 = vmatprep.subr.mxu0 0.0
      %559 = vmatpush1.msra.mxu0 0.0
      %560 = vmatprep.subr.mxu0 0.0
      %561 = vmatpush1.msra.mxu0 0.0
      %562 = vmatprep.subr.mxu0 0.0
      %563 = vmatpush1.msra.mxu0 0.0
      %564 = vmatprep.subr.mxu0 0.0
      %565 = vmatpush1.msra.mxu0 0.0
      %566 = vmatprep.subr.mxu0 0.0
      %567 = vmatpush1.msra.mxu0 0.0
      %568 = vmatprep.subr.mxu0 0.0
      %569 = vmatpush1.msra.mxu0 0.0
      %570 = vmatprep.subr.mxu0 0.0
      %571 = vmatpush1.msra.mxu0 0.0
      %572 = vmatprep.subr.mxu0 0.0
      %573 = vmatpush1.msra.mxu0 0.0
      %574 = vmatprep.subr.mxu0 0.0
      %575 = vmatpush1.msra.mxu0 0.0
      %576 = vmatprep.mubr.f32.mxu0 0.0
      %577 = vmatmul.mubr.f32.gmra.mrb[0].mxu0 %v480
      %v578 = vpop.f32.mrb[0].mxu0
      %v579 = vadd.f32 %v477, %v578
      %v580 = vpop.f32.mrb[0].mxu0
      %581 = vmatprep.mubr.f32.mxu0 0.0
      %582 = vmatmul.mubr.f32.gmra.mrb[0].mxu0 %v483
      %v583 = vpop.f32.mrb[0].mxu0
      %v584 = vadd.f32 %v477, %v583
      %v585 = vpop.f32.mrb[0].mxu0
      %586 = vmatprep.mubr.f32.mxu0 0.0
      %587 = vmatmul.mubr.f32.gmra.mrb[0].mxu0 %v486
      %v588 = vpop.f32.mrb[0].mxu0
      %v589 = vadd.f32 %v477, %v588
      %v590 = vpop.f32.mrb[0].mxu0
      %591 = vmatprep.mubr.f32.mxu0 0.0
      %592 = vmatmul.mubr.f32.gmra.mrb[0].mxu0 %v489
      %v593 = vpop.f32.mrb[0].mxu0
      %v594 = vadd.f32 %v477, %v593
      %v595 = vpop.f32.mrb[0].mxu0
      %596 = vmatprep.mubr.f32.mxu0 0.0
      %597 = vmatmul.mubr.f32.gmra.mrb[0].mxu0 %v492
      %v598 = vpop.f32.mrb[0].mxu0
      %v599 = vadd.f32 %v477, %v598
      %v600 = vpop.f32.mrb[0].mxu0
      %601 = vmatprep.mubr.f32.mxu0 0.0
      %602 = vmatmul.mubr.f32.gmra.mrb[0].mxu0 %v495
      %v603 = vpop.f32.mrb[0].mxu0
      %v604 = vadd.f32 %v477, %v603
      %v605 = vpop.f32.mrb[0].mxu0
      %606 = vmatprep.mubr.f32.mxu0 0.0
      %607 = vmatmul.mubr.f32.gmra.mrb[0].mxu0 %v498
      %v608 = vpop.f32.mrb[0].mxu0
      %v609 = vadd.f32 %v477, %v608
      %v610 = vpop.f32.mrb[0].mxu0
      %611 = vmatprep.mubr.f32.mxu0 0.0
      %612 = vmatmul.mubr.f32.gmra.mrb[0].mxu0 %v501
      %v613 = vpop.f32.mrb[0].mxu0
      %v614 = vadd.f32 %v477, %v613
      %v615 = vpop.f32.mrb[0].mxu0
      %616 = vmatprep.mubr.f32.mxu0 0.0
      %617 = vmatmul.mubr.f32.gmra.mrb[0].mxu0 %v504
      %v618 = vpop.f32.mrb[0].mxu0
      %v619 = vadd.f32 %v477, %v618
      %v620 = vpop.f32.mrb[0].mxu0
      %621 = vmatprep.mubr.f32.mxu0 0.0
      %622 = vmatmul.mubr.f32.gmra.mrb[0].mxu0 %v507
      %v623 = vpop.f32.mrb[0].mxu0
      %v624 = vadd.f32 %v477, %v623
      %v625 = vpop.f32.mrb[0].mxu0
      %626 = vmatprep.mubr.f32.mxu0 0.0
      %627 = vmatmul.mubr.f32.gmra.mrb[0].mxu0 %v510
      %v628 = vpop.f32.mrb[0].mxu0
      %v629 = vadd.f32 %v477, %v628
      %v630 = vpop.f32.mrb[0].mxu0
      %631 = vdwg.mxu0
      %vm632 = vcmask 64512
      %633 = vst.msk [vmem:[%s251] sm:$0xff] %vm632, %v579
      %634 = vst.msk [vmem:[%s251 + $0x8] sm:$0xff] %vm632, %v584
      %635 = vst.msk [vmem:[%s251 + $0x10] sm:$0xff] %vm632, %v589
      %636 = vst.msk [vmem:[%s251 + $0x18] sm:$0xff] %vm632, %v594
      %637 = vst.msk [vmem:[%s251 + $0x20] sm:$0xff] %vm632, %v599
      %638 = vst.msk [vmem:[%s251 + $0x28] sm:$0xff] %vm632, %v604
      %639 = vst.msk [vmem:[%s251 + $0x30] sm:$0xff] %vm632, %v609
      %640 = vst.msk [vmem:[%s251 + $0x38] sm:$0xff] %vm632, %v614
      %641 = vst.msk [vmem:[%s251 + $0x40] sm:$0xff] %vm632, %v619
      %642 = vst.msk [vmem:[%s251 + $0x48] sm:$0xff] %vm632, %v624
      %vm643 = vcmask 57344
      %644 = vst.msk [vmem:[%s251 + $0x50] sm:$0x1] %vm643, %v629
      %p645 = scmp.lt.s32.totalorder %s17, 1
      %s646 = scalar_select %p645, %s17, 1
      %s647 = smul.addr %s646, 11
      %s648 = smul.addr %s647, 8
      %s649 = scalar_lea.vmem %s6, %s648
      // Predicated region
      $region45: #{depthwise_xcorr_forward.7} parent=43 // pred_check
        %p650 = pneg %p166
      $region46: #{depthwise_xcorr_forward.7} parent=43 // pred_check_branch
        %652 = sbr.rel (%p650) target = $region48
      $region47: #{depthwise_xcorr_forward.7} parent=43 // pred_region
        _
      $region48: #{depthwise_xcorr_forward.7} parent=43 // pred_fallthru
        _
    $region44: #{depthwise_xcorr_forward.7} parent=5 // pred_fallthru
      _
    %p653 = scmp.le.s32.totalorder 2, %s12
    // Predicated region
    $region49: #{depthwise_xcorr_forward.7} parent=5 // pred_check
      %p654 = pneg %p653
    $region50: #{depthwise_xcorr_forward.7} parent=5 // pred_check_branch
      %656 = sbr.rel (%p654) target = $region52
    $region51: #{depthwise_xcorr_forward.7} parent=5 // pred_region
      %s657 = ssub.s32 %s12, 2
      // Predicated region
      $region53: #{depthwise_xcorr_forward.7} parent=51 // pred_check
        %p658 = pneg %p172
      $region54: #{depthwise_xcorr_forward.7} parent=51 // pred_check_branch
        %660 = sbr.rel (%p658) target = $region56
      $region55: #{depthwise_xcorr_forward.7} parent=51 // pred_region
        %p661 = scmp.lt.s32.totalorder %s18, 1
        %s662 = scalar_select %p661, %s18, 1
        %s663 = smul.addr %s662, 11
        %s664 = smul.addr %s663, 8
        %s665 = scalar_lea.vmem %s6, %s664
      $region56: #{depthwise_xcorr_forward.7} parent=51 // pred_fallthru
        _
    $region52: #{depthwise_xcorr_forward.7} parent=5 // pred_fallthru
      _
  $region6: #{depthwise_xcorr_forward.7} parent=0 // loop_footer
    %s16 = sadd.s32 1, %s12
  $region7: #{depthwise_xcorr_forward.7} parent=0 // loop_footer_branch
    %11 = sbr.rel target = $region3
  $region8: #{depthwise_xcorr_forward.7} parent=0 // loop_exit
    _

// kernel: depthwise_xcorr_forward.6
$region0: #{depthwise_xcorr_forward.6}
  #allocation0 [shape = 'u32[]', space=smem, size = 0x4, offset = 0x4, fixed_abs, tag = 'smem constant byte address 0x4 - core index']
  #allocation1 [shape = 'u32[144,128]{1,0:T(1,128)}', space=vmem, size = 0x12000, scoped, tag = 'internal scratch']
  #allocation2 [shape = 'f32[1,9,9,32]{3,2,1,0:T(8,128)}', space=vmem, size = 0x12000, scoped, tag = 'scratch operand']
  %s0 = inlined_call_operand.vmem [shape: f32[2,6,6,32], index: 0, kind: input, shape index: {}]
  %s1 = inlined_call_operand.vmem [shape: f32[2,14,14,32], index: 1, kind: input, shape index: {}]
  %s2 = inlined_call_operand.vmem [shape: f32[2,9,9,32], index: 2, kind: output, shape index: {}]
  %s3 = sld [smem:[#allocation0]]
  $region48: #{depthwise_xcorr_forward.6} parent=0
    _
  %s5 = ssub.s32 1, %s3
  %s6 = scalar_select 0, %s5, %s3
  loop: start=0, step=1, limit=4
  $region2: #{depthwise_xcorr_forward.6} parent=0 // loop_pre_header
    _
  $region3: #{depthwise_xcorr_forward.6} parent=0 // loop_header
    %s8 = sphi 0, %s12
    %p9 = scmp.ge.s32.totalorder %s8, 4
    %s15 = sphi 0, %s27
    %s16 = sphi 0, %s23
    %s17 = sphi 0, %s15
    %s18 = sphi 0, %s16
    %s19 = sphi 0, %s17
    %s20 = sphi 0, %s18
    %s32 = sphi 0, %s34
    %s35 = sphi 0, %s32
    %s36 = sphi 0, %s35
    %s52 = sphi 0, %s36
    %s60 = sphi 0, %s62
    %s63 = sphi 0, %s60
    %s64 = sphi 0, %s63
    %s80 = sphi 0, %s64
    %s88 = sphi 0, %s90
    %s91 = sphi 0, %s88
    %s92 = sphi 0, %s91
    %s108 = sphi 0, %s92
  $region4: #{depthwise_xcorr_forward.6} parent=0 // loop_header_branch
    %11 = sbr.rel (%p9) target = $region8
  $region5: #{depthwise_xcorr_forward.6} parent=0 // loop_body
    %s13 = ssub.s32 %s8, 1
    %s14 = ssub.s32 %s8, 2
    %s21 = sadd.s32 1, %s16
    %p22 = scmp.ge.s32.totalorder %s21, 1
    %s23 = scalar_select %p22, 0, %s21
    %s24 = sadd.s32 1, %s15
    %s25 = scalar_select %p22, %s24, %s15
    %p26 = scmp.ge.s32.totalorder %s25, 2
    %s27 = scalar_select %p26, 0, %s25
    %s28 = ssub.s32 %s15, %s27
    %s29 = ssub.s32 %s16, %s23
    %s30 = sor.u32 %s28, %s29
    %p31 = scmp.eq.s32.totalorder %s30, 0
    %s33 = sadd.s32 %s32, 1
    %s34 = scalar_select %p31, %s32, %s33
    %p37 = pneg %p31
    %p38 = scmp.eq.s32.totalorder %s8, 1
    %p39 = por %p37, %p38
    %p40 = scmp.ne.s32.totalorder %s32, %s35
    %p41 = scmp.eq.s32.totalorder %s8, 0
    %p42 = por %p40, %p41
    %p43 = scmp.ne.s32.totalorder %s32, %s35
    %p44 = scmp.eq.s32.totalorder %s13, 1
    %p45 = por %p43, %p44
    %p46 = scmp.ne.s32.totalorder %s35, %s36
    %p47 = scmp.eq.s32.totalorder %s13, 0
    %p48 = por %p46, %p47
    %p49 = scmp.ne.s32.totalorder %s35, %s36
    %p50 = scmp.eq.s32.totalorder %s14, 1
    %p51 = por %p49, %p50
    %p53 = scmp.ne.s32.totalorder %s36, %s52
    %p54 = scmp.eq.s32.totalorder %s14, 0
    %p55 = por %p53, %p54
    %s56 = ssub.s32 %s15, %s27
    %s57 = ssub.s32 %s16, %s23
    %s58 = sor.u32 %s56, %s57
    %p59 = scmp.eq.s32.totalorder %s58, 0
    %s61 = sadd.s32 %s60, 1
    %s62 = scalar_select %p59, %s60, %s61
    %p65 = pneg %p59
    %p66 = scmp.eq.s32.totalorder %s8, 1
    %p67 = por %p65, %p66
    %p68 = scmp.ne.s32.totalorder %s60, %s63
    %p69 = scmp.eq.s32.totalorder %s8, 0
    %p70 = por %p68, %p69
    %p71 = scmp.ne.s32.totalorder %s60, %s63
    %p72 = scmp.eq.s32.totalorder %s13, 1
    %p73 = por %p71, %p72
    %p74 = scmp.ne.s32.totalorder %s63, %s64
    %p75 = scmp.eq.s32.totalorder %s13, 0
    %p76 = por %p74, %p75
    %p77 = scmp.ne.s32.totalorder %s63, %s64
    %p78 = scmp.eq.s32.totalorder %s14, 1
    %p79 = por %p77, %p78
    %p81 = scmp.ne.s32.totalorder %s64, %s80
    %p82 = scmp.eq.s32.totalorder %s14, 0
    %p83 = por %p81, %p82
    %s84 = ssub.s32 %s15, %s27
    %s85 = ssub.s32 %s16, %s23
    %s86 = sor.u32 %s84, %s85
    %p87 = scmp.eq.s32.totalorder %s86, 0
    %s89 = sadd.s32 %s88, 1
    %s90 = scalar_select %p87, %s88, %s89
    %p93 = pneg %p87
    %p94 = scmp.eq.s32.totalorder %s8, 1
    %p95 = por %p93, %p94
    %p96 = scmp.ne.s32.totalorder %s88, %s91
    %p97 = scmp.eq.s32.totalorder %s8, 0
    %p98 = por %p96, %p97
    %p99 = scmp.ne.s32.totalorder %s88, %s91
    %p100 = scmp.eq.s32.totalorder %s13, 1
    %p101 = por %p99, %p100
    %p102 = scmp.ne.s32.totalorder %s91, %s92
    %p103 = scmp.eq.s32.totalorder %s13, 0
    %p104 = por %p102, %p103
    %p105 = scmp.ne.s32.totalorder %s91, %s92
    %p106 = scmp.eq.s32.totalorder %s14, 1
    %p107 = por %p105, %p106
    %p109 = scmp.ne.s32.totalorder %s92, %s108
    %p110 = scmp.eq.s32.totalorder %s14, 0
    %p111 = por %p109, %p110
    %p112 = scmp.le.s32.totalorder 1, %s8
    %p113 = scmp.lt.s32.totalorder %s8, 3
    %p114 = pnand %p112, %p113
    %p115 = pneg %p114
    // Predicated region
    $region9: #{depthwise_xcorr_forward.6} parent=5 // pred_check
      _
    $region10: #{depthwise_xcorr_forward.6} parent=5 // pred_check_branch
      %117 = sbr.rel (%p114) target = $region12
    $region11: #{depthwise_xcorr_forward.6} parent=5 // pred_region
      %s118 = ssub.s32 %s8, 1
    $region12: #{depthwise_xcorr_forward.6} parent=5 // pred_fallthru
      _
    %p119 = scmp.lt.s32.totalorder %s8, 2
    // Predicated region
    $region13: #{depthwise_xcorr_forward.6} parent=5 // pred_check
      %p120 = pneg %p119
    $region14: #{depthwise_xcorr_forward.6} parent=5 // pred_check_branch
      %122 = sbr.rel (%p120) target = $region16
    $region15: #{depthwise_xcorr_forward.6} parent=5 // pred_region
      // Predicated region
      $region17: #{depthwise_xcorr_forward.6} parent=15 // pred_check
        %p123 = pneg %p42
      $region18: #{depthwise_xcorr_forward.6} parent=15 // pred_check_branch
        %125 = sbr.rel (%p123) target = $region20
      $region19: #{depthwise_xcorr_forward.6} parent=15 // pred_region
        %p126 = scmp.lt.s32.totalorder %s15, 1
        %s127 = scalar_select %p126, %s15, 1
        %p128 = scmp.lt.s32.totalorder %s16, 0
        %s129 = scalar_select %p128, %s16, 0
        %s130 = smul.addr %s127, 6
        %s131 = sadd.s32 %s129, %s130
        %s132 = smul.addr %s131, 8
        %s133 = scalar_lea.vmem %s0, %s132
      $region20: #{depthwise_xcorr_forward.6} parent=15 // pred_fallthru
        _
      // Predicated region
      $region21: #{depthwise_xcorr_forward.6} parent=15 // pred_check
        %p134 = pneg %p70
      $region22: #{depthwise_xcorr_forward.6} parent=15 // pred_check_branch
        %136 = sbr.rel (%p134) target = $region24
      $region23: #{depthwise_xcorr_forward.6} parent=15 // pred_region
        %p137 = scmp.lt.s32.totalorder %s15, 1
        %s138 = scalar_select %p137, %s15, 1
        %p139 = scmp.lt.s32.totalorder %s16, 0
        %s140 = scalar_select %p139, %s16, 0
        %s141 = smul.addr %s138, 28
        %s142 = sadd.s32 %s140, %s141
        %s143 = smul.addr %s142, 8
        %s144 = scalar_lea.vmem %s1, %s143
      $region24: #{depthwise_xcorr_forward.6} parent=15 // pred_fallthru
        _
    $region16: #{depthwise_xcorr_forward.6} parent=5 // pred_fallthru
      _
    %p145 = scmp.le.s32.totalorder 1, %s8
    %p146 = scmp.lt.s32.totalorder %s8, 3
    %p147 = pnand %p145, %p146
    %p148 = pneg %p147
    // Predicated region
    $region25: #{depthwise_xcorr_forward.6} parent=5 // pred_check
      _
    $region26: #{depthwise_xcorr_forward.6} parent=5 // pred_check_branch
      %150 = sbr.rel (%p147) target = $region28
    $region27: #{depthwise_xcorr_forward.6} parent=5 // pred_region
      %s151 = ssub.s32 %s8, 1
      %p152 = scmp.lt.s32.totalorder %s17, 1
      %s153 = scalar_select %p152, %s17, 1
      %p154 = scmp.lt.s32.totalorder %s18, 0
      %s155 = scalar_select %p154, %s18, 0
      %s156 = smul.addr %s153, 6
      %s157 = sadd.s32 %s155, %s156
      %s158 = smul.addr %s157, 8
      %s159 = scalar_lea.vmem %s0, %s158
      %p160 = pneg %p48
      %p161 = pneg %p45
      %p162 = scmp.lt.s32.totalorder %s17, 1
      %s163 = scalar_select %p162, %s17, 1
      %p164 = scmp.lt.s32.totalorder %s18, 0
      %s165 = scalar_select %p164, %s18, 0
      %s166 = smul.addr %s163, 28
      %s167 = sadd.s32 %s165, %s166
      %s168 = smul.addr %s167, 8
      %s169 = scalar_lea.vmem %s1, %s168
      %p170 = pneg %p76
      %p171 = pneg %p73
      %p172 = pneg %p104
      %p173 = pneg %p101
      %p174 = scmp.lt.s32.totalorder %s17, 1
      %s175 = scalar_select %p174, %s17, 1
      %p176 = scmp.lt.s32.totalorder %s18, 0
      %s177 = scalar_select %p176, %s18, 0
      %s178 = smul.addr %s175, 18
      %s179 = sadd.s32 %s177, %s178
      %s180 = smul.addr %s179, 8
      %s181 = scalar_lea.vmem %s2, %s180
      %p182 = scmp.lt.s32.totalorder %s17, 1
      %s183 = scalar_select %p182, %s17, 1
      %p184 = scmp.lt.s32.totalorder %s18, 0
      %s185 = scalar_select %p184, %s18, 0
      %s186 = smul.addr %s183, 6
      %s187 = sadd.s32 %s185, %s186
      %s188 = smul.addr %s187, 8
      %s189 = scalar_lea.vmem %s0, %s188
      %p190 = scmp.lt.s32.totalorder %s17, 1
      %s191 = scalar_select %p190, %s17, 1
      %p192 = scmp.lt.s32.totalorder %s18, 0
      %s193 = scalar_select %p192, %s18, 0
      %s194 = smul.addr %s191, 28
      %s195 = sadd.s32 %s193, %s194
      %s196 = smul.addr %s195, 8
      %s197 = scalar_lea.vmem %s1, %s196
      %p198 = scmp.lt.s32.totalorder %s17, 1
      %s199 = scalar_select %p198, %s17, 1
      %p200 = scmp.lt.s32.totalorder %s18, 0
      %s201 = scalar_select %p200, %s18, 0
      %s202 = smul.addr %s199, 18
      %s203 = sadd.s32 %s201, %s202
      %s204 = smul.addr %s203, 8
      %s205 = scalar_lea.vmem %s2, %s204
      %vm206 = vcmask 261120
      %207 = vst.msk [vmem:[#allocation2] sm:$0xff] %vm206, 0.0
      %vm208 = vcmask 253952
      %209 = vst.msk [vmem:[#allocation2 + $0x8] sm:$0x1] %vm208, 0.0
      %210 = vst.msk [vmem:[#allocation2 + $0x10] sm:$0xff] %vm206, 0.0
      %211 = vst.msk [vmem:[#allocation2 + $0x18] sm:$0x1] %vm208, 0.0
      %212 = vst.msk [vmem:[#allocation2 + $0x20] sm:$0xff] %vm206, 0.0
      %213 = vst.msk [vmem:[#allocation2 + $0x28] sm:$0x1] %vm208, 0.0
      %214 = vst.msk [vmem:[#allocation2 + $0x30] sm:$0xff] %vm206, 0.0
      %215 = vst.msk [vmem:[#allocation2 + $0x38] sm:$0x1] %vm208, 0.0
      %216 = vst.msk [vmem:[#allocation2 + $0x40] sm:$0xff] %vm206, 0.0
      %217 = vst.msk [vmem:[#allocation2 + $0x48] sm:$0x1] %vm208, 0.0
      %218 = vst.msk [vmem:[#allocation2 + $0x50] sm:$0xff] %vm206, 0.0
      %219 = vst.msk [vmem:[#allocation2 + $0x58] sm:$0x1] %vm208, 0.0
      %220 = vst.msk [vmem:[#allocation2 + $0x60] sm:$0xff] %vm206, 0.0
      %221 = vst.msk [vmem:[#allocation2 + $0x68] sm:$0x1] %vm208, 0.0
      %222 = vst.msk [vmem:[#allocation2 + $0x70] sm:$0xff] %vm206, 0.0
      %223 = vst.msk [vmem:[#allocation2 + $0x78] sm:$0x1] %vm208, 0.0
      %224 = vst.msk [vmem:[#allocation2 + $0x80] sm:$0xff] %vm206, 0.0
      %225 = vst.msk [vmem:[#allocation2 + $0x88] sm:$0x1] %vm208, 0.0
      loop: start=0, step=1, limit=6
      $region29: #{depthwise_xcorr_forward.6} parent=27 // loop_pre_header
        _
      $region30: #{depthwise_xcorr_forward.6} parent=27 // loop_header
        %s227 = sphi 0, %s231
        %p228 = scmp.ge.s32.totalorder %s227, 6
      $region31: #{depthwise_xcorr_forward.6} parent=27 // loop_header_branch
        %230 = sbr.rel (%p228) target = $region35
      $region32: #{depthwise_xcorr_forward.6} parent=27 // loop_body
        %s232 = smul.u32 %s227, 16
        %s233 = scalar_lea.vmem %s197, %s232
        %v234 = vld [vmem:[%s233] sm:$0xff]
        %v235 = vld [vmem:[%s233 + $0x8] sm:$0x1]
        %v236 = vld [vmem:[%s233 + $0x10] sm:$0xff]
        %v237 = vld [vmem:[%s233 + $0x18] sm:$0x1]
        %v238 = vld [vmem:[%s233 + $0x20] sm:$0xff]
        %v239 = vld [vmem:[%s233 + $0x28] sm:$0x1]
        %v240 = vld [vmem:[%s233 + $0x30] sm:$0xff]
        %v241 = vld [vmem:[%s233 + $0x38] sm:$0x1]
        %v242 = vld [vmem:[%s233 + $0x40] sm:$0xff]
        %v243 = vld [vmem:[%s233 + $0x48] sm:$0x1]
        %v244 = vld [vmem:[%s233 + $0x50] sm:$0xff]
        %v245 = vld [vmem:[%s233 + $0x58] sm:$0x1]
        %v246 = vld [vmem:[%s233 + $0x60] sm:$0xff]
        %v247 = vld [vmem:[%s233 + $0x68] sm:$0x1]
        %v248 = vld [vmem:[%s233 + $0x70] sm:$0xff]
        %v249 = vld [vmem:[%s233 + $0x78] sm:$0x1]
        %v250 = vld [vmem:[%s233 + $0x80] sm:$0xff]
        %v251 = vld [vmem:[%s233 + $0x88] sm:$0x1]
        %s252 = smul.u32 %s227, 8
        %s253 = scalar_lea.vmem %s189, %s252
        %v254 = vld [vmem:[%s253] sm:$0x1]
        %v255 = vld [vmem:[#allocation2] sm:$0xff]
        %v256 = vld [vmem:[#allocation2 + $0x8] sm:$0x1]
        %v257 = vld [vmem:[#allocation2 + $0x10] sm:$0xff]
        %v258 = vld [vmem:[#allocation2 + $0x18] sm:$0x1]
        %v259 = vld [vmem:[#allocation2 + $0x20] sm:$0xff]
        %v260 = vld [vmem:[#allocation2 + $0x28] sm:$0x1]
        %v261 = vld [vmem:[#allocation2 + $0x30] sm:$0xff]
        %v262 = vld [vmem:[#allocation2 + $0x38] sm:$0x1]
        %v263 = vld [vmem:[#allocation2 + $0x40] sm:$0xff]
        %v264 = vld [vmem:[#allocation2 + $0x48] sm:$0x1]
        %v265 = vld [vmem:[#allocation2 + $0x50] sm:$0xff]
        %v266 = vld [vmem:[#allocation2 + $0x58] sm:$0x1]
        %v267 = vld [vmem:[#allocation2 + $0x60] sm:$0xff]
        %v268 = vld [vmem:[#allocation2 + $0x68] sm:$0x1]
        %v269 = vld [vmem:[#allocation2 + $0x70] sm:$0xff]
        %v270 = vld [vmem:[#allocation2 + $0x78] sm:$0x1]
        %v271 = vld [vmem:[#allocation2 + $0x80] sm:$0xff]
        %v272 = vld [vmem:[#allocation2 + $0x88] sm:$0x1]
        %v273 = vlaneseq
        %v274 = vshrl.u32 %v273, 7
        %v275 = vsub.s32 0, %v274
        %v276 = vrot.slane %v254, %v275
        %v277 = vmul.f32 %v234, %v276
        %v278 = vmul.f32 %v235, %v276
        %v279 = vmul.f32 %v236, %v276
        %v280 = vmul.f32 %v237, %v276
        %v281 = vmul.f32 %v238, %v276
        %v282 = vmul.f32 %v239, %v276
        %v283 = vmul.f32 %v240, %v276
        %v284 = vmul.f32 %v241, %v276
        %v285 = vmul.f32 %v242, %v276
        %v286 = vmul.f32 %v243, %v276
        %v287 = vmul.f32 %v244, %v276
        %v288 = vmul.f32 %v245, %v276
        %v289 = vmul.f32 %v246, %v276
        %v290 = vmul.f32 %v247, %v276
        %v291 = vmul.f32 %v248, %v276
        %v292 = vmul.f32 %v249, %v276
        %v293 = vmul.f32 %v250, %v276
        %v294 = vmul.f32 %v251, %v276
        %v295 = vadd.f32 %v255, %v277
        %v296 = vadd.f32 %v256, %v278
        %v297 = vadd.f32 %v257, %v279
        %v298 = vadd.f32 %v258, %v280
        %v299 = vadd.f32 %v259, %v281
        %v300 = vadd.f32 %v260, %v282
        %v301 = vadd.f32 %v261, %v283
        %v302 = vadd.f32 %v262, %v284
        %v303 = vadd.f32 %v263, %v285
        %v304 = vadd.f32 %v264, %v286
        %v305 = vadd.f32 %v265, %v287
        %v306 = vadd.f32 %v266, %v288
        %v307 = vadd.f32 %v267, %v289
        %v308 = vadd.f32 %v268, %v290
        %v309 = vadd.f32 %v269, %v291
        %v310 = vadd.f32 %v270, %v292
        %v311 = vadd.f32 %v271, %v293
        %v312 = vadd.f32 %v272, %v294
        %313 = vst.msk [vmem:[#allocation2] sm:$0xff] %vm206, %v295
        %314 = vst.msk [vmem:[#allocation2 + $0x8] sm:$0x1] %vm208, %v296
        %315 = vst.msk [vmem:[#allocation2 + $0x10] sm:$0xff] %vm206, %v297
        %316 = vst.msk [vmem:[#allocation2 + $0x18] sm:$0x1] %vm208, %v298
        %317 = vst.msk [vmem:[#allocation2 + $0x20] sm:$0xff] %vm206, %v299
        %318 = vst.msk [vmem:[#allocation2 + $0x28] sm:$0x1] %vm208, %v300
        %319 = vst.msk [vmem:[#allocation2 + $0x30] sm:$0xff] %vm206, %v301
        %320 = vst.msk [vmem:[#allocation2 + $0x38] sm:$0x1] %vm208, %v302
        %321 = vst.msk [vmem:[#allocation2 + $0x40] sm:$0xff] %vm206, %v303
        %322 = vst.msk [vmem:[#allocation2 + $0x48] sm:$0x1] %vm208, %v304
        %323 = vst.msk [vmem:[#allocation2 + $0x50] sm:$0xff] %vm206, %v305
        %324 = vst.msk [vmem:[#allocation2 + $0x58] sm:$0x1] %vm208, %v306
        %325 = vst.msk [vmem:[#allocation2 + $0x60] sm:$0xff] %vm206, %v307
        %326 = vst.msk [vmem:[#allocation2 + $0x68] sm:$0x1] %vm208, %v308
        %327 = vst.msk [vmem:[#allocation2 + $0x70] sm:$0xff] %vm206, %v309
        %328 = vst.msk [vmem:[#allocation2 + $0x78] sm:$0x1] %vm208, %v310
        %329 = vst.msk [vmem:[#allocation2 + $0x80] sm:$0xff] %vm206, %v311
        %330 = vst.msk [vmem:[#allocation2 + $0x88] sm:$0x1] %vm208, %v312
        %v331 = vld [vmem:[%s233 + $0x1] sm:$0xff]
        %v332 = vld [vmem:[%s233 + $0x9] sm:$0x1]
        %v333 = vld [vmem:[%s233 + $0x11] sm:$0xff]
        %v334 = vld [vmem:[%s233 + $0x19] sm:$0x1]
        %v335 = vld [vmem:[%s233 + $0x21] sm:$0xff]
        %v336 = vld [vmem:[%s233 + $0x29] sm:$0x1]
        %v337 = vld [vmem:[%s233 + $0x31] sm:$0xff]
        %v338 = vld [vmem:[%s233 + $0x39] sm:$0x1]
        %v339 = vld [vmem:[%s233 + $0x41] sm:$0xff]
        %v340 = vld [vmem:[%s233 + $0x49] sm:$0x1]
        %v341 = vld [vmem:[%s233 + $0x51] sm:$0xff]
        %v342 = vld [vmem:[%s233 + $0x59] sm:$0x1]
        %v343 = vld [vmem:[%s233 + $0x61] sm:$0xff]
        %v344 = vld [vmem:[%s233 + $0x69] sm:$0x1]
        %v345 = vld [vmem:[%s233 + $0x71] sm:$0xff]
        %v346 = vld [vmem:[%s233 + $0x79] sm:$0x1]
        %v347 = vld [vmem:[%s233 + $0x81] sm:$0xff]
        %v348 = vld [vmem:[%s233 + $0x89] sm:$0x1]
        %v349 = vld [vmem:[%s253 + $0x1] sm:$0x1]
        %v350 = vld [vmem:[#allocation2] sm:$0xff]
        %v351 = vld [vmem:[#allocation2 + $0x8] sm:$0x1]
        %v352 = vld [vmem:[#allocation2 + $0x10] sm:$0xff]
        %v353 = vld [vmem:[#allocation2 + $0x18] sm:$0x1]
        %v354 = vld [vmem:[#allocation2 + $0x20] sm:$0xff]
        %v355 = vld [vmem:[#allocation2 + $0x28] sm:$0x1]
        %v356 = vld [vmem:[#allocation2 + $0x30] sm:$0xff]
        %v357 = vld [vmem:[#allocation2 + $0x38] sm:$0x1]
        %v358 = vld [vmem:[#allocation2 + $0x40] sm:$0xff]
        %v359 = vld [vmem:[#allocation2 + $0x48] sm:$0x1]
        %v360 = vld [vmem:[#allocation2 + $0x50] sm:$0xff]
        %v361 = vld [vmem:[#allocation2 + $0x58] sm:$0x1]
        %v362 = vld [vmem:[#allocation2 + $0x60] sm:$0xff]
        %v363 = vld [vmem:[#allocation2 + $0x68] sm:$0x1]
        %v364 = vld [vmem:[#allocation2 + $0x70] sm:$0xff]
        %v365 = vld [vmem:[#allocation2 + $0x78] sm:$0x1]
        %v366 = vld [vmem:[#allocation2 + $0x80] sm:$0xff]
        %v367 = vld [vmem:[#allocation2 + $0x88] sm:$0x1]
        %v368 = vlaneseq
        %v369 = vshrl.u32 %v368, 7
        %v370 = vsub.s32 0, %v369
        %v371 = vrot.slane %v349, %v370
        %v372 = vmul.f32 %v331, %v371
        %v373 = vmul.f32 %v332, %v371
        %v374 = vmul.f32 %v333, %v371
        %v375 = vmul.f32 %v334, %v371
        %v376 = vmul.f32 %v335, %v371
        %v377 = vmul.f32 %v336, %v371
        %v378 = vmul.f32 %v337, %v371
        %v379 = vmul.f32 %v338, %v371
        %v380 = vmul.f32 %v339, %v371
        %v381 = vmul.f32 %v340, %v371
        %v382 = vmul.f32 %v341, %v371
        %v383 = vmul.f32 %v342, %v371
        %v384 = vmul.f32 %v343, %v371
        %v385 = vmul.f32 %v344, %v371
        %v386 = vmul.f32 %v345, %v371
        %v387 = vmul.f32 %v346, %v371
        %v388 = vmul.f32 %v347, %v371
        %v389 = vmul.f32 %v348, %v371
        %v390 = vadd.f32 %v350, %v372
        %v391 = vadd.f32 %v351, %v373
        %v392 = vadd.f32 %v352, %v374
        %v393 = vadd.f32 %v353, %v375
        %v394 = vadd.f32 %v354, %v376
        %v395 = vadd.f32 %v355, %v377
        %v396 = vadd.f32 %v356, %v378
        %v397 = vadd.f32 %v357, %v379
        %v398 = vadd.f32 %v358, %v380
        %v399 = vadd.f32 %v359, %v381
        %v400 = vadd.f32 %v360, %v382
        %v401 = vadd.f32 %v361, %v383
        %v402 = vadd.f32 %v362, %v384
        %v403 = vadd.f32 %v363, %v385
        %v404 = vadd.f32 %v364, %v386
        %v405 = vadd.f32 %v365, %v387
        %v406 = vadd.f32 %v366, %v388
        %v407 = vadd.f32 %v367, %v389
        %408 = vst.msk [vmem:[#allocation2] sm:$0xff] %vm206, %v390
        %409 = vst.msk [vmem:[#allocation2 + $0x8] sm:$0x1] %vm208, %v391
        %410 = vst.msk [vmem:[#allocation2 + $0x10] sm:$0xff] %vm206, %v392
        %411 = vst.msk [vmem:[#allocation2 + $0x18] sm:$0x1] %vm208, %v393
        %412 = vst.msk [vmem:[#allocation2 + $0x20] sm:$0xff] %vm206, %v394
        %413 = vst.msk [vmem:[#allocation2 + $0x28] sm:$0x1] %vm208, %v395
        %414 = vst.msk [vmem:[#allocation2 + $0x30] sm:$0xff] %vm206, %v396
        %415 = vst.msk [vmem:[#allocation2 + $0x38] sm:$0x1] %vm208, %v397
        %416 = vst.msk [vmem:[#allocation2 + $0x40] sm:$0xff] %vm206, %v398
        %417 = vst.msk [vmem:[#allocation2 + $0x48] sm:$0x1] %vm208, %v399
        %418 = vst.msk [vmem:[#allocation2 + $0x50] sm:$0xff] %vm206, %v400
        %419 = vst.msk [vmem:[#allocation2 + $0x58] sm:$0x1] %vm208, %v401
        %420 = vst.msk [vmem:[#allocation2 + $0x60] sm:$0xff] %vm206, %v402
        %421 = vst.msk [vmem:[#allocation2 + $0x68] sm:$0x1] %vm208, %v403
        %422 = vst.msk [vmem:[#allocation2 + $0x70] sm:$0xff] %vm206, %v404
        %423 = vst.msk [vmem:[#allocation2 + $0x78] sm:$0x1] %vm208, %v405
        %424 = vst.msk [vmem:[#allocation2 + $0x80] sm:$0xff] %vm206, %v406
        %425 = vst.msk [vmem:[#allocation2 + $0x88] sm:$0x1] %vm208, %v407
        %v426 = vld [vmem:[%s233 + $0x2] sm:$0xff]
        %v427 = vld [vmem:[%s233 + $0xa] sm:$0x1]
        %v428 = vld [vmem:[%s233 + $0x12] sm:$0xff]
        %v429 = vld [vmem:[%s233 + $0x1a] sm:$0x1]
        %v430 = vld [vmem:[%s233 + $0x22] sm:$0xff]
        %v431 = vld [vmem:[%s233 + $0x2a] sm:$0x1]
        %v432 = vld [vmem:[%s233 + $0x32] sm:$0xff]
        %v433 = vld [vmem:[%s233 + $0x3a] sm:$0x1]
        %v434 = vld [vmem:[%s233 + $0x42] sm:$0xff]
        %v435 = vld [vmem:[%s233 + $0x4a] sm:$0x1]
        %v436 = vld [vmem:[%s233 + $0x52] sm:$0xff]
        %v437 = vld [vmem:[%s233 + $0x5a] sm:$0x1]
        %v438 = vld [vmem:[%s233 + $0x62] sm:$0xff]
        %v439 = vld [vmem:[%s233 + $0x6a] sm:$0x1]
        %v440 = vld [vmem:[%s233 + $0x72] sm:$0xff]
        %v441 = vld [vmem:[%s233 + $0x7a] sm:$0x1]
        %v442 = vld [vmem:[%s233 + $0x82] sm:$0xff]
        %v443 = vld [vmem:[%s233 + $0x8a] sm:$0x1]
        %v444 = vld [vmem:[%s253 + $0x2] sm:$0x1]
        %v445 = vld [vmem:[#allocation2] sm:$0xff]
        %v446 = vld [vmem:[#allocation2 + $0x8] sm:$0x1]
        %v447 = vld [vmem:[#allocation2 + $0x10] sm:$0xff]
        %v448 = vld [vmem:[#allocation2 + $0x18] sm:$0x1]
        %v449 = vld [vmem:[#allocation2 + $0x20] sm:$0xff]
        %v450 = vld [vmem:[#allocation2 + $0x28] sm:$0x1]
        %v451 = vld [vmem:[#allocation2 + $0x30] sm:$0xff]
        %v452 = vld [vmem:[#allocation2 + $0x38] sm:$0x1]
        %v453 = vld [vmem:[#allocation2 + $0x40] sm:$0xff]
        %v454 = vld [vmem:[#allocation2 + $0x48] sm:$0x1]
        %v455 = vld [vmem:[#allocation2 + $0x50] sm:$0xff]
        %v456 = vld [vmem:[#allocation2 + $0x58] sm:$0x1]
        %v457 = vld [vmem:[#allocation2 + $0x60] sm:$0xff]
        %v458 = vld [vmem:[#allocation2 + $0x68] sm:$0x1]
        %v459 = vld [vmem:[#allocation2 + $0x70] sm:$0xff]
        %v460 = vld [vmem:[#allocation2 + $0x78] sm:$0x1]
        %v461 = vld [vmem:[#allocation2 + $0x80] sm:$0xff]
        %v462 = vld [vmem:[#allocation2 + $0x88] sm:$0x1]
        %v463 = vlaneseq
        %v464 = vshrl.u32 %v463, 7
        %v465 = vsub.s32 0, %v464
        %v466 = vrot.slane %v444, %v465
        %v467 = vmul.f32 %v426, %v466
        %v468 = vmul.f32 %v427, %v466
        %v469 = vmul.f32 %v428, %v466
        %v470 = vmul.f32 %v429, %v466
        %v471 = vmul.f32 %v430, %v466
        %v472 = vmul.f32 %v431, %v466
        %v473 = vmul.f32 %v432, %v466
        %v474 = vmul.f32 %v433, %v466
        %v475 = vmul.f32 %v434, %v466
        %v476 = vmul.f32 %v435, %v466
        %v477 = vmul.f32 %v436, %v466
        %v478 = vmul.f32 %v437, %v466
        %v479 = vmul.f32 %v438, %v466
        %v480 = vmul.f32 %v439, %v466
        %v481 = vmul.f32 %v440, %v466
        %v482 = vmul.f32 %v441, %v466
        %v483 = vmul.f32 %v442, %v466
        %v484 = vmul.f32 %v443, %v466
        %v485 = vadd.f32 %v445, %v467
        %v486 = vadd.f32 %v446, %v468
        %v487 = vadd.f32 %v447, %v469
        %v488 = vadd.f32 %v448, %v470
        %v489 = vadd.f32 %v449, %v471
        %v490 = vadd.f32 %v450, %v472
        %v491 = vadd.f32 %v451, %v473
        %v492 = vadd.f32 %v452, %v474
        %v493 = vadd.f32 %v453, %v475
        %v494 = vadd.f32 %v454, %v476
        %v495 = vadd.f32 %v455, %v477
        %v496 = vadd.f32 %v456, %v478
        %v497 = vadd.f32 %v457, %v479
        %v498 = vadd.f32 %v458, %v480
        %v499 = vadd.f32 %v459, %v481
        %v500 = vadd.f32 %v460, %v482
        %v501 = vadd.f32 %v461, %v483
        %v502 = vadd.f32 %v462, %v484
        %503 = vst.msk [vmem:[#allocation2] sm:$0xff] %vm206, %v485
        %504 = vst.msk [vmem:[#allocation2 + $0x8] sm:$0x1] %vm208, %v486
        %505 = vst.msk [vmem:[#allocation2 + $0x10] sm:$0xff] %vm206, %v487
        %506 = vst.msk [vmem:[#allocation2 + $0x18] sm:$0x1] %vm208, %v488
        %507 = vst.msk [vmem:[#allocation2 + $0x20] sm:$0xff] %vm206, %v489
        %508 = vst.msk [vmem:[#allocation2 + $0x28] sm:$0x1] %vm208, %v490
        %509 = vst.msk [vmem:[#allocation2 + $0x30] sm:$0xff] %vm206, %v491
        %510 = vst.msk [vmem:[#allocation2 + $0x38] sm:$0x1] %vm208, %v492
        %511 = vst.msk [vmem:[#allocation2 + $0x40] sm:$0xff] %vm206, %v493
        %512 = vst.msk [vmem:[#allocation2 + $0x48] sm:$0x1] %vm208, %v494
        %513 = vst.msk [vmem:[#allocation2 + $0x50] sm:$0xff] %vm206, %v495
        %514 = vst.msk [vmem:[#allocation2 + $0x58] sm:$0x1] %vm208, %v496
        %515 = vst.msk [vmem:[#allocation2 + $0x60] sm:$0xff] %vm206, %v497
        %516 = vst.msk [vmem:[#allocation2 + $0x68] sm:$0x1] %vm208, %v498
        %517 = vst.msk [vmem:[#allocation2 + $0x70] sm:$0xff] %vm206, %v499
        %518 = vst.msk [vmem:[#allocation2 + $0x78] sm:$0x1] %vm208, %v500
        %519 = vst.msk [vmem:[#allocation2 + $0x80] sm:$0xff] %vm206, %v501
        %520 = vst.msk [vmem:[#allocation2 + $0x88] sm:$0x1] %vm208, %v502
        %v521 = vld [vmem:[%s233 + $0x3] sm:$0xff]
        %v522 = vld [vmem:[%s233 + $0xb] sm:$0x1]
        %v523 = vld [vmem:[%s233 + $0x13] sm:$0xff]
        %v524 = vld [vmem:[%s233 + $0x1b] sm:$0x1]
        %v525 = vld [vmem:[%s233 + $0x23] sm:$0xff]
        %v526 = vld [vmem:[%s233 + $0x2b] sm:$0x1]
        %v527 = vld [vmem:[%s233 + $0x33] sm:$0xff]
        %v528 = vld [vmem:[%s233 + $0x3b] sm:$0x1]
        %v529 = vld [vmem:[%s233 + $0x43] sm:$0xff]
        %v530 = vld [vmem:[%s233 + $0x4b] sm:$0x1]
        %v531 = vld [vmem:[%s233 + $0x53] sm:$0xff]
        %v532 = vld [vmem:[%s233 + $0x5b] sm:$0x1]
        %v533 = vld [vmem:[%s233 + $0x63] sm:$0xff]
        %v534 = vld [vmem:[%s233 + $0x6b] sm:$0x1]
        %v535 = vld [vmem:[%s233 + $0x73] sm:$0xff]
        %v536 = vld [vmem:[%s233 + $0x7b] sm:$0x1]
        %v537 = vld [vmem:[%s233 + $0x83] sm:$0xff]
        %v538 = vld [vmem:[%s233 + $0x8b] sm:$0x1]
        %v539 = vld [vmem:[%s253 + $0x3] sm:$0x1]
        %v540 = vld [vmem:[#allocation2] sm:$0xff]
        %v541 = vld [vmem:[#allocation2 + $0x8] sm:$0x1]
        %v542 = vld [vmem:[#allocation2 + $0x10] sm:$0xff]
        %v543 = vld [vmem:[#allocation2 + $0x18] sm:$0x1]
        %v544 = vld [vmem:[#allocation2 + $0x20] sm:$0xff]
        %v545 = vld [vmem:[#allocation2 + $0x28] sm:$0x1]
        %v546 = vld [vmem:[#allocation2 + $0x30] sm:$0xff]
        %v547 = vld [vmem:[#allocation2 + $0x38] sm:$0x1]
        %v548 = vld [vmem:[#allocation2 + $0x40] sm:$0xff]
        %v549 = vld [vmem:[#allocation2 + $0x48] sm:$0x1]
        %v550 = vld [vmem:[#allocation2 + $0x50] sm:$0xff]
        %v551 = vld [vmem:[#allocation2 + $0x58] sm:$0x1]
        %v552 = vld [vmem:[#allocation2 + $0x60] sm:$0xff]
        %v553 = vld [vmem:[#allocation2 + $0x68] sm:$0x1]
        %v554 = vld [vmem:[#allocation2 + $0x70] sm:$0xff]
        %v555 = vld [vmem:[#allocation2 + $0x78] sm:$0x1]
        %v556 = vld [vmem:[#allocation2 + $0x80] sm:$0xff]
        %v557 = vld [vmem:[#allocation2 + $0x88] sm:$0x1]
        %v558 = vlaneseq
        %v559 = vshrl.u32 %v558, 7
        %v560 = vsub.s32 0, %v559
        %v561 = vrot.slane %v539, %v560
        %v562 = vmul.f32 %v521, %v561
        %v563 = vmul.f32 %v522, %v561
        %v564 = vmul.f32 %v523, %v561
        %v565 = vmul.f32 %v524, %v561
        %v566 = vmul.f32 %v525, %v561
        %v567 = vmul.f32 %v526, %v561
        %v568 = vmul.f32 %v527, %v561
        %v569 = vmul.f32 %v528, %v561
        %v570 = vmul.f32 %v529, %v561
        %v571 = vmul.f32 %v530, %v561
        %v572 = vmul.f32 %v531, %v561
        %v573 = vmul.f32 %v532, %v561
        %v574 = vmul.f32 %v533, %v561
        %v575 = vmul.f32 %v534, %v561
        %v576 = vmul.f32 %v535, %v561
        %v577 = vmul.f32 %v536, %v561
        %v578 = vmul.f32 %v537, %v561
        %v579 = vmul.f32 %v538, %v561
        %v580 = vadd.f32 %v540, %v562
        %v581 = vadd.f32 %v541, %v563
        %v582 = vadd.f32 %v542, %v564
        %v583 = vadd.f32 %v543, %v565
        %v584 = vadd.f32 %v544, %v566
        %v585 = vadd.f32 %v545, %v567
        %v586 = vadd.f32 %v546, %v568
        %v587 = vadd.f32 %v547, %v569
        %v588 = vadd.f32 %v548, %v570
        %v589 = vadd.f32 %v549, %v571
        %v590 = vadd.f32 %v550, %v572
        %v591 = vadd.f32 %v551, %v573
        %v592 = vadd.f32 %v552, %v574
        %v593 = vadd.f32 %v553, %v575
        %v594 = vadd.f32 %v554, %v576
        %v595 = vadd.f32 %v555, %v577
        %v596 = vadd.f32 %v556, %v578
        %v597 = vadd.f32 %v557, %v579
        %598 = vst.msk [vmem:[#allocation2] sm:$0xff] %vm206, %v580
        %599 = vst.msk [vmem:[#allocation2 + $0x8] sm:$0x1] %vm208, %v581
        %600 = vst.msk [vmem:[#allocation2 + $0x10] sm:$0xff] %vm206, %v582
        %601 = vst.msk [vmem:[#allocation2 + $0x18] sm:$0x1] %vm208, %v583
        %602 = vst.msk [vmem:[#allocation2 + $0x20] sm:$0xff] %vm206, %v584
        %603 = vst.msk [vmem:[#allocation2 + $0x28] sm:$0x1] %vm208, %v585
        %604 = vst.msk [vmem:[#allocation2 + $0x30] sm:$0xff] %vm206, %v586
        %605 = vst.msk [vmem:[#allocation2 + $0x38] sm:$0x1] %vm208, %v587
        %606 = vst.msk [vmem:[#allocation2 + $0x40] sm:$0xff] %vm206, %v588
        %607 = vst.msk [vmem:[#allocation2 + $0x48] sm:$0x1] %vm208, %v589
        %608 = vst.msk [vmem:[#allocation2 + $0x50] sm:$0xff] %vm206, %v590
        %609 = vst.msk [vmem:[#allocation2 + $0x58] sm:$0x1] %vm208, %v591
        %610 = vst.msk [vmem:[#allocation2 + $0x60] sm:$0xff] %vm206, %v592
        %611 = vst.msk [vmem:[#allocation2 + $0x68] sm:$0x1] %vm208, %v593
        %612 = vst.msk [vmem:[#allocation2 + $0x70] sm:$0xff] %vm206, %v594
        %613 = vst.msk [vmem:[#allocation2 + $0x78] sm:$0x1] %vm208, %v595
        %614 = vst.msk [vmem:[#allocation2 + $0x80] sm:$0xff] %vm206, %v596
        %615 = vst.msk [vmem:[#allocation2 + $0x88] sm:$0x1] %vm208, %v597
        %v616 = vld [vmem:[%s233 + $0x4] sm:$0xff]
        %v617 = vld [vmem:[%s233 + $0xc] sm:$0x1]
        %v618 = vld [vmem:[%s233 + $0x14] sm:$0xff]
        %v619 = vld [vmem:[%s233 + $0x1c] sm:$0x1]
        %v620 = vld [vmem:[%s233 + $0x24] sm:$0xff]
        %v621 = vld [vmem:[%s233 + $0x2c] sm:$0x1]
        %v622 = vld [vmem:[%s233 + $0x34] sm:$0xff]
        %v623 = vld [vmem:[%s233 + $0x3c] sm:$0x1]
        %v624 = vld [vmem:[%s233 + $0x44] sm:$0xff]
        %v625 = vld [vmem:[%s233 + $0x4c] sm:$0x1]
        %v626 = vld [vmem:[%s233 + $0x54] sm:$0xff]
        %v627 = vld [vmem:[%s233 + $0x5c] sm:$0x1]
        %v628 = vld [vmem:[%s233 + $0x64] sm:$0xff]
        %v629 = vld [vmem:[%s233 + $0x6c] sm:$0x1]
        %v630 = vld [vmem:[%s233 + $0x74] sm:$0xff]
        %v631 = vld [vmem:[%s233 + $0x7c] sm:$0x1]
        %v632 = vld [vmem:[%s233 + $0x84] sm:$0xff]
        %v633 = vld [vmem:[%s233 + $0x8c] sm:$0x1]
        %v634 = vld [vmem:[%s253 + $0x4] sm:$0x1]
        %v635 = vld [vmem:[#allocation2] sm:$0xff]
        %v636 = vld [vmem:[#allocation2 + $0x8] sm:$0x1]
        %v637 = vld [vmem:[#allocation2 + $0x10] sm:$0xff]
        %v638 = vld [vmem:[#allocation2 + $0x18] sm:$0x1]
        %v639 = vld [vmem:[#allocation2 + $0x20] sm:$0xff]
        %v640 = vld [vmem:[#allocation2 + $0x28] sm:$0x1]
        %v641 = vld [vmem:[#allocation2 + $0x30] sm:$0xff]
        %v642 = vld [vmem:[#allocation2 + $0x38] sm:$0x1]
        %v643 = vld [vmem:[#allocation2 + $0x40] sm:$0xff]
        %v644 = vld [vmem:[#allocation2 + $0x48] sm:$0x1]
        %v645 = vld [vmem:[#allocation2 + $0x50] sm:$0xff]
        %v646 = vld [vmem:[#allocation2 + $0x58] sm:$0x1]
        %v647 = vld [vmem:[#allocation2 + $0x60] sm:$0xff]
        %v648 = vld [vmem:[#allocation2 + $0x68] sm:$0x1]
        %v649 = vld [vmem:[#allocation2 + $0x70] sm:$0xff]
        %v650 = vld [vmem:[#allocation2 + $0x78] sm:$0x1]
        %v651 = vld [vmem:[#allocation2 + $0x80] sm:$0xff]
        %v652 = vld [vmem:[#allocation2 + $0x88] sm:$0x1]
        %v653 = vlaneseq
        %v654 = vshrl.u32 %v653, 7
        %v655 = vsub.s32 0, %v654
        %v656 = vrot.slane %v634, %v655
        %v657 = vmul.f32 %v616, %v656
        %v658 = vmul.f32 %v617, %v656
        %v659 = vmul.f32 %v618, %v656
        %v660 = vmul.f32 %v619, %v656
        %v661 = vmul.f32 %v620, %v656
        %v662 = vmul.f32 %v621, %v656
        %v663 = vmul.f32 %v622, %v656
        %v664 = vmul.f32 %v623, %v656
        %v665 = vmul.f32 %v624, %v656
        %v666 = vmul.f32 %v625, %v656
        %v667 = vmul.f32 %v626, %v656
        %v668 = vmul.f32 %v627, %v656
        %v669 = vmul.f32 %v628, %v656
        %v670 = vmul.f32 %v629, %v656
        %v671 = vmul.f32 %v630, %v656
        %v672 = vmul.f32 %v631, %v656
        %v673 = vmul.f32 %v632, %v656
        %v674 = vmul.f32 %v633, %v656
        %v675 = vadd.f32 %v635, %v657
        %v676 = vadd.f32 %v636, %v658
        %v677 = vadd.f32 %v637, %v659
        %v678 = vadd.f32 %v638, %v660
        %v679 = vadd.f32 %v639, %v661
        %v680 = vadd.f32 %v640, %v662
        %v681 = vadd.f32 %v641, %v663
        %v682 = vadd.f32 %v642, %v664
        %v683 = vadd.f32 %v643, %v665
        %v684 = vadd.f32 %v644, %v666
        %v685 = vadd.f32 %v645, %v667
        %v686 = vadd.f32 %v646, %v668
        %v687 = vadd.f32 %v647, %v669
        %v688 = vadd.f32 %v648, %v670
        %v689 = vadd.f32 %v649, %v671
        %v690 = vadd.f32 %v650, %v672
        %v691 = vadd.f32 %v651, %v673
        %v692 = vadd.f32 %v652, %v674
        %693 = vst.msk [vmem:[#allocation2] sm:$0xff] %vm206, %v675
        %694 = vst.msk [vmem:[#allocation2 + $0x8] sm:$0x1] %vm208, %v676
        %695 = vst.msk [vmem:[#allocation2 + $0x10] sm:$0xff] %vm206, %v677
        %696 = vst.msk [vmem:[#allocation2 + $0x18] sm:$0x1] %vm208, %v678
        %697 = vst.msk [vmem:[#allocation2 + $0x20] sm:$0xff] %vm206, %v679
        %698 = vst.msk [vmem:[#allocation2 + $0x28] sm:$0x1] %vm208, %v680
        %699 = vst.msk [vmem:[#allocation2 + $0x30] sm:$0xff] %vm206, %v681
        %700 = vst.msk [vmem:[#allocation2 + $0x38] sm:$0x1] %vm208, %v682
        %701 = vst.msk [vmem:[#allocation2 + $0x40] sm:$0xff] %vm206, %v683
        %702 = vst.msk [vmem:[#allocation2 + $0x48] sm:$0x1] %vm208, %v684
        %703 = vst.msk [vmem:[#allocation2 + $0x50] sm:$0xff] %vm206, %v685
        %704 = vst.msk [vmem:[#allocation2 + $0x58] sm:$0x1] %vm208, %v686
        %705 = vst.msk [vmem:[#allocation2 + $0x60] sm:$0xff] %vm206, %v687
        %706 = vst.msk [vmem:[#allocation2 + $0x68] sm:$0x1] %vm208, %v688
        %707 = vst.msk [vmem:[#allocation2 + $0x70] sm:$0xff] %vm206, %v689
        %708 = vst.msk [vmem:[#allocation2 + $0x78] sm:$0x1] %vm208, %v690
        %709 = vst.msk [vmem:[#allocation2 + $0x80] sm:$0xff] %vm206, %v691
        %710 = vst.msk [vmem:[#allocation2 + $0x88] sm:$0x1] %vm208, %v692
        %v711 = vld [vmem:[%s233 + $0x5] sm:$0xff]
        %v712 = vld [vmem:[%s233 + $0xd] sm:$0x1]
        %v713 = vld [vmem:[%s233 + $0x15] sm:$0xff]
        %v714 = vld [vmem:[%s233 + $0x1d] sm:$0x1]
        %v715 = vld [vmem:[%s233 + $0x25] sm:$0xff]
        %v716 = vld [vmem:[%s233 + $0x2d] sm:$0x1]
        %v717 = vld [vmem:[%s233 + $0x35] sm:$0xff]
        %v718 = vld [vmem:[%s233 + $0x3d] sm:$0x1]
        %v719 = vld [vmem:[%s233 + $0x45] sm:$0xff]
        %v720 = vld [vmem:[%s233 + $0x4d] sm:$0x1]
        %v721 = vld [vmem:[%s233 + $0x55] sm:$0xff]
        %v722 = vld [vmem:[%s233 + $0x5d] sm:$0x1]
        %v723 = vld [vmem:[%s233 + $0x65] sm:$0xff]
        %v724 = vld [vmem:[%s233 + $0x6d] sm:$0x1]
        %v725 = vld [vmem:[%s233 + $0x75] sm:$0xff]
        %v726 = vld [vmem:[%s233 + $0x7d] sm:$0x1]
        %v727 = vld [vmem:[%s233 + $0x85] sm:$0xff]
        %v728 = vld [vmem:[%s233 + $0x8d] sm:$0x1]
        %v729 = vld [vmem:[%s253 + $0x5] sm:$0x1]
        %v730 = vld [vmem:[#allocation2] sm:$0xff]
        %v731 = vld [vmem:[#allocation2 + $0x8] sm:$0x1]
        %v732 = vld [vmem:[#allocation2 + $0x10] sm:$0xff]
        %v733 = vld [vmem:[#allocation2 + $0x18] sm:$0x1]
        %v734 = vld [vmem:[#allocation2 + $0x20] sm:$0xff]
        %v735 = vld [vmem:[#allocation2 + $0x28] sm:$0x1]
        %v736 = vld [vmem:[#allocation2 + $0x30] sm:$0xff]
        %v737 = vld [vmem:[#allocation2 + $0x38] sm:$0x1]
        %v738 = vld [vmem:[#allocation2 + $0x40] sm:$0xff]
        %v739 = vld [vmem:[#allocation2 + $0x48] sm:$0x1]
        %v740 = vld [vmem:[#allocation2 + $0x50] sm:$0xff]
        %v741 = vld [vmem:[#allocation2 + $0x58] sm:$0x1]
        %v742 = vld [vmem:[#allocation2 + $0x60] sm:$0xff]
        %v743 = vld [vmem:[#allocation2 + $0x68] sm:$0x1]
        %v744 = vld [vmem:[#allocation2 + $0x70] sm:$0xff]
        %v745 = vld [vmem:[#allocation2 + $0x78] sm:$0x1]
        %v746 = vld [vmem:[#allocation2 + $0x80] sm:$0xff]
        %v747 = vld [vmem:[#allocation2 + $0x88] sm:$0x1]
        %v748 = vlaneseq
        %v749 = vshrl.u32 %v748, 7
        %v750 = vsub.s32 0, %v749
        %v751 = vrot.slane %v729, %v750
        %v752 = vmul.f32 %v711, %v751
        %v753 = vmul.f32 %v712, %v751
        %v754 = vmul.f32 %v713, %v751
        %v755 = vmul.f32 %v714, %v751
        %v756 = vmul.f32 %v715, %v751
        %v757 = vmul.f32 %v716, %v751
        %v758 = vmul.f32 %v717, %v751
        %v759 = vmul.f32 %v718, %v751
        %v760 = vmul.f32 %v719, %v751
        %v761 = vmul.f32 %v720, %v751
        %v762 = vmul.f32 %v721, %v751
        %v763 = vmul.f32 %v722, %v751
        %v764 = vmul.f32 %v723, %v751
        %v765 = vmul.f32 %v724, %v751
        %v766 = vmul.f32 %v725, %v751
        %v767 = vmul.f32 %v726, %v751
        %v768 = vmul.f32 %v727, %v751
        %v769 = vmul.f32 %v728, %v751
        %v770 = vadd.f32 %v730, %v752
        %v771 = vadd.f32 %v731, %v753
        %v772 = vadd.f32 %v732, %v754
        %v773 = vadd.f32 %v733, %v755
        %v774 = vadd.f32 %v734, %v756
        %v775 = vadd.f32 %v735, %v757
        %v776 = vadd.f32 %v736, %v758
        %v777 = vadd.f32 %v737, %v759
        %v778 = vadd.f32 %v738, %v760
        %v779 = vadd.f32 %v739, %v761
        %v780 = vadd.f32 %v740, %v762
        %v781 = vadd.f32 %v741, %v763
        %v782 = vadd.f32 %v742, %v764
        %v783 = vadd.f32 %v743, %v765
        %v784 = vadd.f32 %v744, %v766
        %v785 = vadd.f32 %v745, %v767
        %v786 = vadd.f32 %v746, %v768
        %v787 = vadd.f32 %v747, %v769
        %788 = vst.msk [vmem:[#allocation2] sm:$0xff] %vm206, %v770
        %789 = vst.msk [vmem:[#allocation2 + $0x8] sm:$0x1] %vm208, %v771
        %790 = vst.msk [vmem:[#allocation2 + $0x10] sm:$0xff] %vm206, %v772
        %791 = vst.msk [vmem:[#allocation2 + $0x18] sm:$0x1] %vm208, %v773
        %792 = vst.msk [vmem:[#allocation2 + $0x20] sm:$0xff] %vm206, %v774
        %793 = vst.msk [vmem:[#allocation2 + $0x28] sm:$0x1] %vm208, %v775
        %794 = vst.msk [vmem:[#allocation2 + $0x30] sm:$0xff] %vm206, %v776
        %795 = vst.msk [vmem:[#allocation2 + $0x38] sm:$0x1] %vm208, %v777
        %796 = vst.msk [vmem:[#allocation2 + $0x40] sm:$0xff] %vm206, %v778
        %797 = vst.msk [vmem:[#allocation2 + $0x48] sm:$0x1] %vm208, %v779
        %798 = vst.msk [vmem:[#allocation2 + $0x50] sm:$0xff] %vm206, %v780
        %799 = vst.msk [vmem:[#allocation2 + $0x58] sm:$0x1] %vm208, %v781
        %800 = vst.msk [vmem:[#allocation2 + $0x60] sm:$0xff] %vm206, %v782
        %801 = vst.msk [vmem:[#allocation2 + $0x68] sm:$0x1] %vm208, %v783
        %802 = vst.msk [vmem:[#allocation2 + $0x70] sm:$0xff] %vm206, %v784
        %803 = vst.msk [vmem:[#allocation2 + $0x78] sm:$0x1] %vm208, %v785
        %804 = vst.msk [vmem:[#allocation2 + $0x80] sm:$0xff] %vm206, %v786
        %805 = vst.msk [vmem:[#allocation2 + $0x88] sm:$0x1] %vm208, %v787
      $region33: #{depthwise_xcorr_forward.6} parent=27 // loop_footer
        %s231 = sadd.s32 1, %s227
      $region34: #{depthwise_xcorr_forward.6} parent=27 // loop_footer_branch
        %226 = sbr.rel target = $region30
      $region35: #{depthwise_xcorr_forward.6} parent=27 // loop_exit
        _
      %v806 = vld [vmem:[#allocation2] sm:$0xff]
      %v807 = vld [vmem:[#allocation2 + $0x8] sm:$0x1]
      %v808 = vld [vmem:[#allocation2 + $0x10] sm:$0xff]
      %v809 = vld [vmem:[#allocation2 + $0x18] sm:$0x1]
      %v810 = vld [vmem:[#allocation2 + $0x20] sm:$0xff]
      %v811 = vld [vmem:[#allocation2 + $0x28] sm:$0x1]
      %v812 = vld [vmem:[#allocation2 + $0x30] sm:$0xff]
      %v813 = vld [vmem:[#allocation2 + $0x38] sm:$0x1]
      %v814 = vld [vmem:[#allocation2 + $0x40] sm:$0xff]
      %v815 = vld [vmem:[#allocation2 + $0x48] sm:$0x1]
      %v816 = vld [vmem:[#allocation2 + $0x50] sm:$0xff]
      %v817 = vld [vmem:[#allocation2 + $0x58] sm:$0x1]
      %v818 = vld [vmem:[#allocation2 + $0x60] sm:$0xff]
      %v819 = vld [vmem:[#allocation2 + $0x68] sm:$0x1]
      %v820 = vld [vmem:[#allocation2 + $0x70] sm:$0xff]
      %v821 = vld [vmem:[#allocation2 + $0x78] sm:$0x1]
      %v822 = vld [vmem:[#allocation2 + $0x80] sm:$0xff]
      %v823 = vld [vmem:[#allocation2 + $0x88] sm:$0x1]
      %824 = vst.msk [vmem:[%s205] sm:$0xff] %vm206, %v806
      %825 = vst.msk [vmem:[%s205 + $0x8] sm:$0x1] %vm208, %v807
      %826 = vst.msk [vmem:[%s205 + $0x10] sm:$0xff] %vm206, %v808
      %827 = vst.msk [vmem:[%s205 + $0x18] sm:$0x1] %vm208, %v809
      %828 = vst.msk [vmem:[%s205 + $0x20] sm:$0xff] %vm206, %v810
      %829 = vst.msk [vmem:[%s205 + $0x28] sm:$0x1] %vm208, %v811
      %830 = vst.msk [vmem:[%s205 + $0x30] sm:$0xff] %vm206, %v812
      %831 = vst.msk [vmem:[%s205 + $0x38] sm:$0x1] %vm208, %v813
      %832 = vst.msk [vmem:[%s205 + $0x40] sm:$0xff] %vm206, %v814
      %833 = vst.msk [vmem:[%s205 + $0x48] sm:$0x1] %vm208, %v815
      %834 = vst.msk [vmem:[%s205 + $0x50] sm:$0xff] %vm206, %v816
      %835 = vst.msk [vmem:[%s205 + $0x58] sm:$0x1] %vm208, %v817
      %836 = vst.msk [vmem:[%s205 + $0x60] sm:$0xff] %vm206, %v818
      %837 = vst.msk [vmem:[%s205 + $0x68] sm:$0x1] %vm208, %v819
      %838 = vst.msk [vmem:[%s205 + $0x70] sm:$0xff] %vm206, %v820
      %839 = vst.msk [vmem:[%s205 + $0x78] sm:$0x1] %vm208, %v821
      %840 = vst.msk [vmem:[%s205 + $0x80] sm:$0xff] %vm206, %v822
      %841 = vst.msk [vmem:[%s205 + $0x88] sm:$0x1] %vm208, %v823
      %p842 = scmp.lt.s32.totalorder %s17, 1
      %s843 = scalar_select %p842, %s17, 1
      %p844 = scmp.lt.s32.totalorder %s18, 0
      %s845 = scalar_select %p844, %s18, 0
      %s846 = smul.addr %s843, 18
      %s847 = sadd.s32 %s845, %s846
      %s848 = smul.addr %s847, 8
      %s849 = scalar_lea.vmem %s2, %s848
      // Predicated region
      $region36: #{depthwise_xcorr_forward.6} parent=27 // pred_check
        %p850 = pneg %p101
      $region37: #{depthwise_xcorr_forward.6} parent=27 // pred_check_branch
        %852 = sbr.rel (%p850) target = $region39
      $region38: #{depthwise_xcorr_forward.6} parent=27 // pred_region
        _
      $region39: #{depthwise_xcorr_forward.6} parent=27 // pred_fallthru
        _
    $region28: #{depthwise_xcorr_forward.6} parent=5 // pred_fallthru
      _
    %p853 = scmp.le.s32.totalorder 2, %s8
    // Predicated region
    $region40: #{depthwise_xcorr_forward.6} parent=5 // pred_check
      %p854 = pneg %p853
    $region41: #{depthwise_xcorr_forward.6} parent=5 // pred_check_branch
      %856 = sbr.rel (%p854) target = $region43
    $region42: #{depthwise_xcorr_forward.6} parent=5 // pred_region
      %s857 = ssub.s32 %s8, 2
      // Predicated region
      $region44: #{depthwise_xcorr_forward.6} parent=42 // pred_check
        %p858 = pneg %p107
      $region45: #{depthwise_xcorr_forward.6} parent=42 // pred_check_branch
        %860 = sbr.rel (%p858) target = $region47
      $region46: #{depthwise_xcorr_forward.6} parent=42 // pred_region
        %p861 = scmp.lt.s32.totalorder %s19, 1
        %s862 = scalar_select %p861, %s19, 1
        %p863 = scmp.lt.s32.totalorder %s20, 0
        %s864 = scalar_select %p863, %s20, 0
        %s865 = smul.addr %s862, 18
        %s866 = sadd.s32 %s864, %s865
        %s867 = smul.addr %s866, 8
        %s868 = scalar_lea.vmem %s2, %s867
      $region47: #{depthwise_xcorr_forward.6} parent=42 // pred_fallthru
        _
    $region43: #{depthwise_xcorr_forward.6} parent=5 // pred_fallthru
      _
  $region6: #{depthwise_xcorr_forward.6} parent=0 // loop_footer
    %s12 = sadd.s32 1, %s8
  $region7: #{depthwise_xcorr_forward.6} parent=0 // loop_footer_branch
    %7 = sbr.rel target = $region3
  $region8: #{depthwise_xcorr_forward.6} parent=0 // loop_exit
    _

</llo_original>
